<compile_context>
chip_gen: v6e
topology: v6e:2x2x1
jax: 0.10.0
libtpu: 0.0.40
codegen_flags: <defaults>
</compile_context>

<pallas_src>
import jax
import jax.numpy as jnp
from jax import lax
from jax.experimental import pallas as pl
from jax.experimental.pallas import tpu as pltpu


def conv_block(x_nchw, w_oihw, bias, gamma, beta, eps=1e-5):
    """Fused ConvBlock forward: (N, Cin, H, W) -> (N, Cout, H//2, W//2)."""
    # Conv bias cancels exactly through train-mode BatchNorm:
    #   ((conv + b) - mean(conv + b)) == (conv - mean(conv)),  var unchanged,
    # so it is intentionally not applied (review item 7).
    del bias

    N, Cin, H, W = x_nchw.shape
    Cout = w_oihw.shape[0]
    assert H % 2 == 0 and W % 2 == 0
    Wp = W + 2                # padded width (conv padding = 1)
    HW = H * W                # flat spatial size of one image (lane-dense slab width)
    Hq, Wq = H // 2, W // 2   # pooled spatial size

    # ---------------- phase 1: conv (9 per-tap matmuls) + per-image BN partials -------
    # OIHW -> (9, Cout, Cin); tap t = dy*3 + dx.
    w_taps = jnp.transpose(w_oihw, (2, 3, 0, 1)).reshape(9, Cout, Cin).astype(jnp.float32)

    def conv_stats_kernel(x_ref, w_ref, conv_ref, stats_ref):
        # x_ref:     (1, Cin, H, W)   one NCHW image
        # w_ref:     (9, Cout, Cin)   per-tap conv weights
        # conv_ref:  (1, Cout, H*W)   lane-dense conv activation slab
        # stats_ref: (1, Cout, 2)     [:, :, 0] = per-image mean, [:, :, 1] = centered sumsq
        x = x_ref[0].astype(jnp.float32)                       # (Cin, H, W)

        # Build the 3x3 halo in VMEM (no HBM pad pass): 1 zero col each side, 1 zero row
        # on top, 2 zero rows at the bottom (the extra row only keeps the flat tap
        # slices in-bounds; it never contributes to a valid output position).
        zc = jnp.zeros((Cin, H, 1), jnp.float32)
        xp = jnp.concatenate([zc, x, zc], axis=2)              # (Cin, H, Wp)
        zr1 = jnp.zeros((Cin, 1, Wp), jnp.float32)
        zr2 = jnp.zeros((Cin, 2, Wp), jnp.float32)
        xp = jnp.concatenate([zr1, xp, zr2], axis=1)           # (Cin, H+3, Wp)
        xflat = xp.reshape(Cin, (H + 3) * Wp)                  # flattened padded rows

        # At flat position p = y*Wp + x the conv output is
        #     sum_t  w_tap[t] @ xflat[:, p + dy*Wp + dx]
        # so every tap is a contiguous lane slice -> accumulate 9 small MXU matmuls in
        # f32 (no im2col materialization, review item 3).
        L = H * Wp
        acc = jnp.zeros((Cout, L), jnp.float32)
        for t in range(9):
            dy, dx = t // 3, t % 3
            off = dy * Wp + dx
            acc = acc + jnp.dot(w_ref[t], xflat[:, off:off + L],
                                preferred_element_type=jnp.float32)

        # Drop the 2 junk columns per row -> clean lane-dense (Cout, H*W) slab.
        conv = acc.reshape(Cout, H, Wp)[:, :, :W].reshape(Cout, HW)
        conv_ref[0] = conv

        # Per-image BN partials, two-pass (centered) to avoid E[x^2]-E[x]^2 cancellation.
        mean = jnp.sum(conv, axis=1, keepdims=True) * (1.0 / HW)   # (Cout, 1)
        d = conv - mean
        m2 = jnp.sum(d * d, axis=1, keepdims=True)                 # (Cout, 1)
        stats_ref[0] = jnp.concatenate([mean, m2], axis=1)         # (Cout, 2)

    conv_slab, stats = pl.pallas_call(
        conv_stats_kernel,
        grid=(N,),
        in_specs=[
            pl.BlockSpec((1, Cin, H, W), lambda n: (n, 0, 0, 0)),
            pl.BlockSpec((9, Cout, Cin), lambda n: (0, 0, 0)),
        ],
        out_specs=[
            pl.BlockSpec((1, Cout, HW), lambda n: (n, 0, 0)),
            pl.BlockSpec((1, Cout, 2), lambda n: (n, 0, 0)),
        ],
        out_shape=[
            jax.ShapeDtypeStruct((N, Cout, HW), jnp.float32),
            jax.ShapeDtypeStruct((N, Cout, 2), jnp.float32),
        ],
        compiler_params=pltpu.CompilerParams(
            dimension_semantics=("parallel",)),
    )(x_nchw, w_taps)

    # ------------- combine per-image partials -> per-channel scale/shift (tiny) -------
    # Chan et al. parallel-variance combine; exact and cancellation-free.
    mean_i = stats[:, :, 0]                                     # (N, Cout)
    m2_i = stats[:, :, 1]                                       # (N, Cout)
    mean = jnp.mean(mean_i, axis=0)                             # equal counts per image
    m2 = jnp.sum(m2_i, axis=0) + HW * jnp.sum((mean_i - mean[None, :]) ** 2, axis=0)
    var = m2 / (N * HW)                                         # biased, matches PyTorch BN
    inv = lax.rsqrt(var + eps)
    scale = gamma.astype(jnp.float32) * inv                     # BN folded into one FMA
    shift = beta.astype(jnp.float32) - mean * scale
    scale2d = scale.reshape(Cout, 1)
    shift2d = shift.reshape(Cout, 1)

    # ---------------- phase 2: y = conv*scale + shift -> ReLU -> 2x2 max-pool ----------
    out_flat = Cout * Hq * Wq
    if out_flat % 128 == 0:        # lane-dense final output (unmasked 128-lane stores)
        out_rows, out_lanes = out_flat // 128, 128
    else:
        out_rows, out_lanes = Cout, Hq * Wq

    def bn_relu_pool_kernel(conv_ref, scale_ref, shift_ref, o_ref):
        conv = conv_ref[0]                                          # (Cout, H*W)
        y = jnp.maximum(conv * scale_ref[...] + shift_ref[...], 0.0)  # single FMA + ReLU
        # 2x2 max-pool directly on the flat (Cout, H*W) slab: adjacent lane pairs are the
        # W-neighbours, adjacent Wq-groups are the H-neighbours (one axis split at a
        # time, no 5-D intermediates).
        y = jnp.max(y.reshape(Cout, HW // 2, 2), axis=2)            # pool along W
        y = jnp.max(y.reshape(Cout, Hq, 2, Wq), axis=2)             # pool along H
        # Per-image result in (Cout, Hq, Wq) row-major order == NCHW order; store it as
        # a lane-dense (out_rows, 128) slab.
        o_ref[...] = y.reshape(1, out_rows, out_lanes).astype(o_ref.dtype)

    out_slab = pl.pallas_call(
        bn_relu_pool_kernel,
        grid=(N,),
        in_specs=[
            pl.BlockSpec((1, Cout, HW), lambda n: (n, 0, 0)),
            pl.BlockSpec((Cout, 1), lambda n: (0, 0)),
            pl.BlockSpec((Cout, 1), lambda n: (0, 0)),
        ],
        out_specs=pl.BlockSpec((1, out_rows, out_lanes), lambda n: (n, 0, 0)),
        out_shape=jax.ShapeDtypeStruct((N, out_rows, out_lanes), x_nchw.dtype),
        compiler_params=pltpu.CompilerParams(
            dimension_semantics=("parallel",)),
    )(conv_slab, scale2d, shift2d)

    # (N, out_rows, 128) holds each image's (Cout, H/2, W/2) block in row-major order,
    # so this reshape IS the NCHW output (no transpose needed).
    return out_slab.reshape(N, Cout, Hq, Wq)


def ref_forward(x, w, b, gamma, beta, eps=1e-5):
    """Pure-JAX reference mirroring the PyTorch ConvBlock forward (train-mode BN)."""
    y = lax.conv_general_dilated(x, w, (1, 1), ((1, 1), (1, 1)),
                                 dimension_numbers=("NCHW", "OIHW", "NCHW"))
    y = y + b[None, :, None, None]
    mean = y.mean(axis=(0, 2, 3), keepdims=True)
    var = y.var(axis=(0, 2, 3), keepdims=True)
    y = (y - mean) / jnp.sqrt(var + eps)
    y = y * gamma[None, :, None, None] + beta[None, :, None, None]
    y = jnp.maximum(y, 0.0)
    N, C, H, W = y.shape
    return y.reshape(N, C, H // 2, 2, W // 2, 2).max(axis=(3, 5))


if __name__ == "__main__":
    # Module config: ConvBlock(in_channels=4, out_channels=8), input (2, 4, 16, 16).
    in_channels, out_channels = 4, 8
    N, H, W = 2, 16, 16

    key = jax.random.PRNGKey(0)
    kx, kw = jax.random.split(key)

    x = jax.random.normal(kx, (N, in_channels, H, W), dtype=jnp.float32)

    # Deterministic "kaiming_normal_" (fan_in, gain=sqrt(2)) conv weights; zero bias.
    fan_in = in_channels * 3 * 3
    std = (2.0 / fan_in) ** 0.5
    w = std * jax.random.normal(kw, (out_channels, in_channels, 3, 3), dtype=jnp.float32)
    b = jnp.zeros((out_channels,), dtype=jnp.float32)
    # BatchNorm2d init: weight=1, bias=0.
    gamma = jnp.ones((out_channels,), dtype=jnp.float32)
    beta = jnp.zeros((out_channels,), dtype=jnp.float32)

    fwd = jax.jit(conv_block)
    out = jax.block_until_ready(fwd(x, w, b, gamma, beta))
    ref = jax.block_until_ready(ref_forward(x, w, b, gamma, beta))

    assert out.shape == (N, out_channels, H // 2, W // 2), out.shape
    # MXU default precision rounds matmul inputs to bf16 in both the kernel and the
    # XLA reference, so differences are dominated by summation order (~1e-5).
    assert jnp.allclose(out, ref, rtol=1e-2, atol=1e-2)

    print("KERNEL_OK")
</pallas_src>

<mosaic_0001>
module attributes {stable_mosaic.version = 11 : i64} {
  func.func @conv_stats_kernel(%arg0: i32, %arg1: memref<1x4x16x16xf32, #tpu.memory_space<vmem>>, %arg2: memref<9x8x4xf32, #tpu.memory_space<vmem>>, %arg3: memref<1x8x256xf32, #tpu.memory_space<vmem>>, %arg4: memref<1x8x2xf32, #tpu.memory_space<vmem>>) attributes {dimension_semantics = [#tpu.dimension_semantics<parallel>], iteration_bounds = array<i64: 2>, scalar_prefetch = 0 : i64, scratch_operands = 0 : i64, tpu.core_type = #tpu.core_type<tc>, window_params = [{transform_indices = @transform_0, window_bounds = array<i64: 1, 4, 16, 16>}, {pipeline_mode = #tpu.pipeline_mode<synchronous>, transform_indices = @transform_1, window_bounds = array<i64: 9, 8, 4>}, {transform_indices = @transform_2, window_bounds = array<i64: 1, 8, 256>}, {transform_indices = @transform_3, window_bounds = array<i64: 1, 8, 2>}]} {
    %c0 = arith.constant 0 : index
    %c0_0 = arith.constant 0 : index
    %c0_1 = arith.constant 0 : index
    %c0_2 = arith.constant 0 : index
    %0 = vector.load %arg1[%c0, %c0_0, %c0_1, %c0_2] : memref<1x4x16x16xf32, #tpu.memory_space<vmem>>, vector<1x4x16x16xf32>
    %1 = vector.shape_cast %0 : vector<1x4x16x16xf32> to vector<4x16x16xf32>
    %cst = arith.constant 0.000000e+00 : f32
    %2 = vector.broadcast %cst : f32 to vector<4x16x1xf32>
    %3 = tpu.concatenate %2, %1, %2 in 2 : vector<4x16x1xf32>, vector<4x16x16xf32>, vector<4x16x1xf32> -> vector<4x16x18xf32>
    %cst_3 = arith.constant 0.000000e+00 : f32
    %4 = vector.broadcast %cst_3 : f32 to vector<4x1x18xf32>
    %cst_4 = arith.constant 0.000000e+00 : f32
    %5 = vector.broadcast %cst_4 : f32 to vector<4x2x18xf32>
    %6 = tpu.concatenate %4, %3, %5 in 1 : vector<4x1x18xf32>, vector<4x16x18xf32>, vector<4x2x18xf32> -> vector<4x19x18xf32>
    %7 = vector.shape_cast %6 : vector<4x19x18xf32> to vector<4x342xf32>
    %cst_5 = arith.constant 0.000000e+00 : f32
    %8 = vector.broadcast %cst_5 : f32 to vector<8x288xf32>
    %c0_6 = arith.constant 0 : index
    %c0_7 = arith.constant 0 : index
    %c0_8 = arith.constant 0 : index
    %9 = vector.load %arg2[%c0_6, %c0_7, %c0_8] : memref<9x8x4xf32, #tpu.memory_space<vmem>>, vector<1x8x4xf32>
    %10 = vector.shape_cast %9 : vector<1x8x4xf32> to vector<8x4xf32>
    %11 = vector.extract_strided_slice %7 {offsets = [0, 0], sizes = [4, 288], strides = [1, 1]} : vector<4x342xf32> to vector<4x288xf32>
    %cst_9 = arith.constant dense<0.000000e+00> : vector<8x288xf32>
    %12 = tpu.matmul %10, %11, %cst_9 {dimension_numbers = #tpu.dot_dimension_numbers<[1], [0], [0], [1], [0, 0, 1, 1], [], []>} : vector<8x4xf32>, vector<4x288xf32>, vector<8x288xf32> -> vector<8x288xf32>
    %13 = arith.addf %8, %12 : vector<8x288xf32>
    %c1 = arith.constant 1 : index
    %c0_10 = arith.constant 0 : index
    %c0_11 = arith.constant 0 : index
    %14 = vector.load %arg2[%c1, %c0_10, %c0_11] : memref<9x8x4xf32, #tpu.memory_space<vmem>>, vector<1x8x4xf32>
    %15 = vector.shape_cast %14 : vector<1x8x4xf32> to vector<8x4xf32>
    %16 = vector.extract_strided_slice %7 {offsets = [0, 1], sizes = [4, 288], strides = [1, 1]} : vector<4x342xf32> to vector<4x288xf32>
    %cst_12 = arith.constant dense<0.000000e+00> : vector<8x288xf32>
    %17 = tpu.matmul %15, %16, %cst_12 {dimension_numbers = #tpu.dot_dimension_numbers<[1], [0], [0], [1], [0, 0, 1, 1], [], []>} : vector<8x4xf32>, vector<4x288xf32>, vector<8x288xf32> -> vector<8x288xf32>
    %18 = arith.addf %13, %17 : vector<8x288xf32>
    %c2 = arith.constant 2 : index
    %c0_13 = arith.constant 0 : index
    %c0_14 = arith.constant 0 : index
    %19 = vector.load %arg2[%c2, %c0_13, %c0_14] : memref<9x8x4xf32, #tpu.memory_space<vmem>>, vector<1x8x4xf32>
    %20 = vector.shape_cast %19 : vector<1x8x4xf32> to vector<8x4xf32>
    %21 = vector.extract_strided_slice %7 {offsets = [0, 2], sizes = [4, 288], strides = [1, 1]} : vector<4x342xf32> to vector<4x288xf32>
    %cst_15 = arith.constant dense<0.000000e+00> : vector<8x288xf32>
    %22 = tpu.matmul %20, %21, %cst_15 {dimension_numbers = #tpu.dot_dimension_numbers<[1], [0], [0], [1], [0, 0, 1, 1], [], []>} : vector<8x4xf32>, vector<4x288xf32>, vector<8x288xf32> -> vector<8x288xf32>
    %23 = arith.addf %18, %22 : vector<8x288xf32>
    %c3 = arith.constant 3 : index
    %c0_16 = arith.constant 0 : index
    %c0_17 = arith.constant 0 : index
    %24 = vector.load %arg2[%c3, %c0_16, %c0_17] : memref<9x8x4xf32, #tpu.memory_space<vmem>>, vector<1x8x4xf32>
    %25 = vector.shape_cast %24 : vector<1x8x4xf32> to vector<8x4xf32>
    %26 = vector.extract_strided_slice %7 {offsets = [0, 18], sizes = [4, 288], strides = [1, 1]} : vector<4x342xf32> to vector<4x288xf32>
    %cst_18 = arith.constant dense<0.000000e+00> : vector<8x288xf32>
    %27 = tpu.matmul %25, %26, %cst_18 {dimension_numbers = #tpu.dot_dimension_numbers<[1], [0], [0], [1], [0, 0, 1, 1], [], []>} : vector<8x4xf32>, vector<4x288xf32>, vector<8x288xf32> -> vector<8x288xf32>
    %28 = arith.addf %23, %27 : vector<8x288xf32>
    %c4 = arith.constant 4 : index
    %c0_19 = arith.constant 0 : index
    %c0_20 = arith.constant 0 : index
    %29 = vector.load %arg2[%c4, %c0_19, %c0_20] : memref<9x8x4xf32, #tpu.memory_space<vmem>>, vector<1x8x4xf32>
    %30 = vector.shape_cast %29 : vector<1x8x4xf32> to vector<8x4xf32>
    %31 = vector.extract_strided_slice %7 {offsets = [0, 19], sizes = [4, 288], strides = [1, 1]} : vector<4x342xf32> to vector<4x288xf32>
    %cst_21 = arith.constant dense<0.000000e+00> : vector<8x288xf32>
    %32 = tpu.matmul %30, %31, %cst_21 {dimension_numbers = #tpu.dot_dimension_numbers<[1], [0], [0], [1], [0, 0, 1, 1], [], []>} : vector<8x4xf32>, vector<4x288xf32>, vector<8x288xf32> -> vector<8x288xf32>
    %33 = arith.addf %28, %32 : vector<8x288xf32>
    %c5 = arith.constant 5 : index
    %c0_22 = arith.constant 0 : index
    %c0_23 = arith.constant 0 : index
    %34 = vector.load %arg2[%c5, %c0_22, %c0_23] : memref<9x8x4xf32, #tpu.memory_space<vmem>>, vector<1x8x4xf32>
    %35 = vector.shape_cast %34 : vector<1x8x4xf32> to vector<8x4xf32>
    %36 = vector.extract_strided_slice %7 {offsets = [0, 20], sizes = [4, 288], strides = [1, 1]} : vector<4x342xf32> to vector<4x288xf32>
    %cst_24 = arith.constant dense<0.000000e+00> : vector<8x288xf32>
    %37 = tpu.matmul %35, %36, %cst_24 {dimension_numbers = #tpu.dot_dimension_numbers<[1], [0], [0], [1], [0, 0, 1, 1], [], []>} : vector<8x4xf32>, vector<4x288xf32>, vector<8x288xf32> -> vector<8x288xf32>
    %38 = arith.addf %33, %37 : vector<8x288xf32>
    %c6 = arith.constant 6 : index
    %c0_25 = arith.constant 0 : index
    %c0_26 = arith.constant 0 : index
    %39 = vector.load %arg2[%c6, %c0_25, %c0_26] : memref<9x8x4xf32, #tpu.memory_space<vmem>>, vector<1x8x4xf32>
    %40 = vector.shape_cast %39 : vector<1x8x4xf32> to vector<8x4xf32>
    %41 = vector.extract_strided_slice %7 {offsets = [0, 36], sizes = [4, 288], strides = [1, 1]} : vector<4x342xf32> to vector<4x288xf32>
    %cst_27 = arith.constant dense<0.000000e+00> : vector<8x288xf32>
    %42 = tpu.matmul %40, %41, %cst_27 {dimension_numbers = #tpu.dot_dimension_numbers<[1], [0], [0], [1], [0, 0, 1, 1], [], []>} : vector<8x4xf32>, vector<4x288xf32>, vector<8x288xf32> -> vector<8x288xf32>
    %43 = arith.addf %38, %42 : vector<8x288xf32>
    %c7 = arith.constant 7 : index
    %c0_28 = arith.constant 0 : index
    %c0_29 = arith.constant 0 : index
    %44 = vector.load %arg2[%c7, %c0_28, %c0_29] : memref<9x8x4xf32, #tpu.memory_space<vmem>>, vector<1x8x4xf32>
    %45 = vector.shape_cast %44 : vector<1x8x4xf32> to vector<8x4xf32>
    %46 = vector.extract_strided_slice %7 {offsets = [0, 37], sizes = [4, 288], strides = [1, 1]} : vector<4x342xf32> to vector<4x288xf32>
    %cst_30 = arith.constant dense<0.000000e+00> : vector<8x288xf32>
    %47 = tpu.matmul %45, %46, %cst_30 {dimension_numbers = #tpu.dot_dimension_numbers<[1], [0], [0], [1], [0, 0, 1, 1], [], []>} : vector<8x4xf32>, vector<4x288xf32>, vector<8x288xf32> -> vector<8x288xf32>
    %48 = arith.addf %43, %47 : vector<8x288xf32>
    %c8 = arith.constant 8 : index
    %c0_31 = arith.constant 0 : index
    %c0_32 = arith.constant 0 : index
    %49 = vector.load %arg2[%c8, %c0_31, %c0_32] : memref<9x8x4xf32, #tpu.memory_space<vmem>>, vector<1x8x4xf32>
    %50 = vector.shape_cast %49 : vector<1x8x4xf32> to vector<8x4xf32>
    %51 = vector.extract_strided_slice %7 {offsets = [0, 38], sizes = [4, 288], strides = [1, 1]} : vector<4x342xf32> to vector<4x288xf32>
    %cst_33 = arith.constant dense<0.000000e+00> : vector<8x288xf32>
    %52 = tpu.matmul %50, %51, %cst_33 {dimension_numbers = #tpu.dot_dimension_numbers<[1], [0], [0], [1], [0, 0, 1, 1], [], []>} : vector<8x4xf32>, vector<4x288xf32>, vector<8x288xf32> -> vector<8x288xf32>
    %53 = arith.addf %48, %52 : vector<8x288xf32>
    %54 = vector.shape_cast %53 : vector<8x288xf32> to vector<8x16x18xf32>
    %55 = vector.extract_strided_slice %54 {offsets = [0, 0, 0], sizes = [8, 16, 16], strides = [1, 1, 1]} : vector<8x16x18xf32> to vector<8x16x16xf32>
    %56 = vector.shape_cast %55 : vector<8x16x16xf32> to vector<8x256xf32>
    %c0_34 = arith.constant 0 : index
    %c0_35 = arith.constant 0 : index
    %c0_36 = arith.constant 0 : index
    %57 = vector.load %arg3[%c0_34, %c0_35, %c0_36] : memref<1x8x256xf32, #tpu.memory_space<vmem>>, vector<1x8x256xf32>
    %58 = vector.shape_cast %57 : vector<1x8x256xf32> to vector<8x256xf32>
    %59 = vector.shape_cast %56 : vector<8x256xf32> to vector<1x8x256xf32>
    tpu.vector_store %arg3[%c0_34, %c0_35, %c0_36], %59 {strides = array<i32>} : memref<1x8x256xf32, #tpu.memory_space<vmem>>, vector<1x8x256xf32>,
    %cst_37 = arith.constant dense<0.000000e+00> : vector<8xf32>
    %60 = vector.multi_reduction <add>, %56, %cst_37 [1] : vector<8x256xf32> to vector<8xf32>
    %61 = vector.shape_cast %60 : vector<8xf32> to vector<8x1xf32>
    %cst_38 = arith.constant 3.906250e-03 : f32
    %62 = vector.broadcast %cst_38 : f32 to vector<8x1xf32>
    %63 = arith.mulf %61, %62 : vector<8x1xf32>
    %64 = vector.broadcast %63 : vector<8x1xf32> to vector<8x256xf32>
    %65 = arith.subf %56, %64 : vector<8x256xf32>
    %66 = arith.mulf %65, %65 : vector<8x256xf32>
    %cst_39 = arith.constant dense<0.000000e+00> : vector<8xf32>
    %67 = vector.multi_reduction <add>, %66, %cst_39 [1] : vector<8x256xf32> to vector<8xf32>
    %68 = vector.shape_cast %67 : vector<8xf32> to vector<8x1xf32>
    %69 = tpu.concatenate %63, %68 in 1 : vector<8x1xf32>, vector<8x1xf32> -> vector<8x2xf32>
    %c0_40 = arith.constant 0 : index
    %c0_41 = arith.constant 0 : index
    %c0_42 = arith.constant 0 : index
    %70 = vector.load %arg4[%c0_40, %c0_41, %c0_42] : memref<1x8x2xf32, #tpu.memory_space<vmem>>, vector<1x8x2xf32>
    %71 = vector.shape_cast %70 : vector<1x8x2xf32> to vector<8x2xf32>
    %72 = vector.shape_cast %69 : vector<8x2xf32> to vector<1x8x2xf32>
    tpu.vector_store %arg4[%c0_40, %c0_41, %c0_42], %72 {strides = array<i32>} : memref<1x8x2xf32, #tpu.memory_space<vmem>>, vector<1x8x2xf32>,
    return
  }
  func.func @transform_0(%arg0: i32) -> (i32, i32, i32, i32) {
    %c0_i32 = arith.constant 0 : i32
    %c0_i32_0 = arith.constant 0 : i32
    %c0_i32_1 = arith.constant 0 : i32
    %c0_i32_2 = arith.constant 0 : i32
    return %arg0, %c0_i32, %c0_i32_0, %c0_i32_1 : i32, i32, i32, i32
  }
  func.func @transform_1(%arg0: i32) -> (i32, i32, i32) {
    %c0_i32 = arith.constant 0 : i32
    %c0_i32_0 = arith.constant 0 : i32
    %c0_i32_1 = arith.constant 0 : i32
    %c0_i32_2 = arith.constant 0 : i32
    return %c0_i32, %c0_i32_0, %c0_i32_1 : i32, i32, i32
  }
  func.func @transform_2(%arg0: i32) -> (i32, i32, i32) {
    %c0_i32 = arith.constant 0 : i32
    %c0_i32_0 = arith.constant 0 : i32
    %c0_i32_1 = arith.constant 0 : i32
    return %arg0, %c0_i32, %c0_i32_0 : i32, i32, i32
  }
  func.func @transform_3(%arg0: i32) -> (i32, i32, i32) {
    %c0_i32 = arith.constant 0 : i32
    %c0_i32_0 = arith.constant 0 : i32
    %c0_i32_1 = arith.constant 0 : i32
    return %arg0, %c0_i32, %c0_i32_0 : i32, i32, i32
  }
}

module attributes {stable_mosaic.version = 11 : i64} {
  func.func @bn_relu_pool_kernel(%arg0: i32, %arg1: memref<1x8x256xf32, #tpu.memory_space<vmem>>, %arg2: memref<8x1xf32, #tpu.memory_space<vmem>>, %arg3: memref<8x1xf32, #tpu.memory_space<vmem>>, %arg4: memref<1x4x128xf32, #tpu.memory_space<vmem>>) attributes {dimension_semantics = [#tpu.dimension_semantics<parallel>], iteration_bounds = array<i64: 2>, scalar_prefetch = 0 : i64, scratch_operands = 0 : i64, tpu.core_type = #tpu.core_type<tc>, window_params = [{transform_indices = @transform_0, window_bounds = array<i64: 1, 8, 256>}, {pipeline_mode = #tpu.pipeline_mode<synchronous>, transform_indices = @transform_1, window_bounds = array<i64: 8, 1>}, {pipeline_mode = #tpu.pipeline_mode<synchronous>, transform_indices = @transform_2, window_bounds = array<i64: 8, 1>}, {transform_indices = @transform_3, window_bounds = array<i64: 1, 4, 128>}]} {
    %c0 = arith.constant 0 : index
    %c0_0 = arith.constant 0 : index
    %c0_1 = arith.constant 0 : index
    %0 = vector.load %arg1[%c0, %c0_0, %c0_1] : memref<1x8x256xf32, #tpu.memory_space<vmem>>, vector<1x8x256xf32>
    %1 = vector.shape_cast %0 : vector<1x8x256xf32> to vector<8x256xf32>
    %c0_2 = arith.constant 0 : index
    %c0_3 = arith.constant 0 : index
    %2 = vector.load %arg2[%c0_2, %c0_3] : memref<8x1xf32, #tpu.memory_space<vmem>>, vector<8x1xf32>
    %3 = vector.broadcast %2 : vector<8x1xf32> to vector<8x256xf32>
    %4 = arith.mulf %1, %3 : vector<8x256xf32>
    %c0_4 = arith.constant 0 : index
    %c0_5 = arith.constant 0 : index
    %5 = vector.load %arg3[%c0_4, %c0_5] : memref<8x1xf32, #tpu.memory_space<vmem>>, vector<8x1xf32>
    %6 = vector.broadcast %5 : vector<8x1xf32> to vector<8x256xf32>
    %7 = arith.addf %4, %6 : vector<8x256xf32>
    %cst = arith.constant 0.000000e+00 : f32
    %8 = vector.broadcast %cst : f32 to vector<8x256xf32>
    %9 = arith.maximumf %7, %8 : vector<8x256xf32>
    %10 = vector.shape_cast %9 : vector<8x256xf32> to vector<8x128x2xf32>
    %cst_6 = arith.constant dense<0xFF800000> : vector<8x128xf32>
    %11 = vector.multi_reduction <maximumf>, %10, %cst_6 [2] : vector<8x128x2xf32> to vector<8x128xf32>
    %12 = vector.shape_cast %11 : vector<8x128xf32> to vector<8x8x2x8xf32>
    %cst_7 = arith.constant dense<0xFF800000> : vector<8x8x8xf32>
    %13 = vector.multi_reduction <maximumf>, %12, %cst_7 [2] : vector<8x8x2x8xf32> to vector<8x8x8xf32>
    %14 = vector.shape_cast %13 : vector<8x8x8xf32> to vector<1x4x128xf32>
    %c0_8 = arith.constant 0 : index
    %c0_9 = arith.constant 0 : index
    %c0_10 = arith.constant 0 : index
    %15 = vector.load %arg4[%c0_8, %c0_9, %c0_10] : memref<1x4x128xf32, #tpu.memory_space<vmem>>, vector<1x4x128xf32>
    tpu.vector_store %arg4[%c0_8, %c0_9, %c0_10], %14 {strides = array<i32>} : memref<1x4x128xf32, #tpu.memory_space<vmem>>, vector<1x4x128xf32>,
    return
  }
  func.func @transform_0(%arg0: i32) -> (i32, i32, i32) {
    %c0_i32 = arith.constant 0 : i32
    %c0_i32_0 = arith.constant 0 : i32
    %c0_i32_1 = arith.constant 0 : i32
    return %arg0, %c0_i32, %c0_i32_0 : i32, i32, i32
  }
  func.func @transform_1(%arg0: i32) -> (i32, i32) {
    %c0_i32 = arith.constant 0 : i32
    %c0_i32_0 = arith.constant 0 : i32
    %c0_i32_1 = arith.constant 0 : i32
    return %c0_i32, %c0_i32_0 : i32, i32
  }
  func.func @transform_2(%arg0: i32) -> (i32, i32) {
    %c0_i32 = arith.constant 0 : i32
    %c0_i32_0 = arith.constant 0 : i32
    %c0_i32_1 = arith.constant 0 : i32
    return %c0_i32, %c0_i32_0 : i32, i32
  }
  func.func @transform_3(%arg0: i32) -> (i32, i32, i32) {
    %c0_i32 = arith.constant 0 : i32
    %c0_i32_0 = arith.constant 0 : i32
    %c0_i32_1 = arith.constant 0 : i32
    return %arg0, %c0_i32, %c0_i32_0 : i32, i32, i32
  }
}

</mosaic_0001>

<llo_original>
// kernel: conv_block.3
$region0: #{conv_block.3}
  #allocation0 [shape = 'u32[]', space=smem, size = 0x4, offset = 0x4, fixed_abs, tag = 'smem constant byte address 0x4 - core index']
  #allocation1 [shape = 'u32[144,128]{1,0:T(1,128)}', space=vmem, size = 0x12000, scoped, tag = 'internal scratch']
  %s0 = inlined_call_operand.vmem [shape: f32[2,8,256], index: 0, kind: input, shape index: {}]
  %s1 = inlined_call_operand.vmem [shape: f32[8,1], index: 1, kind: input, shape index: {}]
  %s2 = inlined_call_operand.vmem [shape: f32[8,1], index: 2, kind: input, shape index: {}]
  %s3 = inlined_call_operand.vmem [shape: f32[2,4,128], index: 3, kind: output, shape index: {}]
  %s4 = sld [smem:[#allocation0]]
  $region45: #{conv_block.3} parent=0
    _
  %s6 = ssub.s32 1, %s4
  %s7 = scalar_select 0, %s6, %s4
  loop: start=0, step=1, limit=4
  $region2: #{conv_block.3} parent=0 // loop_pre_header
    _
  $region3: #{conv_block.3} parent=0 // loop_header
    %s9 = sphi 0, %s13
    %p10 = scmp.ge.s32.totalorder %s9, 4
    %s19 = sphi 0, %s21
    %s22 = sphi 0, %s19
    %s23 = sphi 0, %s22
    %s39 = sphi 0, %s23
    %s43 = sphi 0, %s43
    %s45 = sphi 0, %s43
    %s46 = sphi 0, %s45
    %s60 = sphi 0, %s46
    %s64 = sphi 0, %s64
    %s66 = sphi 0, %s64
    %s67 = sphi 0, %s66
    %s81 = sphi 0, %s67
    %s87 = sphi 0, %s89
    %s90 = sphi 0, %s87
    %s91 = sphi 0, %s90
    %s107 = sphi 0, %s91
  $region4: #{conv_block.3} parent=0 // loop_header_branch
    %12 = sbr.rel (%p10) target = $region8
  $region5: #{conv_block.3} parent=0 // loop_body
    %s14 = ssub.s32 %s9, 1
    %s15 = ssub.s32 %s9, 2
    %s16 = sadd.s32 %s9, 1
    %s17 = ssub.s32 %s9, %s16
    %p18 = scmp.eq.s32.totalorder %s17, 0
    %s20 = sadd.s32 %s19, 1
    %s21 = scalar_select %p18, %s19, %s20
    %p24 = pneg %p18
    %p25 = scmp.eq.s32.totalorder %s9, 1
    %p26 = por %p24, %p25
    %p27 = scmp.ne.s32.totalorder %s19, %s22
    %p28 = scmp.eq.s32.totalorder %s9, 0
    %p29 = por %p27, %p28
    %p30 = scmp.ne.s32.totalorder %s19, %s22
    %p31 = scmp.eq.s32.totalorder %s14, 1
    %p32 = por %p30, %p31
    %p33 = scmp.ne.s32.totalorder %s22, %s23
    %p34 = scmp.eq.s32.totalorder %s14, 0
    %p35 = por %p33, %p34
    %p36 = scmp.ne.s32.totalorder %s22, %s23
    %p37 = scmp.eq.s32.totalorder %s15, 1
    %p38 = por %p36, %p37
    %p40 = scmp.ne.s32.totalorder %s23, %s39
    %p41 = scmp.eq.s32.totalorder %s15, 0
    %p42 = por %p40, %p41
    %s44 = sadd.s32 %s43, 1
    %p47 = scmp.eq.s32.totalorder %s9, 1
    %p48 = scmp.ne.s32.totalorder %s43, %s45
    %p49 = scmp.eq.s32.totalorder %s9, 0
    %p50 = por %p48, %p49
    %p51 = scmp.ne.s32.totalorder %s43, %s45
    %p52 = scmp.eq.s32.totalorder %s14, 1
    %p53 = por %p51, %p52
    %p54 = scmp.ne.s32.totalorder %s45, %s46
    %p55 = scmp.eq.s32.totalorder %s14, 0
    %p56 = por %p54, %p55
    %p57 = scmp.ne.s32.totalorder %s45, %s46
    %p58 = scmp.eq.s32.totalorder %s15, 1
    %p59 = por %p57, %p58
    %p61 = scmp.ne.s32.totalorder %s46, %s60
    %p62 = scmp.eq.s32.totalorder %s15, 0
    %p63 = por %p61, %p62
    %s65 = sadd.s32 %s64, 1
    %p68 = scmp.eq.s32.totalorder %s9, 1
    %p69 = scmp.ne.s32.totalorder %s64, %s66
    %p70 = scmp.eq.s32.totalorder %s9, 0
    %p71 = por %p69, %p70
    %p72 = scmp.ne.s32.totalorder %s64, %s66
    %p73 = scmp.eq.s32.totalorder %s14, 1
    %p74 = por %p72, %p73
    %p75 = scmp.ne.s32.totalorder %s66, %s67
    %p76 = scmp.eq.s32.totalorder %s14, 0
    %p77 = por %p75, %p76
    %p78 = scmp.ne.s32.totalorder %s66, %s67
    %p79 = scmp.eq.s32.totalorder %s15, 1
    %p80 = por %p78, %p79
    %p82 = scmp.ne.s32.totalorder %s67, %s81
    %p83 = scmp.eq.s32.totalorder %s15, 0
    %p84 = por %p82, %p83
    %s85 = ssub.s32 %s9, %s16
    %p86 = scmp.eq.s32.totalorder %s85, 0
    %s88 = sadd.s32 %s87, 1
    %s89 = scalar_select %p86, %s87, %s88
    %p92 = pneg %p86
    %p93 = scmp.eq.s32.totalorder %s9, 1
    %p94 = por %p92, %p93
    %p95 = scmp.ne.s32.totalorder %s87, %s90
    %p96 = scmp.eq.s32.totalorder %s9, 0
    %p97 = por %p95, %p96
    %p98 = scmp.ne.s32.totalorder %s87, %s90
    %p99 = scmp.eq.s32.totalorder %s14, 1
    %p100 = por %p98, %p99
    %p101 = scmp.ne.s32.totalorder %s90, %s91
    %p102 = scmp.eq.s32.totalorder %s14, 0
    %p103 = por %p101, %p102
    %p104 = scmp.ne.s32.totalorder %s90, %s91
    %p105 = scmp.eq.s32.totalorder %s15, 1
    %p106 = por %p104, %p105
    %p108 = scmp.ne.s32.totalorder %s91, %s107
    %p109 = scmp.eq.s32.totalorder %s15, 0
    %p110 = por %p108, %p109
    %p111 = scmp.le.s32.totalorder 1, %s9
    %p112 = scmp.lt.s32.totalorder %s9, 3
    %p113 = pnand %p111, %p112
    %p114 = pneg %p113
    // Predicated region
    $region9: #{conv_block.3} parent=5 // pred_check
      _
    $region10: #{conv_block.3} parent=5 // pred_check_branch
      %116 = sbr.rel (%p113) target = $region12
    $region11: #{conv_block.3} parent=5 // pred_region
      %s117 = ssub.s32 %s9, 1
      // Predicated region
      $region13: #{conv_block.3} parent=11 // pred_check
        %p118 = pneg %p56
      $region14: #{conv_block.3} parent=11 // pred_check_branch
        %120 = sbr.rel (%p118) target = $region16
      $region15: #{conv_block.3} parent=11 // pred_region
        _
      $region16: #{conv_block.3} parent=11 // pred_fallthru
        _
      // Predicated region
      $region17: #{conv_block.3} parent=11 // pred_check
        %p121 = pneg %p77
      $region18: #{conv_block.3} parent=11 // pred_check_branch
        %123 = sbr.rel (%p121) target = $region20
      $region19: #{conv_block.3} parent=11 // pred_region
        _
      $region20: #{conv_block.3} parent=11 // pred_fallthru
        _
    $region12: #{conv_block.3} parent=5 // pred_fallthru
      _
    %p124 = scmp.lt.s32.totalorder %s9, 2
    // Predicated region
    $region21: #{conv_block.3} parent=5 // pred_check
      %p125 = pneg %p124
    $region22: #{conv_block.3} parent=5 // pred_check_branch
      %127 = sbr.rel (%p125) target = $region24
    $region23: #{conv_block.3} parent=5 // pred_region
      // Predicated region
      $region25: #{conv_block.3} parent=23 // pred_check
        %p128 = pneg %p29
      $region26: #{conv_block.3} parent=23 // pred_check_branch
        %130 = sbr.rel (%p128) target = $region28
      $region27: #{conv_block.3} parent=23 // pred_region
        %p131 = scmp.lt.s32.totalorder %s9, 1
        %s132 = scalar_select %p131, %s9, 1
        %s133 = smul.addr %s132, 2
        %s134 = smul.addr %s133, 8
        %s135 = scalar_lea.vmem %s0, %s134
      $region28: #{conv_block.3} parent=23 // pred_fallthru
        _
    $region24: #{conv_block.3} parent=5 // pred_fallthru
      _
    %p136 = scmp.le.s32.totalorder 1, %s9
    %p137 = scmp.lt.s32.totalorder %s9, 3
    %p138 = pnand %p136, %p137
    %p139 = pneg %p138
    // Predicated region
    $region29: #{conv_block.3} parent=5 // pred_check
      _
    $region30: #{conv_block.3} parent=5 // pred_check_branch
      %141 = sbr.rel (%p138) target = $region32
    $region31: #{conv_block.3} parent=5 // pred_region
      %s142 = ssub.s32 %s9, 1
      %p143 = scmp.lt.s32.totalorder %s14, 1
      %s144 = scalar_select %p143, %s14, 1
      %s145 = smul.addr %s144, 2
      %s146 = smul.addr %s145, 8
      %s147 = scalar_lea.vmem %s0, %s146
      %p148 = pneg %p35
      %p149 = pneg %p32
      %p150 = pneg %p56
      %p151 = pneg %p53
      %p152 = pneg %p77
      %p153 = pneg %p74
      %p154 = pneg %p103
      %p155 = pneg %p100
      %p156 = scmp.lt.s32.totalorder %s14, 1
      %s157 = scalar_select %p156, %s14, 1
      %s158 = smul.addr %s157, 4
      %s159 = scalar_lea.vmem %s3, %s158
      %p160 = scmp.lt.s32.totalorder %s14, 1
      %s161 = scalar_select %p160, %s14, 1
      %s162 = smul.addr %s161, 2
      %s163 = smul.addr %s162, 8
      %s164 = scalar_lea.vmem %s0, %s163
      %p165 = scmp.lt.s32.totalorder %s14, 1
      %s166 = scalar_select %p165, %s14, 1
      %s167 = smul.addr %s166, 4
      %s168 = scalar_lea.vmem %s3, %s167
      %v169 = vld [vmem:[%s164] sm:$0xff]
      %v170 = vld [vmem:[%s164 + $0x8] sm:$0xff]
      %v171 = vld [vmem:[%s1] sm:$0xff]
      %173 = vset.pattern.permute.xlu0 0
      %174 = vperm.xlu0 %173, %v171
      %v175 = vpop.permute.xlu0 %174
      %v177 = vmul.f32 %v169, %v175
      %v178 = vmul.f32 %v170, %v175
      %v179 = vld [vmem:[%s2] sm:$0xff]
      %181 = vset.pattern.permute.xlu0 0
      %182 = vperm.xlu0 %181, %v179
      %v183 = vpop.permute.xlu0 %182
      %v185 = vadd.f32 %v177, %v183
      %v186 = vadd.f32 %v178, %v183
      %v187 = vmax.f32 %v185, 0.0
      %v188 = vmax.f32 %v186, 0.0
      %190 = vrot.lane.b32.xlu0 %v187, 126
      %v191 = vpop.permute.xlu0 %190
      %193 = vrot.lane.b32.xlu0 %v187, 124
      %v194 = vpop.permute.xlu0 %193
      %196 = vrot.lane.b32.xlu0 %v187, 122
      %v197 = vpop.permute.xlu0 %196
      %199 = vrot.lane.b32.xlu0 %v187, 120
      %v200 = vpop.permute.xlu0 %199
      %202 = vrot.lane.b32.xlu0 %v187, 118
      %v203 = vpop.permute.xlu0 %202
      %205 = vrot.lane.b32.xlu0 %v187, 116
      %v206 = vpop.permute.xlu0 %205
      %208 = vrot.lane.b32.xlu0 %v187, 114
      %v209 = vpop.permute.xlu0 %208
      %211 = vrot.lane.b32.xlu0 %v187, 112
      %v212 = vpop.permute.xlu0 %211
      %214 = vrot.lane.b32.xlu0 %v187, 110
      %v215 = vpop.permute.xlu0 %214
      %217 = vrot.lane.b32.xlu0 %v187, 108
      %v218 = vpop.permute.xlu0 %217
      %220 = vrot.lane.b32.xlu0 %v187, 106
      %v221 = vpop.permute.xlu0 %220
      %223 = vrot.lane.b32.xlu0 %v187, 104
      %v224 = vpop.permute.xlu0 %223
      %226 = vrot.lane.b32.xlu0 %v187, 102
      %v227 = vpop.permute.xlu0 %226
      %229 = vrot.lane.b32.xlu0 %v187, 100
      %v230 = vpop.permute.xlu0 %229
      %232 = vrot.lane.b32.xlu0 %v187, 98
      %v233 = vpop.permute.xlu0 %232
      %235 = vrot.lane.b32.xlu0 %v187, 96
      %v236 = vpop.permute.xlu0 %235
      %238 = vrot.lane.b32.xlu0 %v187, 94
      %v239 = vpop.permute.xlu0 %238
      %241 = vrot.lane.b32.xlu0 %v187, 92
      %v242 = vpop.permute.xlu0 %241
      %244 = vrot.lane.b32.xlu0 %v187, 90
      %v245 = vpop.permute.xlu0 %244
      %247 = vrot.lane.b32.xlu0 %v187, 88
      %v248 = vpop.permute.xlu0 %247
      %250 = vrot.lane.b32.xlu0 %v187, 86
      %v251 = vpop.permute.xlu0 %250
      %253 = vrot.lane.b32.xlu0 %v187, 84
      %v254 = vpop.permute.xlu0 %253
      %256 = vrot.lane.b32.xlu0 %v187, 82
      %v257 = vpop.permute.xlu0 %256
      %259 = vrot.lane.b32.xlu0 %v187, 80
      %v260 = vpop.permute.xlu0 %259
      %262 = vrot.lane.b32.xlu0 %v187, 78
      %v263 = vpop.permute.xlu0 %262
      %265 = vrot.lane.b32.xlu0 %v187, 76
      %v266 = vpop.permute.xlu0 %265
      %268 = vrot.lane.b32.xlu0 %v187, 74
      %v269 = vpop.permute.xlu0 %268
      %271 = vrot.lane.b32.xlu0 %v187, 72
      %v272 = vpop.permute.xlu0 %271
      %274 = vrot.lane.b32.xlu0 %v187, 70
      %v275 = vpop.permute.xlu0 %274
      %277 = vrot.lane.b32.xlu0 %v187, 68
      %v278 = vpop.permute.xlu0 %277
      %280 = vrot.lane.b32.xlu0 %v187, 66
      %v281 = vpop.permute.xlu0 %280
      %283 = vrot.lane.b32.xlu0 %v187, 64
      %v284 = vpop.permute.xlu0 %283
      %286 = vrot.lane.b32.xlu0 %v187, 62
      %v287 = vpop.permute.xlu0 %286
      %289 = vrot.lane.b32.xlu0 %v187, 60
      %v290 = vpop.permute.xlu0 %289
      %292 = vrot.lane.b32.xlu0 %v187, 58
      %v293 = vpop.permute.xlu0 %292
      %295 = vrot.lane.b32.xlu0 %v187, 56
      %v296 = vpop.permute.xlu0 %295
      %298 = vrot.lane.b32.xlu0 %v187, 54
      %v299 = vpop.permute.xlu0 %298
      %301 = vrot.lane.b32.xlu0 %v187, 52
      %v302 = vpop.permute.xlu0 %301
      %304 = vrot.lane.b32.xlu0 %v187, 50
      %v305 = vpop.permute.xlu0 %304
      %307 = vrot.lane.b32.xlu0 %v187, 48
      %v308 = vpop.permute.xlu0 %307
      %310 = vrot.lane.b32.xlu0 %v187, 46
      %v311 = vpop.permute.xlu0 %310
      %313 = vrot.lane.b32.xlu0 %v187, 44
      %v314 = vpop.permute.xlu0 %313
      %316 = vrot.lane.b32.xlu0 %v187, 42
      %v317 = vpop.permute.xlu0 %316
      %319 = vrot.lane.b32.xlu0 %v187, 40
      %v320 = vpop.permute.xlu0 %319
      %322 = vrot.lane.b32.xlu0 %v187, 38
      %v323 = vpop.permute.xlu0 %322
      %325 = vrot.lane.b32.xlu0 %v187, 36
      %v326 = vpop.permute.xlu0 %325
      %328 = vrot.lane.b32.xlu0 %v187, 34
      %v329 = vpop.permute.xlu0 %328
      %331 = vrot.lane.b32.xlu0 %v187, 32
      %v332 = vpop.permute.xlu0 %331
      %334 = vrot.lane.b32.xlu0 %v187, 30
      %v335 = vpop.permute.xlu0 %334
      %337 = vrot.lane.b32.xlu0 %v187, 28
      %v338 = vpop.permute.xlu0 %337
      %340 = vrot.lane.b32.xlu0 %v187, 26
      %v341 = vpop.permute.xlu0 %340
      %343 = vrot.lane.b32.xlu0 %v187, 24
      %v344 = vpop.permute.xlu0 %343
      %346 = vrot.lane.b32.xlu0 %v187, 22
      %v347 = vpop.permute.xlu0 %346
      %349 = vrot.lane.b32.xlu0 %v187, 20
      %v350 = vpop.permute.xlu0 %349
      %352 = vrot.lane.b32.xlu0 %v187, 18
      %v353 = vpop.permute.xlu0 %352
      %355 = vrot.lane.b32.xlu0 %v187, 16
      %v356 = vpop.permute.xlu0 %355
      %358 = vrot.lane.b32.xlu0 %v187, 14
      %v359 = vpop.permute.xlu0 %358
      %361 = vrot.lane.b32.xlu0 %v187, 12
      %v362 = vpop.permute.xlu0 %361
      %364 = vrot.lane.b32.xlu0 %v187, 10
      %v365 = vpop.permute.xlu0 %364
      %367 = vrot.lane.b32.xlu0 %v187, 8
      %v368 = vpop.permute.xlu0 %367
      %370 = vrot.lane.b32.xlu0 %v187, 6
      %v371 = vpop.permute.xlu0 %370
      %373 = vrot.lane.b32.xlu0 %v187, 4
      %v374 = vpop.permute.xlu0 %373
      %376 = vrot.lane.b32.xlu0 %v187, 2
      %v377 = vpop.permute.xlu0 %376
      %380 = vrot.lane.b32.xlu0 %v188, 126
      %v381 = vpop.permute.xlu0 %380
      %383 = vrot.lane.b32.xlu0 %v188, 124
      %v384 = vpop.permute.xlu0 %383
      %386 = vrot.lane.b32.xlu0 %v188, 122
      %v387 = vpop.permute.xlu0 %386
      %389 = vrot.lane.b32.xlu0 %v188, 120
      %v390 = vpop.permute.xlu0 %389
      %392 = vrot.lane.b32.xlu0 %v188, 118
      %v393 = vpop.permute.xlu0 %392
      %395 = vrot.lane.b32.xlu0 %v188, 116
      %v396 = vpop.permute.xlu0 %395
      %398 = vrot.lane.b32.xlu0 %v188, 114
      %v399 = vpop.permute.xlu0 %398
      %401 = vrot.lane.b32.xlu0 %v188, 112
      %v402 = vpop.permute.xlu0 %401
      %404 = vrot.lane.b32.xlu0 %v188, 110
      %v405 = vpop.permute.xlu0 %404
      %407 = vrot.lane.b32.xlu0 %v188, 108
      %v408 = vpop.permute.xlu0 %407
      %410 = vrot.lane.b32.xlu0 %v188, 106
      %v411 = vpop.permute.xlu0 %410
      %413 = vrot.lane.b32.xlu0 %v188, 104
      %v414 = vpop.permute.xlu0 %413
      %416 = vrot.lane.b32.xlu0 %v188, 102
      %v417 = vpop.permute.xlu0 %416
      %419 = vrot.lane.b32.xlu0 %v188, 100
      %v420 = vpop.permute.xlu0 %419
      %422 = vrot.lane.b32.xlu0 %v188, 98
      %v423 = vpop.permute.xlu0 %422
      %425 = vrot.lane.b32.xlu0 %v188, 96
      %v426 = vpop.permute.xlu0 %425
      %428 = vrot.lane.b32.xlu0 %v188, 94
      %v429 = vpop.permute.xlu0 %428
      %431 = vrot.lane.b32.xlu0 %v188, 92
      %v432 = vpop.permute.xlu0 %431
      %434 = vrot.lane.b32.xlu0 %v188, 90
      %v435 = vpop.permute.xlu0 %434
      %437 = vrot.lane.b32.xlu0 %v188, 88
      %v438 = vpop.permute.xlu0 %437
      %440 = vrot.lane.b32.xlu0 %v188, 86
      %v441 = vpop.permute.xlu0 %440
      %443 = vrot.lane.b32.xlu0 %v188, 84
      %v444 = vpop.permute.xlu0 %443
      %446 = vrot.lane.b32.xlu0 %v188, 82
      %v447 = vpop.permute.xlu0 %446
      %449 = vrot.lane.b32.xlu0 %v188, 80
      %v450 = vpop.permute.xlu0 %449
      %452 = vrot.lane.b32.xlu0 %v188, 78
      %v453 = vpop.permute.xlu0 %452
      %455 = vrot.lane.b32.xlu0 %v188, 76
      %v456 = vpop.permute.xlu0 %455
      %458 = vrot.lane.b32.xlu0 %v188, 74
      %v459 = vpop.permute.xlu0 %458
      %461 = vrot.lane.b32.xlu0 %v188, 72
      %v462 = vpop.permute.xlu0 %461
      %464 = vrot.lane.b32.xlu0 %v188, 70
      %v465 = vpop.permute.xlu0 %464
      %467 = vrot.lane.b32.xlu0 %v188, 68
      %v468 = vpop.permute.xlu0 %467
      %470 = vrot.lane.b32.xlu0 %v188, 66
      %v471 = vpop.permute.xlu0 %470
      %473 = vrot.lane.b32.xlu0 %v188, 64
      %v474 = vpop.permute.xlu0 %473
      %476 = vrot.lane.b32.xlu0 %v188, 62
      %v477 = vpop.permute.xlu0 %476
      %479 = vrot.lane.b32.xlu0 %v188, 60
      %v480 = vpop.permute.xlu0 %479
      %482 = vrot.lane.b32.xlu0 %v188, 58
      %v483 = vpop.permute.xlu0 %482
      %485 = vrot.lane.b32.xlu0 %v188, 56
      %v486 = vpop.permute.xlu0 %485
      %488 = vrot.lane.b32.xlu0 %v188, 54
      %v489 = vpop.permute.xlu0 %488
      %491 = vrot.lane.b32.xlu0 %v188, 52
      %v492 = vpop.permute.xlu0 %491
      %494 = vrot.lane.b32.xlu0 %v188, 50
      %v495 = vpop.permute.xlu0 %494
      %497 = vrot.lane.b32.xlu0 %v188, 48
      %v498 = vpop.permute.xlu0 %497
      %500 = vrot.lane.b32.xlu0 %v188, 46
      %v501 = vpop.permute.xlu0 %500
      %503 = vrot.lane.b32.xlu0 %v188, 44
      %v504 = vpop.permute.xlu0 %503
      %506 = vrot.lane.b32.xlu0 %v188, 42
      %v507 = vpop.permute.xlu0 %506
      %509 = vrot.lane.b32.xlu0 %v188, 40
      %v510 = vpop.permute.xlu0 %509
      %512 = vrot.lane.b32.xlu0 %v188, 38
      %v513 = vpop.permute.xlu0 %512
      %515 = vrot.lane.b32.xlu0 %v188, 36
      %v516 = vpop.permute.xlu0 %515
      %518 = vrot.lane.b32.xlu0 %v188, 34
      %v519 = vpop.permute.xlu0 %518
      %521 = vrot.lane.b32.xlu0 %v188, 32
      %v522 = vpop.permute.xlu0 %521
      %524 = vrot.lane.b32.xlu0 %v188, 30
      %v525 = vpop.permute.xlu0 %524
      %527 = vrot.lane.b32.xlu0 %v188, 28
      %v528 = vpop.permute.xlu0 %527
      %530 = vrot.lane.b32.xlu0 %v188, 26
      %v531 = vpop.permute.xlu0 %530
      %533 = vrot.lane.b32.xlu0 %v188, 24
      %v534 = vpop.permute.xlu0 %533
      %536 = vrot.lane.b32.xlu0 %v188, 22
      %v537 = vpop.permute.xlu0 %536
      %539 = vrot.lane.b32.xlu0 %v188, 20
      %v540 = vpop.permute.xlu0 %539
      %542 = vrot.lane.b32.xlu0 %v188, 18
      %v543 = vpop.permute.xlu0 %542
      %545 = vrot.lane.b32.xlu0 %v188, 16
      %v546 = vpop.permute.xlu0 %545
      %548 = vrot.lane.b32.xlu0 %v188, 14
      %v549 = vpop.permute.xlu0 %548
      %551 = vrot.lane.b32.xlu0 %v188, 12
      %v552 = vpop.permute.xlu0 %551
      %554 = vrot.lane.b32.xlu0 %v188, 10
      %v555 = vpop.permute.xlu0 %554
      %557 = vrot.lane.b32.xlu0 %v188, 8
      %v558 = vpop.permute.xlu0 %557
      %560 = vrot.lane.b32.xlu0 %v188, 6
      %v561 = vpop.permute.xlu0 %560
      %563 = vrot.lane.b32.xlu0 %v188, 4
      %v564 = vpop.permute.xlu0 %563
      %566 = vrot.lane.b32.xlu0 %v188, 2
      %v567 = vpop.permute.xlu0 %566
      %v569 = vcombine.low %v187, %v194
      %v570 = vcombine.high %v187, %v194
      %v572 = vunpack.c.l.s4 1983009808
      %v573 = vunpack.c.0.s8 %v572
      %v574 = vlaneseq
      %v575 = vshrl.u32 %v574, 7
      %v576 = vsub.s32 %v573, %v575
      %v577 = vrot.slane %v569, %v576
      %v579 = vunpack.c.l.s4 1983009808
      %v580 = vunpack.c.0.s8 %v579
      %v581 = vlaneseq
      %v582 = vshrl.u32 %v581, 7
      %v583 = vsub.s32 %v580, %v582
      %v584 = vrot.slane %v570, %v583
      %v585 = vcombine.low %v191, %v197
      %v586 = vcombine.high %v191, %v197
      %v588 = vunpack.c.l.s4 1983009808
      %v589 = vunpack.c.0.s8 %v588
      %v590 = vlaneseq
      %v591 = vshrl.u32 %v590, 7
      %v592 = vsub.s32 %v589, %v591
      %v593 = vrot.slane %v585, %v592
      %v595 = vunpack.c.l.s4 1983009808
      %v596 = vunpack.c.0.s8 %v595
      %v597 = vlaneseq
      %v598 = vshrl.u32 %v597, 7
      %v599 = vsub.s32 %v596, %v598
      %v600 = vrot.slane %v586, %v599
      %v601 = vcombine.low %v200, %v206
      %v602 = vcombine.high %v200, %v206
      %v604 = vunpack.c.l.s4 1983009808
      %v605 = vunpack.c.0.s8 %v604
      %v606 = vlaneseq
      %v607 = vshrl.u32 %v606, 7
      %v608 = vsub.s32 %v605, %v607
      %v609 = vrot.slane %v601, %v608
      %v611 = vunpack.c.l.s4 1983009808
      %v612 = vunpack.c.0.s8 %v611
      %v613 = vlaneseq
      %v614 = vshrl.u32 %v613, 7
      %v615 = vsub.s32 %v612, %v614
      %v616 = vrot.slane %v602, %v615
      %v617 = vcombine.low %v203, %v209
      %v618 = vcombine.high %v203, %v209
      %v620 = vunpack.c.l.s4 1983009808
      %v621 = vunpack.c.0.s8 %v620
      %v622 = vlaneseq
      %v623 = vshrl.u32 %v622, 7
      %v624 = vsub.s32 %v621, %v623
      %v625 = vrot.slane %v617, %v624
      %v627 = vunpack.c.l.s4 1983009808
      %v628 = vunpack.c.0.s8 %v627
      %v629 = vlaneseq
      %v630 = vshrl.u32 %v629, 7
      %v631 = vsub.s32 %v628, %v630
      %v632 = vrot.slane %v618, %v631
      %v633 = vcombine.low %v577, %v593
      %v634 = vcombine.high %v577, %v593
      %v636 = vunpack.c.l.s4 1934713408
      %v637 = vunpack.c.0.s8 %v636
      %v638 = vlaneseq
      %v639 = vshrl.u32 %v638, 7
      %v640 = vsub.s32 %v637, %v639
      %v641 = vrot.slane %v633, %v640
      %v643 = vunpack.c.l.s4 1934713408
      %v644 = vunpack.c.0.s8 %v643
      %v645 = vlaneseq
      %v646 = vshrl.u32 %v645, 7
      %v647 = vsub.s32 %v644, %v646
      %v648 = vrot.slane %v634, %v647
      %v649 = vcombine.low %v584, %v600
      %v650 = vcombine.high %v584, %v600
      %v652 = vunpack.c.l.s4 1934713408
      %v653 = vunpack.c.0.s8 %v652
      %v654 = vlaneseq
      %v655 = vshrl.u32 %v654, 7
      %v656 = vsub.s32 %v653, %v655
      %v657 = vrot.slane %v649, %v656
      %v659 = vunpack.c.l.s4 1934713408
      %v660 = vunpack.c.0.s8 %v659
      %v661 = vlaneseq
      %v662 = vshrl.u32 %v661, 7
      %v663 = vsub.s32 %v660, %v662
      %v664 = vrot.slane %v650, %v663
      %v665 = vcombine.low %v609, %v625
      %v666 = vcombine.high %v609, %v625
      %v668 = vunpack.c.l.s4 1934713408
      %v669 = vunpack.c.0.s8 %v668
      %v670 = vlaneseq
      %v671 = vshrl.u32 %v670, 7
      %v672 = vsub.s32 %v669, %v671
      %v673 = vrot.slane %v665, %v672
      %v675 = vunpack.c.l.s4 1934713408
      %v676 = vunpack.c.0.s8 %v675
      %v677 = vlaneseq
      %v678 = vshrl.u32 %v677, 7
      %v679 = vsub.s32 %v676, %v678
      %v680 = vrot.slane %v666, %v679
      %v681 = vcombine.low %v616, %v632
      %v682 = vcombine.high %v616, %v632
      %v684 = vunpack.c.l.s4 1934713408
      %v685 = vunpack.c.0.s8 %v684
      %v686 = vlaneseq
      %v687 = vshrl.u32 %v686, 7
      %v688 = vsub.s32 %v685, %v687
      %v689 = vrot.slane %v681, %v688
      %v691 = vunpack.c.l.s4 1934713408
      %v692 = vunpack.c.0.s8 %v691
      %v693 = vlaneseq
      %v694 = vshrl.u32 %v693, 7
      %v695 = vsub.s32 %v692, %v694
      %v696 = vrot.slane %v682, %v695
      %v697 = vcombine.low %v641, %v673
      %v698 = vcombine.high %v641, %v673
      %v699 = vcombine.low %v648, %v680
      %v700 = vcombine.high %v648, %v680
      %v701 = vcombine.low %v657, %v689
      %v702 = vcombine.high %v657, %v689
      %v703 = vcombine.low %v664, %v696
      %v704 = vcombine.high %v664, %v696
      %v705 = vcombine.low %v212, %v218
      %v706 = vcombine.high %v212, %v218
      %v708 = vunpack.c.l.s4 1983009808
      %v709 = vunpack.c.0.s8 %v708
      %v710 = vlaneseq
      %v711 = vshrl.u32 %v710, 7
      %v712 = vsub.s32 %v709, %v711
      %v713 = vrot.slane %v705, %v712
      %v715 = vunpack.c.l.s4 1983009808
      %v716 = vunpack.c.0.s8 %v715
      %v717 = vlaneseq
      %v718 = vshrl.u32 %v717, 7
      %v719 = vsub.s32 %v716, %v718
      %v720 = vrot.slane %v706, %v719
      %v721 = vcombine.low %v215, %v221
      %v722 = vcombine.high %v215, %v221
      %v724 = vunpack.c.l.s4 1983009808
      %v725 = vunpack.c.0.s8 %v724
      %v726 = vlaneseq
      %v727 = vshrl.u32 %v726, 7
      %v728 = vsub.s32 %v725, %v727
      %v729 = vrot.slane %v721, %v728
      %v731 = vunpack.c.l.s4 1983009808
      %v732 = vunpack.c.0.s8 %v731
      %v733 = vlaneseq
      %v734 = vshrl.u32 %v733, 7
      %v735 = vsub.s32 %v732, %v734
      %v736 = vrot.slane %v722, %v735
      %v737 = vcombine.low %v224, %v230
      %v738 = vcombine.high %v224, %v230
      %v740 = vunpack.c.l.s4 1983009808
      %v741 = vunpack.c.0.s8 %v740
      %v742 = vlaneseq
      %v743 = vshrl.u32 %v742, 7
      %v744 = vsub.s32 %v741, %v743
      %v745 = vrot.slane %v737, %v744
      %v747 = vunpack.c.l.s4 1983009808
      %v748 = vunpack.c.0.s8 %v747
      %v749 = vlaneseq
      %v750 = vshrl.u32 %v749, 7
      %v751 = vsub.s32 %v748, %v750
      %v752 = vrot.slane %v738, %v751
      %v753 = vcombine.low %v227, %v233
      %v754 = vcombine.high %v227, %v233
      %v756 = vunpack.c.l.s4 1983009808
      %v757 = vunpack.c.0.s8 %v756
      %v758 = vlaneseq
      %v759 = vshrl.u32 %v758, 7
      %v760 = vsub.s32 %v757, %v759
      %v761 = vrot.slane %v753, %v760
      %v763 = vunpack.c.l.s4 1983009808
      %v764 = vunpack.c.0.s8 %v763
      %v765 = vlaneseq
      %v766 = vshrl.u32 %v765, 7
      %v767 = vsub.s32 %v764, %v766
      %v768 = vrot.slane %v754, %v767
      %v769 = vcombine.low %v713, %v729
      %v770 = vcombine.high %v713, %v729
      %v772 = vunpack.c.l.s4 1934713408
      %v773 = vunpack.c.0.s8 %v772
      %v774 = vlaneseq
      %v775 = vshrl.u32 %v774, 7
      %v776 = vsub.s32 %v773, %v775
      %v777 = vrot.slane %v769, %v776
      %v779 = vunpack.c.l.s4 1934713408
      %v780 = vunpack.c.0.s8 %v779
      %v781 = vlaneseq
      %v782 = vshrl.u32 %v781, 7
      %v783 = vsub.s32 %v780, %v782
      %v784 = vrot.slane %v770, %v783
      %v785 = vcombine.low %v720, %v736
      %v786 = vcombine.high %v720, %v736
      %v788 = vunpack.c.l.s4 1934713408
      %v789 = vunpack.c.0.s8 %v788
      %v790 = vlaneseq
      %v791 = vshrl.u32 %v790, 7
      %v792 = vsub.s32 %v789, %v791
      %v793 = vrot.slane %v785, %v792
      %v795 = vunpack.c.l.s4 1934713408
      %v796 = vunpack.c.0.s8 %v795
      %v797 = vlaneseq
      %v798 = vshrl.u32 %v797, 7
      %v799 = vsub.s32 %v796, %v798
      %v800 = vrot.slane %v786, %v799
      %v801 = vcombine.low %v745, %v761
      %v802 = vcombine.high %v745, %v761
      %v804 = vunpack.c.l.s4 1934713408
      %v805 = vunpack.c.0.s8 %v804
      %v806 = vlaneseq
      %v807 = vshrl.u32 %v806, 7
      %v808 = vsub.s32 %v805, %v807
      %v809 = vrot.slane %v801, %v808
      %v811 = vunpack.c.l.s4 1934713408
      %v812 = vunpack.c.0.s8 %v811
      %v813 = vlaneseq
      %v814 = vshrl.u32 %v813, 7
      %v815 = vsub.s32 %v812, %v814
      %v816 = vrot.slane %v802, %v815
      %v817 = vcombine.low %v752, %v768
      %v818 = vcombine.high %v752, %v768
      %v820 = vunpack.c.l.s4 1934713408
      %v821 = vunpack.c.0.s8 %v820
      %v822 = vlaneseq
      %v823 = vshrl.u32 %v822, 7
      %v824 = vsub.s32 %v821, %v823
      %v825 = vrot.slane %v817, %v824
      %v827 = vunpack.c.l.s4 1934713408
      %v828 = vunpack.c.0.s8 %v827
      %v829 = vlaneseq
      %v830 = vshrl.u32 %v829, 7
      %v831 = vsub.s32 %v828, %v830
      %v832 = vrot.slane %v818, %v831
      %v833 = vcombine.low %v777, %v809
      %v834 = vcombine.high %v777, %v809
      %v835 = vcombine.low %v784, %v816
      %v836 = vcombine.high %v784, %v816
      %v837 = vcombine.low %v793, %v825
      %v838 = vcombine.high %v793, %v825
      %v839 = vcombine.low %v800, %v832
      %v840 = vcombine.high %v800, %v832
      %v841 = vcombine.low %v236, %v242
      %v842 = vcombine.high %v236, %v242
      %v844 = vunpack.c.l.s4 1983009808
      %v845 = vunpack.c.0.s8 %v844
      %v846 = vlaneseq
      %v847 = vshrl.u32 %v846, 7
      %v848 = vsub.s32 %v845, %v847
      %v849 = vrot.slane %v841, %v848
      %v851 = vunpack.c.l.s4 1983009808
      %v852 = vunpack.c.0.s8 %v851
      %v853 = vlaneseq
      %v854 = vshrl.u32 %v853, 7
      %v855 = vsub.s32 %v852, %v854
      %v856 = vrot.slane %v842, %v855
      %v857 = vcombine.low %v239, %v245
      %v858 = vcombine.high %v239, %v245
      %v860 = vunpack.c.l.s4 1983009808
      %v861 = vunpack.c.0.s8 %v860
      %v862 = vlaneseq
      %v863 = vshrl.u32 %v862, 7
      %v864 = vsub.s32 %v861, %v863
      %v865 = vrot.slane %v857, %v864
      %v867 = vunpack.c.l.s4 1983009808
      %v868 = vunpack.c.0.s8 %v867
      %v869 = vlaneseq
      %v870 = vshrl.u32 %v869, 7
      %v871 = vsub.s32 %v868, %v870
      %v872 = vrot.slane %v858, %v871
      %v873 = vcombine.low %v248, %v254
      %v874 = vcombine.high %v248, %v254
      %v876 = vunpack.c.l.s4 1983009808
      %v877 = vunpack.c.0.s8 %v876
      %v878 = vlaneseq
      %v879 = vshrl.u32 %v878, 7
      %v880 = vsub.s32 %v877, %v879
      %v881 = vrot.slane %v873, %v880
      %v883 = vunpack.c.l.s4 1983009808
      %v884 = vunpack.c.0.s8 %v883
      %v885 = vlaneseq
      %v886 = vshrl.u32 %v885, 7
      %v887 = vsub.s32 %v884, %v886
      %v888 = vrot.slane %v874, %v887
      %v889 = vcombine.low %v251, %v257
      %v890 = vcombine.high %v251, %v257
      %v892 = vunpack.c.l.s4 1983009808
      %v893 = vunpack.c.0.s8 %v892
      %v894 = vlaneseq
      %v895 = vshrl.u32 %v894, 7
      %v896 = vsub.s32 %v893, %v895
      %v897 = vrot.slane %v889, %v896
      %v899 = vunpack.c.l.s4 1983009808
      %v900 = vunpack.c.0.s8 %v899
      %v901 = vlaneseq
      %v902 = vshrl.u32 %v901, 7
      %v903 = vsub.s32 %v900, %v902
      %v904 = vrot.slane %v890, %v903
      %v905 = vcombine.low %v849, %v865
      %v906 = vcombine.high %v849, %v865
      %v908 = vunpack.c.l.s4 1934713408
      %v909 = vunpack.c.0.s8 %v908
      %v910 = vlaneseq
      %v911 = vshrl.u32 %v910, 7
      %v912 = vsub.s32 %v909, %v911
      %v913 = vrot.slane %v905, %v912
      %v915 = vunpack.c.l.s4 1934713408
      %v916 = vunpack.c.0.s8 %v915
      %v917 = vlaneseq
      %v918 = vshrl.u32 %v917, 7
      %v919 = vsub.s32 %v916, %v918
      %v920 = vrot.slane %v906, %v919
      %v921 = vcombine.low %v856, %v872
      %v922 = vcombine.high %v856, %v872
      %v924 = vunpack.c.l.s4 1934713408
      %v925 = vunpack.c.0.s8 %v924
      %v926 = vlaneseq
      %v927 = vshrl.u32 %v926, 7
      %v928 = vsub.s32 %v925, %v927
      %v929 = vrot.slane %v921, %v928
      %v931 = vunpack.c.l.s4 1934713408
      %v932 = vunpack.c.0.s8 %v931
      %v933 = vlaneseq
      %v934 = vshrl.u32 %v933, 7
      %v935 = vsub.s32 %v932, %v934
      %v936 = vrot.slane %v922, %v935
      %v937 = vcombine.low %v881, %v897
      %v938 = vcombine.high %v881, %v897
      %v940 = vunpack.c.l.s4 1934713408
      %v941 = vunpack.c.0.s8 %v940
      %v942 = vlaneseq
      %v943 = vshrl.u32 %v942, 7
      %v944 = vsub.s32 %v941, %v943
      %v945 = vrot.slane %v937, %v944
      %v947 = vunpack.c.l.s4 1934713408
      %v948 = vunpack.c.0.s8 %v947
      %v949 = vlaneseq
      %v950 = vshrl.u32 %v949, 7
      %v951 = vsub.s32 %v948, %v950
      %v952 = vrot.slane %v938, %v951
      %v953 = vcombine.low %v888, %v904
      %v954 = vcombine.high %v888, %v904
      %v956 = vunpack.c.l.s4 1934713408
      %v957 = vunpack.c.0.s8 %v956
      %v958 = vlaneseq
      %v959 = vshrl.u32 %v958, 7
      %v960 = vsub.s32 %v957, %v959
      %v961 = vrot.slane %v953, %v960
      %v963 = vunpack.c.l.s4 1934713408
      %v964 = vunpack.c.0.s8 %v963
      %v965 = vlaneseq
      %v966 = vshrl.u32 %v965, 7
      %v967 = vsub.s32 %v964, %v966
      %v968 = vrot.slane %v954, %v967
      %v969 = vcombine.low %v913, %v945
      %v970 = vcombine.high %v913, %v945
      %v971 = vcombine.low %v920, %v952
      %v972 = vcombine.high %v920, %v952
      %v973 = vcombine.low %v929, %v961
      %v974 = vcombine.high %v929, %v961
      %v975 = vcombine.low %v936, %v968
      %v976 = vcombine.high %v936, %v968
      %v977 = vcombine.low %v260, %v266
      %v978 = vcombine.high %v260, %v266
      %v980 = vunpack.c.l.s4 1983009808
      %v981 = vunpack.c.0.s8 %v980
      %v982 = vlaneseq
      %v983 = vshrl.u32 %v982, 7
      %v984 = vsub.s32 %v981, %v983
      %v985 = vrot.slane %v977, %v984
      %v987 = vunpack.c.l.s4 1983009808
      %v988 = vunpack.c.0.s8 %v987
      %v989 = vlaneseq
      %v990 = vshrl.u32 %v989, 7
      %v991 = vsub.s32 %v988, %v990
      %v992 = vrot.slane %v978, %v991
      %v993 = vcombine.low %v263, %v269
      %v994 = vcombine.high %v263, %v269
      %v996 = vunpack.c.l.s4 1983009808
      %v997 = vunpack.c.0.s8 %v996
      %v998 = vlaneseq
      %v999 = vshrl.u32 %v998, 7
      %v1000 = vsub.s32 %v997, %v999
      %v1001 = vrot.slane %v993, %v1000
      %v1003 = vunpack.c.l.s4 1983009808
      %v1004 = vunpack.c.0.s8 %v1003
      %v1005 = vlaneseq
      %v1006 = vshrl.u32 %v1005, 7
      %v1007 = vsub.s32 %v1004, %v1006
      %v1008 = vrot.slane %v994, %v1007
      %v1009 = vcombine.low %v272, %v278
      %v1010 = vcombine.high %v272, %v278
      %v1012 = vunpack.c.l.s4 1983009808
      %v1013 = vunpack.c.0.s8 %v1012
      %v1014 = vlaneseq
      %v1015 = vshrl.u32 %v1014, 7
      %v1016 = vsub.s32 %v1013, %v1015
      %v1017 = vrot.slane %v1009, %v1016
      %v1019 = vunpack.c.l.s4 1983009808
      %v1020 = vunpack.c.0.s8 %v1019
      %v1021 = vlaneseq
      %v1022 = vshrl.u32 %v1021, 7
      %v1023 = vsub.s32 %v1020, %v1022
      %v1024 = vrot.slane %v1010, %v1023
      %v1025 = vcombine.low %v275, %v281
      %v1026 = vcombine.high %v275, %v281
      %v1028 = vunpack.c.l.s4 1983009808
      %v1029 = vunpack.c.0.s8 %v1028
      %v1030 = vlaneseq
      %v1031 = vshrl.u32 %v1030, 7
      %v1032 = vsub.s32 %v1029, %v1031
      %v1033 = vrot.slane %v1025, %v1032
      %v1035 = vunpack.c.l.s4 1983009808
      %v1036 = vunpack.c.0.s8 %v1035
      %v1037 = vlaneseq
      %v1038 = vshrl.u32 %v1037, 7
      %v1039 = vsub.s32 %v1036, %v1038
      %v1040 = vrot.slane %v1026, %v1039
      %v1041 = vcombine.low %v985, %v1001
      %v1042 = vcombine.high %v985, %v1001
      %v1044 = vunpack.c.l.s4 1934713408
      %v1045 = vunpack.c.0.s8 %v1044
      %v1046 = vlaneseq
      %v1047 = vshrl.u32 %v1046, 7
      %v1048 = vsub.s32 %v1045, %v1047
      %v1049 = vrot.slane %v1041, %v1048
      %v1051 = vunpack.c.l.s4 1934713408
      %v1052 = vunpack.c.0.s8 %v1051
      %v1053 = vlaneseq
      %v1054 = vshrl.u32 %v1053, 7
      %v1055 = vsub.s32 %v1052, %v1054
      %v1056 = vrot.slane %v1042, %v1055
      %v1057 = vcombine.low %v992, %v1008
      %v1058 = vcombine.high %v992, %v1008
      %v1060 = vunpack.c.l.s4 1934713408
      %v1061 = vunpack.c.0.s8 %v1060
      %v1062 = vlaneseq
      %v1063 = vshrl.u32 %v1062, 7
      %v1064 = vsub.s32 %v1061, %v1063
      %v1065 = vrot.slane %v1057, %v1064
      %v1067 = vunpack.c.l.s4 1934713408
      %v1068 = vunpack.c.0.s8 %v1067
      %v1069 = vlaneseq
      %v1070 = vshrl.u32 %v1069, 7
      %v1071 = vsub.s32 %v1068, %v1070
      %v1072 = vrot.slane %v1058, %v1071
      %v1073 = vcombine.low %v1017, %v1033
      %v1074 = vcombine.high %v1017, %v1033
      %v1076 = vunpack.c.l.s4 1934713408
      %v1077 = vunpack.c.0.s8 %v1076
      %v1078 = vlaneseq
      %v1079 = vshrl.u32 %v1078, 7
      %v1080 = vsub.s32 %v1077, %v1079
      %v1081 = vrot.slane %v1073, %v1080
      %v1083 = vunpack.c.l.s4 1934713408
      %v1084 = vunpack.c.0.s8 %v1083
      %v1085 = vlaneseq
      %v1086 = vshrl.u32 %v1085, 7
      %v1087 = vsub.s32 %v1084, %v1086
      %v1088 = vrot.slane %v1074, %v1087
      %v1089 = vcombine.low %v1024, %v1040
      %v1090 = vcombine.high %v1024, %v1040
      %v1092 = vunpack.c.l.s4 1934713408
      %v1093 = vunpack.c.0.s8 %v1092
      %v1094 = vlaneseq
      %v1095 = vshrl.u32 %v1094, 7
      %v1096 = vsub.s32 %v1093, %v1095
      %v1097 = vrot.slane %v1089, %v1096
      %v1099 = vunpack.c.l.s4 1934713408
      %v1100 = vunpack.c.0.s8 %v1099
      %v1101 = vlaneseq
      %v1102 = vshrl.u32 %v1101, 7
      %v1103 = vsub.s32 %v1100, %v1102
      %v1104 = vrot.slane %v1090, %v1103
      %v1105 = vcombine.low %v1049, %v1081
      %v1106 = vcombine.high %v1049, %v1081
      %v1107 = vcombine.low %v1056, %v1088
      %v1108 = vcombine.high %v1056, %v1088
      %v1109 = vcombine.low %v1065, %v1097
      %v1110 = vcombine.high %v1065, %v1097
      %v1111 = vcombine.low %v1072, %v1104
      %v1112 = vcombine.high %v1072, %v1104
      %v1113 = vcombine.low %v284, %v290
      %v1114 = vcombine.high %v284, %v290
      %v1116 = vunpack.c.l.s4 1983009808
      %v1117 = vunpack.c.0.s8 %v1116
      %v1118 = vlaneseq
      %v1119 = vshrl.u32 %v1118, 7
      %v1120 = vsub.s32 %v1117, %v1119
      %v1121 = vrot.slane %v1113, %v1120
      %v1123 = vunpack.c.l.s4 1983009808
      %v1124 = vunpack.c.0.s8 %v1123
      %v1125 = vlaneseq
      %v1126 = vshrl.u32 %v1125, 7
      %v1127 = vsub.s32 %v1124, %v1126
      %v1128 = vrot.slane %v1114, %v1127
      %v1129 = vcombine.low %v287, %v293
      %v1130 = vcombine.high %v287, %v293
      %v1132 = vunpack.c.l.s4 1983009808
      %v1133 = vunpack.c.0.s8 %v1132
      %v1134 = vlaneseq
      %v1135 = vshrl.u32 %v1134, 7
      %v1136 = vsub.s32 %v1133, %v1135
      %v1137 = vrot.slane %v1129, %v1136
      %v1139 = vunpack.c.l.s4 1983009808
      %v1140 = vunpack.c.0.s8 %v1139
      %v1141 = vlaneseq
      %v1142 = vshrl.u32 %v1141, 7
      %v1143 = vsub.s32 %v1140, %v1142
      %v1144 = vrot.slane %v1130, %v1143
      %v1145 = vcombine.low %v296, %v302
      %v1146 = vcombine.high %v296, %v302
      %v1148 = vunpack.c.l.s4 1983009808
      %v1149 = vunpack.c.0.s8 %v1148
      %v1150 = vlaneseq
      %v1151 = vshrl.u32 %v1150, 7
      %v1152 = vsub.s32 %v1149, %v1151
      %v1153 = vrot.slane %v1145, %v1152
      %v1155 = vunpack.c.l.s4 1983009808
      %v1156 = vunpack.c.0.s8 %v1155
      %v1157 = vlaneseq
      %v1158 = vshrl.u32 %v1157, 7
      %v1159 = vsub.s32 %v1156, %v1158
      %v1160 = vrot.slane %v1146, %v1159
      %v1161 = vcombine.low %v299, %v305
      %v1162 = vcombine.high %v299, %v305
      %v1164 = vunpack.c.l.s4 1983009808
      %v1165 = vunpack.c.0.s8 %v1164
      %v1166 = vlaneseq
      %v1167 = vshrl.u32 %v1166, 7
      %v1168 = vsub.s32 %v1165, %v1167
      %v1169 = vrot.slane %v1161, %v1168
      %v1171 = vunpack.c.l.s4 1983009808
      %v1172 = vunpack.c.0.s8 %v1171
      %v1173 = vlaneseq
      %v1174 = vshrl.u32 %v1173, 7
      %v1175 = vsub.s32 %v1172, %v1174
      %v1176 = vrot.slane %v1162, %v1175
      %v1177 = vcombine.low %v1121, %v1137
      %v1178 = vcombine.high %v1121, %v1137
      %v1180 = vunpack.c.l.s4 1934713408
      %v1181 = vunpack.c.0.s8 %v1180
      %v1182 = vlaneseq
      %v1183 = vshrl.u32 %v1182, 7
      %v1184 = vsub.s32 %v1181, %v1183
      %v1185 = vrot.slane %v1177, %v1184
      %v1187 = vunpack.c.l.s4 1934713408
      %v1188 = vunpack.c.0.s8 %v1187
      %v1189 = vlaneseq
      %v1190 = vshrl.u32 %v1189, 7
      %v1191 = vsub.s32 %v1188, %v1190
      %v1192 = vrot.slane %v1178, %v1191
      %v1193 = vcombine.low %v1128, %v1144
      %v1194 = vcombine.high %v1128, %v1144
      %v1196 = vunpack.c.l.s4 1934713408
      %v1197 = vunpack.c.0.s8 %v1196
      %v1198 = vlaneseq
      %v1199 = vshrl.u32 %v1198, 7
      %v1200 = vsub.s32 %v1197, %v1199
      %v1201 = vrot.slane %v1193, %v1200
      %v1203 = vunpack.c.l.s4 1934713408
      %v1204 = vunpack.c.0.s8 %v1203
      %v1205 = vlaneseq
      %v1206 = vshrl.u32 %v1205, 7
      %v1207 = vsub.s32 %v1204, %v1206
      %v1208 = vrot.slane %v1194, %v1207
      %v1209 = vcombine.low %v1153, %v1169
      %v1210 = vcombine.high %v1153, %v1169
      %v1212 = vunpack.c.l.s4 1934713408
      %v1213 = vunpack.c.0.s8 %v1212
      %v1214 = vlaneseq
      %v1215 = vshrl.u32 %v1214, 7
      %v1216 = vsub.s32 %v1213, %v1215
      %v1217 = vrot.slane %v1209, %v1216
      %v1219 = vunpack.c.l.s4 1934713408
      %v1220 = vunpack.c.0.s8 %v1219
      %v1221 = vlaneseq
      %v1222 = vshrl.u32 %v1221, 7
      %v1223 = vsub.s32 %v1220, %v1222
      %v1224 = vrot.slane %v1210, %v1223
      %v1225 = vcombine.low %v1160, %v1176
      %v1226 = vcombine.high %v1160, %v1176
      %v1228 = vunpack.c.l.s4 1934713408
      %v1229 = vunpack.c.0.s8 %v1228
      %v1230 = vlaneseq
      %v1231 = vshrl.u32 %v1230, 7
      %v1232 = vsub.s32 %v1229, %v1231
      %v1233 = vrot.slane %v1225, %v1232
      %v1235 = vunpack.c.l.s4 1934713408
      %v1236 = vunpack.c.0.s8 %v1235
      %v1237 = vlaneseq
      %v1238 = vshrl.u32 %v1237, 7
      %v1239 = vsub.s32 %v1236, %v1238
      %v1240 = vrot.slane %v1226, %v1239
      %v1241 = vcombine.low %v1185, %v1217
      %v1242 = vcombine.high %v1185, %v1217
      %v1243 = vcombine.low %v1192, %v1224
      %v1244 = vcombine.high %v1192, %v1224
      %v1245 = vcombine.low %v1201, %v1233
      %v1246 = vcombine.high %v1201, %v1233
      %v1247 = vcombine.low %v1208, %v1240
      %v1248 = vcombine.high %v1208, %v1240
      %v1249 = vcombine.low %v308, %v314
      %v1250 = vcombine.high %v308, %v314
      %v1252 = vunpack.c.l.s4 1983009808
      %v1253 = vunpack.c.0.s8 %v1252
      %v1254 = vlaneseq
      %v1255 = vshrl.u32 %v1254, 7
      %v1256 = vsub.s32 %v1253, %v1255
      %v1257 = vrot.slane %v1249, %v1256
      %v1259 = vunpack.c.l.s4 1983009808
      %v1260 = vunpack.c.0.s8 %v1259
      %v1261 = vlaneseq
      %v1262 = vshrl.u32 %v1261, 7
      %v1263 = vsub.s32 %v1260, %v1262
      %v1264 = vrot.slane %v1250, %v1263
      %v1265 = vcombine.low %v311, %v317
      %v1266 = vcombine.high %v311, %v317
      %v1268 = vunpack.c.l.s4 1983009808
      %v1269 = vunpack.c.0.s8 %v1268
      %v1270 = vlaneseq
      %v1271 = vshrl.u32 %v1270, 7
      %v1272 = vsub.s32 %v1269, %v1271
      %v1273 = vrot.slane %v1265, %v1272
      %v1275 = vunpack.c.l.s4 1983009808
      %v1276 = vunpack.c.0.s8 %v1275
      %v1277 = vlaneseq
      %v1278 = vshrl.u32 %v1277, 7
      %v1279 = vsub.s32 %v1276, %v1278
      %v1280 = vrot.slane %v1266, %v1279
      %v1281 = vcombine.low %v320, %v326
      %v1282 = vcombine.high %v320, %v326
      %v1284 = vunpack.c.l.s4 1983009808
      %v1285 = vunpack.c.0.s8 %v1284
      %v1286 = vlaneseq
      %v1287 = vshrl.u32 %v1286, 7
      %v1288 = vsub.s32 %v1285, %v1287
      %v1289 = vrot.slane %v1281, %v1288
      %v1291 = vunpack.c.l.s4 1983009808
      %v1292 = vunpack.c.0.s8 %v1291
      %v1293 = vlaneseq
      %v1294 = vshrl.u32 %v1293, 7
      %v1295 = vsub.s32 %v1292, %v1294
      %v1296 = vrot.slane %v1282, %v1295
      %v1297 = vcombine.low %v323, %v329
      %v1298 = vcombine.high %v323, %v329
      %v1300 = vunpack.c.l.s4 1983009808
      %v1301 = vunpack.c.0.s8 %v1300
      %v1302 = vlaneseq
      %v1303 = vshrl.u32 %v1302, 7
      %v1304 = vsub.s32 %v1301, %v1303
      %v1305 = vrot.slane %v1297, %v1304
      %v1307 = vunpack.c.l.s4 1983009808
      %v1308 = vunpack.c.0.s8 %v1307
      %v1309 = vlaneseq
      %v1310 = vshrl.u32 %v1309, 7
      %v1311 = vsub.s32 %v1308, %v1310
      %v1312 = vrot.slane %v1298, %v1311
      %v1313 = vcombine.low %v1257, %v1273
      %v1314 = vcombine.high %v1257, %v1273
      %v1316 = vunpack.c.l.s4 1934713408
      %v1317 = vunpack.c.0.s8 %v1316
      %v1318 = vlaneseq
      %v1319 = vshrl.u32 %v1318, 7
      %v1320 = vsub.s32 %v1317, %v1319
      %v1321 = vrot.slane %v1313, %v1320
      %v1323 = vunpack.c.l.s4 1934713408
      %v1324 = vunpack.c.0.s8 %v1323
      %v1325 = vlaneseq
      %v1326 = vshrl.u32 %v1325, 7
      %v1327 = vsub.s32 %v1324, %v1326
      %v1328 = vrot.slane %v1314, %v1327
      %v1329 = vcombine.low %v1264, %v1280
      %v1330 = vcombine.high %v1264, %v1280
      %v1332 = vunpack.c.l.s4 1934713408
      %v1333 = vunpack.c.0.s8 %v1332
      %v1334 = vlaneseq
      %v1335 = vshrl.u32 %v1334, 7
      %v1336 = vsub.s32 %v1333, %v1335
      %v1337 = vrot.slane %v1329, %v1336
      %v1339 = vunpack.c.l.s4 1934713408
      %v1340 = vunpack.c.0.s8 %v1339
      %v1341 = vlaneseq
      %v1342 = vshrl.u32 %v1341, 7
      %v1343 = vsub.s32 %v1340, %v1342
      %v1344 = vrot.slane %v1330, %v1343
      %v1345 = vcombine.low %v1289, %v1305
      %v1346 = vcombine.high %v1289, %v1305
      %v1348 = vunpack.c.l.s4 1934713408
      %v1349 = vunpack.c.0.s8 %v1348
      %v1350 = vlaneseq
      %v1351 = vshrl.u32 %v1350, 7
      %v1352 = vsub.s32 %v1349, %v1351
      %v1353 = vrot.slane %v1345, %v1352
      %v1355 = vunpack.c.l.s4 1934713408
      %v1356 = vunpack.c.0.s8 %v1355
      %v1357 = vlaneseq
      %v1358 = vshrl.u32 %v1357, 7
      %v1359 = vsub.s32 %v1356, %v1358
      %v1360 = vrot.slane %v1346, %v1359
      %v1361 = vcombine.low %v1296, %v1312
      %v1362 = vcombine.high %v1296, %v1312
      %v1364 = vunpack.c.l.s4 1934713408
      %v1365 = vunpack.c.0.s8 %v1364
      %v1366 = vlaneseq
      %v1367 = vshrl.u32 %v1366, 7
      %v1368 = vsub.s32 %v1365, %v1367
      %v1369 = vrot.slane %v1361, %v1368
      %v1371 = vunpack.c.l.s4 1934713408
      %v1372 = vunpack.c.0.s8 %v1371
      %v1373 = vlaneseq
      %v1374 = vshrl.u32 %v1373, 7
      %v1375 = vsub.s32 %v1372, %v1374
      %v1376 = vrot.slane %v1362, %v1375
      %v1377 = vcombine.low %v1321, %v1353
      %v1378 = vcombine.high %v1321, %v1353
      %v1379 = vcombine.low %v1328, %v1360
      %v1380 = vcombine.high %v1328, %v1360
      %v1381 = vcombine.low %v1337, %v1369
      %v1382 = vcombine.high %v1337, %v1369
      %v1383 = vcombine.low %v1344, %v1376
      %v1384 = vcombine.high %v1344, %v1376
      %v1385 = vcombine.low %v332, %v338
      %v1386 = vcombine.high %v332, %v338
      %v1388 = vunpack.c.l.s4 1983009808
      %v1389 = vunpack.c.0.s8 %v1388
      %v1390 = vlaneseq
      %v1391 = vshrl.u32 %v1390, 7
      %v1392 = vsub.s32 %v1389, %v1391
      %v1393 = vrot.slane %v1385, %v1392
      %v1395 = vunpack.c.l.s4 1983009808
      %v1396 = vunpack.c.0.s8 %v1395
      %v1397 = vlaneseq
      %v1398 = vshrl.u32 %v1397, 7
      %v1399 = vsub.s32 %v1396, %v1398
      %v1400 = vrot.slane %v1386, %v1399
      %v1401 = vcombine.low %v335, %v341
      %v1402 = vcombine.high %v335, %v341
      %v1404 = vunpack.c.l.s4 1983009808
      %v1405 = vunpack.c.0.s8 %v1404
      %v1406 = vlaneseq
      %v1407 = vshrl.u32 %v1406, 7
      %v1408 = vsub.s32 %v1405, %v1407
      %v1409 = vrot.slane %v1401, %v1408
      %v1411 = vunpack.c.l.s4 1983009808
      %v1412 = vunpack.c.0.s8 %v1411
      %v1413 = vlaneseq
      %v1414 = vshrl.u32 %v1413, 7
      %v1415 = vsub.s32 %v1412, %v1414
      %v1416 = vrot.slane %v1402, %v1415
      %v1417 = vcombine.low %v344, %v350
      %v1418 = vcombine.high %v344, %v350
      %v1420 = vunpack.c.l.s4 1983009808
      %v1421 = vunpack.c.0.s8 %v1420
      %v1422 = vlaneseq
      %v1423 = vshrl.u32 %v1422, 7
      %v1424 = vsub.s32 %v1421, %v1423
      %v1425 = vrot.slane %v1417, %v1424
      %v1427 = vunpack.c.l.s4 1983009808
      %v1428 = vunpack.c.0.s8 %v1427
      %v1429 = vlaneseq
      %v1430 = vshrl.u32 %v1429, 7
      %v1431 = vsub.s32 %v1428, %v1430
      %v1432 = vrot.slane %v1418, %v1431
      %v1433 = vcombine.low %v347, %v353
      %v1434 = vcombine.high %v347, %v353
      %v1436 = vunpack.c.l.s4 1983009808
      %v1437 = vunpack.c.0.s8 %v1436
      %v1438 = vlaneseq
      %v1439 = vshrl.u32 %v1438, 7
      %v1440 = vsub.s32 %v1437, %v1439
      %v1441 = vrot.slane %v1433, %v1440
      %v1443 = vunpack.c.l.s4 1983009808
      %v1444 = vunpack.c.0.s8 %v1443
      %v1445 = vlaneseq
      %v1446 = vshrl.u32 %v1445, 7
      %v1447 = vsub.s32 %v1444, %v1446
      %v1448 = vrot.slane %v1434, %v1447
      %v1449 = vcombine.low %v1393, %v1409
      %v1450 = vcombine.high %v1393, %v1409
      %v1452 = vunpack.c.l.s4 1934713408
      %v1453 = vunpack.c.0.s8 %v1452
      %v1454 = vlaneseq
      %v1455 = vshrl.u32 %v1454, 7
      %v1456 = vsub.s32 %v1453, %v1455
      %v1457 = vrot.slane %v1449, %v1456
      %v1459 = vunpack.c.l.s4 1934713408
      %v1460 = vunpack.c.0.s8 %v1459
      %v1461 = vlaneseq
      %v1462 = vshrl.u32 %v1461, 7
      %v1463 = vsub.s32 %v1460, %v1462
      %v1464 = vrot.slane %v1450, %v1463
      %v1465 = vcombine.low %v1400, %v1416
      %v1466 = vcombine.high %v1400, %v1416
      %v1468 = vunpack.c.l.s4 1934713408
      %v1469 = vunpack.c.0.s8 %v1468
      %v1470 = vlaneseq
      %v1471 = vshrl.u32 %v1470, 7
      %v1472 = vsub.s32 %v1469, %v1471
      %v1473 = vrot.slane %v1465, %v1472
      %v1475 = vunpack.c.l.s4 1934713408
      %v1476 = vunpack.c.0.s8 %v1475
      %v1477 = vlaneseq
      %v1478 = vshrl.u32 %v1477, 7
      %v1479 = vsub.s32 %v1476, %v1478
      %v1480 = vrot.slane %v1466, %v1479
      %v1481 = vcombine.low %v1425, %v1441
      %v1482 = vcombine.high %v1425, %v1441
      %v1484 = vunpack.c.l.s4 1934713408
      %v1485 = vunpack.c.0.s8 %v1484
      %v1486 = vlaneseq
      %v1487 = vshrl.u32 %v1486, 7
      %v1488 = vsub.s32 %v1485, %v1487
      %v1489 = vrot.slane %v1481, %v1488
      %v1491 = vunpack.c.l.s4 1934713408
      %v1492 = vunpack.c.0.s8 %v1491
      %v1493 = vlaneseq
      %v1494 = vshrl.u32 %v1493, 7
      %v1495 = vsub.s32 %v1492, %v1494
      %v1496 = vrot.slane %v1482, %v1495
      %v1497 = vcombine.low %v1432, %v1448
      %v1498 = vcombine.high %v1432, %v1448
      %v1500 = vunpack.c.l.s4 1934713408
      %v1501 = vunpack.c.0.s8 %v1500
      %v1502 = vlaneseq
      %v1503 = vshrl.u32 %v1502, 7
      %v1504 = vsub.s32 %v1501, %v1503
      %v1505 = vrot.slane %v1497, %v1504
      %v1507 = vunpack.c.l.s4 1934713408
      %v1508 = vunpack.c.0.s8 %v1507
      %v1509 = vlaneseq
      %v1510 = vshrl.u32 %v1509, 7
      %v1511 = vsub.s32 %v1508, %v1510
      %v1512 = vrot.slane %v1498, %v1511
      %v1513 = vcombine.low %v1457, %v1489
      %v1514 = vcombine.high %v1457, %v1489
      %v1515 = vcombine.low %v1464, %v1496
      %v1516 = vcombine.high %v1464, %v1496
      %v1517 = vcombine.low %v1473, %v1505
      %v1518 = vcombine.high %v1473, %v1505
      %v1519 = vcombine.low %v1480, %v1512
      %v1520 = vcombine.high %v1480, %v1512
      %v1521 = vcombine.low %v356, %v362
      %v1522 = vcombine.high %v356, %v362
      %v1524 = vunpack.c.l.s4 1983009808
      %v1525 = vunpack.c.0.s8 %v1524
      %v1526 = vlaneseq
      %v1527 = vshrl.u32 %v1526, 7
      %v1528 = vsub.s32 %v1525, %v1527
      %v1529 = vrot.slane %v1521, %v1528
      %v1531 = vunpack.c.l.s4 1983009808
      %v1532 = vunpack.c.0.s8 %v1531
      %v1533 = vlaneseq
      %v1534 = vshrl.u32 %v1533, 7
      %v1535 = vsub.s32 %v1532, %v1534
      %v1536 = vrot.slane %v1522, %v1535
      %v1537 = vcombine.low %v359, %v365
      %v1538 = vcombine.high %v359, %v365
      %v1540 = vunpack.c.l.s4 1983009808
      %v1541 = vunpack.c.0.s8 %v1540
      %v1542 = vlaneseq
      %v1543 = vshrl.u32 %v1542, 7
      %v1544 = vsub.s32 %v1541, %v1543
      %v1545 = vrot.slane %v1537, %v1544
      %v1547 = vunpack.c.l.s4 1983009808
      %v1548 = vunpack.c.0.s8 %v1547
      %v1549 = vlaneseq
      %v1550 = vshrl.u32 %v1549, 7
      %v1551 = vsub.s32 %v1548, %v1550
      %v1552 = vrot.slane %v1538, %v1551
      %v1553 = vcombine.low %v368, %v374
      %v1554 = vcombine.high %v368, %v374
      %v1556 = vunpack.c.l.s4 1983009808
      %v1557 = vunpack.c.0.s8 %v1556
      %v1558 = vlaneseq
      %v1559 = vshrl.u32 %v1558, 7
      %v1560 = vsub.s32 %v1557, %v1559
      %v1561 = vrot.slane %v1553, %v1560
      %v1563 = vunpack.c.l.s4 1983009808
      %v1564 = vunpack.c.0.s8 %v1563
      %v1565 = vlaneseq
      %v1566 = vshrl.u32 %v1565, 7
      %v1567 = vsub.s32 %v1564, %v1566
      %v1568 = vrot.slane %v1554, %v1567
      %v1569 = vcombine.low %v371, %v377
      %v1570 = vcombine.high %v371, %v377
      %v1572 = vunpack.c.l.s4 1983009808
      %v1573 = vunpack.c.0.s8 %v1572
      %v1574 = vlaneseq
      %v1575 = vshrl.u32 %v1574, 7
      %v1576 = vsub.s32 %v1573, %v1575
      %v1577 = vrot.slane %v1569, %v1576
      %v1579 = vunpack.c.l.s4 1983009808
      %v1580 = vunpack.c.0.s8 %v1579
      %v1581 = vlaneseq
      %v1582 = vshrl.u32 %v1581, 7
      %v1583 = vsub.s32 %v1580, %v1582
      %v1584 = vrot.slane %v1570, %v1583
      %v1585 = vcombine.low %v1529, %v1545
      %v1586 = vcombine.high %v1529, %v1545
      %v1588 = vunpack.c.l.s4 1934713408
      %v1589 = vunpack.c.0.s8 %v1588
      %v1590 = vlaneseq
      %v1591 = vshrl.u32 %v1590, 7
      %v1592 = vsub.s32 %v1589, %v1591
      %v1593 = vrot.slane %v1585, %v1592
      %v1595 = vunpack.c.l.s4 1934713408
      %v1596 = vunpack.c.0.s8 %v1595
      %v1597 = vlaneseq
      %v1598 = vshrl.u32 %v1597, 7
      %v1599 = vsub.s32 %v1596, %v1598
      %v1600 = vrot.slane %v1586, %v1599
      %v1601 = vcombine.low %v1536, %v1552
      %v1602 = vcombine.high %v1536, %v1552
      %v1604 = vunpack.c.l.s4 1934713408
      %v1605 = vunpack.c.0.s8 %v1604
      %v1606 = vlaneseq
      %v1607 = vshrl.u32 %v1606, 7
      %v1608 = vsub.s32 %v1605, %v1607
      %v1609 = vrot.slane %v1601, %v1608
      %v1611 = vunpack.c.l.s4 1934713408
      %v1612 = vunpack.c.0.s8 %v1611
      %v1613 = vlaneseq
      %v1614 = vshrl.u32 %v1613, 7
      %v1615 = vsub.s32 %v1612, %v1614
      %v1616 = vrot.slane %v1602, %v1615
      %v1617 = vcombine.low %v1561, %v1577
      %v1618 = vcombine.high %v1561, %v1577
      %v1620 = vunpack.c.l.s4 1934713408
      %v1621 = vunpack.c.0.s8 %v1620
      %v1622 = vlaneseq
      %v1623 = vshrl.u32 %v1622, 7
      %v1624 = vsub.s32 %v1621, %v1623
      %v1625 = vrot.slane %v1617, %v1624
      %v1627 = vunpack.c.l.s4 1934713408
      %v1628 = vunpack.c.0.s8 %v1627
      %v1629 = vlaneseq
      %v1630 = vshrl.u32 %v1629, 7
      %v1631 = vsub.s32 %v1628, %v1630
      %v1632 = vrot.slane %v1618, %v1631
      %v1633 = vcombine.low %v1568, %v1584
      %v1634 = vcombine.high %v1568, %v1584
      %v1636 = vunpack.c.l.s4 1934713408
      %v1637 = vunpack.c.0.s8 %v1636
      %v1638 = vlaneseq
      %v1639 = vshrl.u32 %v1638, 7
      %v1640 = vsub.s32 %v1637, %v1639
      %v1641 = vrot.slane %v1633, %v1640
      %v1643 = vunpack.c.l.s4 1934713408
      %v1644 = vunpack.c.0.s8 %v1643
      %v1645 = vlaneseq
      %v1646 = vshrl.u32 %v1645, 7
      %v1647 = vsub.s32 %v1644, %v1646
      %v1648 = vrot.slane %v1634, %v1647
      %v1649 = vcombine.low %v1593, %v1625
      %v1650 = vcombine.high %v1593, %v1625
      %v1651 = vcombine.low %v1600, %v1632
      %v1652 = vcombine.high %v1600, %v1632
      %v1653 = vcombine.low %v1609, %v1641
      %v1654 = vcombine.high %v1609, %v1641
      %v1655 = vcombine.low %v1616, %v1648
      %v1656 = vcombine.high %v1616, %v1648
      %v1657 = vcombine.low %v188, %v384
      %v1658 = vcombine.high %v188, %v384
      %v1660 = vunpack.c.l.s4 1983009808
      %v1661 = vunpack.c.0.s8 %v1660
      %v1662 = vlaneseq
      %v1663 = vshrl.u32 %v1662, 7
      %v1664 = vsub.s32 %v1661, %v1663
      %v1665 = vrot.slane %v1657, %v1664
      %v1667 = vunpack.c.l.s4 1983009808
      %v1668 = vunpack.c.0.s8 %v1667
      %v1669 = vlaneseq
      %v1670 = vshrl.u32 %v1669, 7
      %v1671 = vsub.s32 %v1668, %v1670
      %v1672 = vrot.slane %v1658, %v1671
      %v1673 = vcombine.low %v381, %v387
      %v1674 = vcombine.high %v381, %v387
      %v1676 = vunpack.c.l.s4 1983009808
      %v1677 = vunpack.c.0.s8 %v1676
      %v1678 = vlaneseq
      %v1679 = vshrl.u32 %v1678, 7
      %v1680 = vsub.s32 %v1677, %v1679
      %v1681 = vrot.slane %v1673, %v1680
      %v1683 = vunpack.c.l.s4 1983009808
      %v1684 = vunpack.c.0.s8 %v1683
      %v1685 = vlaneseq
      %v1686 = vshrl.u32 %v1685, 7
      %v1687 = vsub.s32 %v1684, %v1686
      %v1688 = vrot.slane %v1674, %v1687
      %v1689 = vcombine.low %v390, %v396
      %v1690 = vcombine.high %v390, %v396
      %v1692 = vunpack.c.l.s4 1983009808
      %v1693 = vunpack.c.0.s8 %v1692
      %v1694 = vlaneseq
      %v1695 = vshrl.u32 %v1694, 7
      %v1696 = vsub.s32 %v1693, %v1695
      %v1697 = vrot.slane %v1689, %v1696
      %v1699 = vunpack.c.l.s4 1983009808
      %v1700 = vunpack.c.0.s8 %v1699
      %v1701 = vlaneseq
      %v1702 = vshrl.u32 %v1701, 7
      %v1703 = vsub.s32 %v1700, %v1702
      %v1704 = vrot.slane %v1690, %v1703
      %v1705 = vcombine.low %v393, %v399
      %v1706 = vcombine.high %v393, %v399
      %v1708 = vunpack.c.l.s4 1983009808
      %v1709 = vunpack.c.0.s8 %v1708
      %v1710 = vlaneseq
      %v1711 = vshrl.u32 %v1710, 7
      %v1712 = vsub.s32 %v1709, %v1711
      %v1713 = vrot.slane %v1705, %v1712
      %v1715 = vunpack.c.l.s4 1983009808
      %v1716 = vunpack.c.0.s8 %v1715
      %v1717 = vlaneseq
      %v1718 = vshrl.u32 %v1717, 7
      %v1719 = vsub.s32 %v1716, %v1718
      %v1720 = vrot.slane %v1706, %v1719
      %v1721 = vcombine.low %v1665, %v1681
      %v1722 = vcombine.high %v1665, %v1681
      %v1724 = vunpack.c.l.s4 1934713408
      %v1725 = vunpack.c.0.s8 %v1724
      %v1726 = vlaneseq
      %v1727 = vshrl.u32 %v1726, 7
      %v1728 = vsub.s32 %v1725, %v1727
      %v1729 = vrot.slane %v1721, %v1728
      %v1731 = vunpack.c.l.s4 1934713408
      %v1732 = vunpack.c.0.s8 %v1731
      %v1733 = vlaneseq
      %v1734 = vshrl.u32 %v1733, 7
      %v1735 = vsub.s32 %v1732, %v1734
      %v1736 = vrot.slane %v1722, %v1735
      %v1737 = vcombine.low %v1672, %v1688
      %v1738 = vcombine.high %v1672, %v1688
      %v1740 = vunpack.c.l.s4 1934713408
      %v1741 = vunpack.c.0.s8 %v1740
      %v1742 = vlaneseq
      %v1743 = vshrl.u32 %v1742, 7
      %v1744 = vsub.s32 %v1741, %v1743
      %v1745 = vrot.slane %v1737, %v1744
      %v1747 = vunpack.c.l.s4 1934713408
      %v1748 = vunpack.c.0.s8 %v1747
      %v1749 = vlaneseq
      %v1750 = vshrl.u32 %v1749, 7
      %v1751 = vsub.s32 %v1748, %v1750
      %v1752 = vrot.slane %v1738, %v1751
      %v1753 = vcombine.low %v1697, %v1713
      %v1754 = vcombine.high %v1697, %v1713
      %v1756 = vunpack.c.l.s4 1934713408
      %v1757 = vunpack.c.0.s8 %v1756
      %v1758 = vlaneseq
      %v1759 = vshrl.u32 %v1758, 7
      %v1760 = vsub.s32 %v1757, %v1759
      %v1761 = vrot.slane %v1753, %v1760
      %v1763 = vunpack.c.l.s4 1934713408
      %v1764 = vunpack.c.0.s8 %v1763
      %v1765 = vlaneseq
      %v1766 = vshrl.u32 %v1765, 7
      %v1767 = vsub.s32 %v1764, %v1766
      %v1768 = vrot.slane %v1754, %v1767
      %v1769 = vcombine.low %v1704, %v1720
      %v1770 = vcombine.high %v1704, %v1720
      %v1772 = vunpack.c.l.s4 1934713408
      %v1773 = vunpack.c.0.s8 %v1772
      %v1774 = vlaneseq
      %v1775 = vshrl.u32 %v1774, 7
      %v1776 = vsub.s32 %v1773, %v1775
      %v1777 = vrot.slane %v1769, %v1776
      %v1779 = vunpack.c.l.s4 1934713408
      %v1780 = vunpack.c.0.s8 %v1779
      %v1781 = vlaneseq
      %v1782 = vshrl.u32 %v1781, 7
      %v1783 = vsub.s32 %v1780, %v1782
      %v1784 = vrot.slane %v1770, %v1783
      %v1785 = vcombine.low %v1729, %v1761
      %v1786 = vcombine.high %v1729, %v1761
      %v1787 = vcombine.low %v1736, %v1768
      %v1788 = vcombine.high %v1736, %v1768
      %v1789 = vcombine.low %v1745, %v1777
      %v1790 = vcombine.high %v1745, %v1777
      %v1791 = vcombine.low %v1752, %v1784
      %v1792 = vcombine.high %v1752, %v1784
      %v1793 = vcombine.low %v402, %v408
      %v1794 = vcombine.high %v402, %v408
      %v1796 = vunpack.c.l.s4 1983009808
      %v1797 = vunpack.c.0.s8 %v1796
      %v1798 = vlaneseq
      %v1799 = vshrl.u32 %v1798, 7
      %v1800 = vsub.s32 %v1797, %v1799
      %v1801 = vrot.slane %v1793, %v1800
      %v1803 = vunpack.c.l.s4 1983009808
      %v1804 = vunpack.c.0.s8 %v1803
      %v1805 = vlaneseq
      %v1806 = vshrl.u32 %v1805, 7
      %v1807 = vsub.s32 %v1804, %v1806
      %v1808 = vrot.slane %v1794, %v1807
      %v1809 = vcombine.low %v405, %v411
      %v1810 = vcombine.high %v405, %v411
      %v1812 = vunpack.c.l.s4 1983009808
      %v1813 = vunpack.c.0.s8 %v1812
      %v1814 = vlaneseq
      %v1815 = vshrl.u32 %v1814, 7
      %v1816 = vsub.s32 %v1813, %v1815
      %v1817 = vrot.slane %v1809, %v1816
      %v1819 = vunpack.c.l.s4 1983009808
      %v1820 = vunpack.c.0.s8 %v1819
      %v1821 = vlaneseq
      %v1822 = vshrl.u32 %v1821, 7
      %v1823 = vsub.s32 %v1820, %v1822
      %v1824 = vrot.slane %v1810, %v1823
      %v1825 = vcombine.low %v414, %v420
      %v1826 = vcombine.high %v414, %v420
      %v1828 = vunpack.c.l.s4 1983009808
      %v1829 = vunpack.c.0.s8 %v1828
      %v1830 = vlaneseq
      %v1831 = vshrl.u32 %v1830, 7
      %v1832 = vsub.s32 %v1829, %v1831
      %v1833 = vrot.slane %v1825, %v1832
      %v1835 = vunpack.c.l.s4 1983009808
      %v1836 = vunpack.c.0.s8 %v1835
      %v1837 = vlaneseq
      %v1838 = vshrl.u32 %v1837, 7
      %v1839 = vsub.s32 %v1836, %v1838
      %v1840 = vrot.slane %v1826, %v1839
      %v1841 = vcombine.low %v417, %v423
      %v1842 = vcombine.high %v417, %v423
      %v1844 = vunpack.c.l.s4 1983009808
      %v1845 = vunpack.c.0.s8 %v1844
      %v1846 = vlaneseq
      %v1847 = vshrl.u32 %v1846, 7
      %v1848 = vsub.s32 %v1845, %v1847
      %v1849 = vrot.slane %v1841, %v1848
      %v1851 = vunpack.c.l.s4 1983009808
      %v1852 = vunpack.c.0.s8 %v1851
      %v1853 = vlaneseq
      %v1854 = vshrl.u32 %v1853, 7
      %v1855 = vsub.s32 %v1852, %v1854
      %v1856 = vrot.slane %v1842, %v1855
      %v1857 = vcombine.low %v1801, %v1817
      %v1858 = vcombine.high %v1801, %v1817
      %v1860 = vunpack.c.l.s4 1934713408
      %v1861 = vunpack.c.0.s8 %v1860
      %v1862 = vlaneseq
      %v1863 = vshrl.u32 %v1862, 7
      %v1864 = vsub.s32 %v1861, %v1863
      %v1865 = vrot.slane %v1857, %v1864
      %v1867 = vunpack.c.l.s4 1934713408
      %v1868 = vunpack.c.0.s8 %v1867
      %v1869 = vlaneseq
      %v1870 = vshrl.u32 %v1869, 7
      %v1871 = vsub.s32 %v1868, %v1870
      %v1872 = vrot.slane %v1858, %v1871
      %v1873 = vcombine.low %v1808, %v1824
      %v1874 = vcombine.high %v1808, %v1824
      %v1876 = vunpack.c.l.s4 1934713408
      %v1877 = vunpack.c.0.s8 %v1876
      %v1878 = vlaneseq
      %v1879 = vshrl.u32 %v1878, 7
      %v1880 = vsub.s32 %v1877, %v1879
      %v1881 = vrot.slane %v1873, %v1880
      %v1883 = vunpack.c.l.s4 1934713408
      %v1884 = vunpack.c.0.s8 %v1883
      %v1885 = vlaneseq
      %v1886 = vshrl.u32 %v1885, 7
      %v1887 = vsub.s32 %v1884, %v1886
      %v1888 = vrot.slane %v1874, %v1887
      %v1889 = vcombine.low %v1833, %v1849
      %v1890 = vcombine.high %v1833, %v1849
      %v1892 = vunpack.c.l.s4 1934713408
      %v1893 = vunpack.c.0.s8 %v1892
      %v1894 = vlaneseq
      %v1895 = vshrl.u32 %v1894, 7
      %v1896 = vsub.s32 %v1893, %v1895
      %v1897 = vrot.slane %v1889, %v1896
      %v1899 = vunpack.c.l.s4 1934713408
      %v1900 = vunpack.c.0.s8 %v1899
      %v1901 = vlaneseq
      %v1902 = vshrl.u32 %v1901, 7
      %v1903 = vsub.s32 %v1900, %v1902
      %v1904 = vrot.slane %v1890, %v1903
      %v1905 = vcombine.low %v1840, %v1856
      %v1906 = vcombine.high %v1840, %v1856
      %v1908 = vunpack.c.l.s4 1934713408
      %v1909 = vunpack.c.0.s8 %v1908
      %v1910 = vlaneseq
      %v1911 = vshrl.u32 %v1910, 7
      %v1912 = vsub.s32 %v1909, %v1911
      %v1913 = vrot.slane %v1905, %v1912
      %v1915 = vunpack.c.l.s4 1934713408
      %v1916 = vunpack.c.0.s8 %v1915
      %v1917 = vlaneseq
      %v1918 = vshrl.u32 %v1917, 7
      %v1919 = vsub.s32 %v1916, %v1918
      %v1920 = vrot.slane %v1906, %v1919
      %v1921 = vcombine.low %v1865, %v1897
      %v1922 = vcombine.high %v1865, %v1897
      %v1923 = vcombine.low %v1872, %v1904
      %v1924 = vcombine.high %v1872, %v1904
      %v1925 = vcombine.low %v1881, %v1913
      %v1926 = vcombine.high %v1881, %v1913
      %v1927 = vcombine.low %v1888, %v1920
      %v1928 = vcombine.high %v1888, %v1920
      %v1929 = vcombine.low %v426, %v432
      %v1930 = vcombine.high %v426, %v432
      %v1932 = vunpack.c.l.s4 1983009808
      %v1933 = vunpack.c.0.s8 %v1932
      %v1934 = vlaneseq
      %v1935 = vshrl.u32 %v1934, 7
      %v1936 = vsub.s32 %v1933, %v1935
      %v1937 = vrot.slane %v1929, %v1936
      %v1939 = vunpack.c.l.s4 1983009808
      %v1940 = vunpack.c.0.s8 %v1939
      %v1941 = vlaneseq
      %v1942 = vshrl.u32 %v1941, 7
      %v1943 = vsub.s32 %v1940, %v1942
      %v1944 = vrot.slane %v1930, %v1943
      %v1945 = vcombine.low %v429, %v435
      %v1946 = vcombine.high %v429, %v435
      %v1948 = vunpack.c.l.s4 1983009808
      %v1949 = vunpack.c.0.s8 %v1948
      %v1950 = vlaneseq
      %v1951 = vshrl.u32 %v1950, 7
      %v1952 = vsub.s32 %v1949, %v1951
      %v1953 = vrot.slane %v1945, %v1952
      %v1955 = vunpack.c.l.s4 1983009808
      %v1956 = vunpack.c.0.s8 %v1955
      %v1957 = vlaneseq
      %v1958 = vshrl.u32 %v1957, 7
      %v1959 = vsub.s32 %v1956, %v1958
      %v1960 = vrot.slane %v1946, %v1959
      %v1961 = vcombine.low %v438, %v444
      %v1962 = vcombine.high %v438, %v444
      %v1964 = vunpack.c.l.s4 1983009808
      %v1965 = vunpack.c.0.s8 %v1964
      %v1966 = vlaneseq
      %v1967 = vshrl.u32 %v1966, 7
      %v1968 = vsub.s32 %v1965, %v1967
      %v1969 = vrot.slane %v1961, %v1968
      %v1971 = vunpack.c.l.s4 1983009808
      %v1972 = vunpack.c.0.s8 %v1971
      %v1973 = vlaneseq
      %v1974 = vshrl.u32 %v1973, 7
      %v1975 = vsub.s32 %v1972, %v1974
      %v1976 = vrot.slane %v1962, %v1975
      %v1977 = vcombine.low %v441, %v447
      %v1978 = vcombine.high %v441, %v447
      %v1980 = vunpack.c.l.s4 1983009808
      %v1981 = vunpack.c.0.s8 %v1980
      %v1982 = vlaneseq
      %v1983 = vshrl.u32 %v1982, 7
      %v1984 = vsub.s32 %v1981, %v1983
      %v1985 = vrot.slane %v1977, %v1984
      %v1987 = vunpack.c.l.s4 1983009808
      %v1988 = vunpack.c.0.s8 %v1987
      %v1989 = vlaneseq
      %v1990 = vshrl.u32 %v1989, 7
      %v1991 = vsub.s32 %v1988, %v1990
      %v1992 = vrot.slane %v1978, %v1991
      %v1993 = vcombine.low %v1937, %v1953
      %v1994 = vcombine.high %v1937, %v1953
      %v1996 = vunpack.c.l.s4 1934713408
      %v1997 = vunpack.c.0.s8 %v1996
      %v1998 = vlaneseq
      %v1999 = vshrl.u32 %v1998, 7
      %v2000 = vsub.s32 %v1997, %v1999
      %v2001 = vrot.slane %v1993, %v2000
      %v2003 = vunpack.c.l.s4 1934713408
      %v2004 = vunpack.c.0.s8 %v2003
      %v2005 = vlaneseq
      %v2006 = vshrl.u32 %v2005, 7
      %v2007 = vsub.s32 %v2004, %v2006
      %v2008 = vrot.slane %v1994, %v2007
      %v2009 = vcombine.low %v1944, %v1960
      %v2010 = vcombine.high %v1944, %v1960
      %v2012 = vunpack.c.l.s4 1934713408
      %v2013 = vunpack.c.0.s8 %v2012
      %v2014 = vlaneseq
      %v2015 = vshrl.u32 %v2014, 7
      %v2016 = vsub.s32 %v2013, %v2015
      %v2017 = vrot.slane %v2009, %v2016
      %v2019 = vunpack.c.l.s4 1934713408
      %v2020 = vunpack.c.0.s8 %v2019
      %v2021 = vlaneseq
      %v2022 = vshrl.u32 %v2021, 7
      %v2023 = vsub.s32 %v2020, %v2022
      %v2024 = vrot.slane %v2010, %v2023
      %v2025 = vcombine.low %v1969, %v1985
      %v2026 = vcombine.high %v1969, %v1985
      %v2028 = vunpack.c.l.s4 1934713408
      %v2029 = vunpack.c.0.s8 %v2028
      %v2030 = vlaneseq
      %v2031 = vshrl.u32 %v2030, 7
      %v2032 = vsub.s32 %v2029, %v2031
      %v2033 = vrot.slane %v2025, %v2032
      %v2035 = vunpack.c.l.s4 1934713408
      %v2036 = vunpack.c.0.s8 %v2035
      %v2037 = vlaneseq
      %v2038 = vshrl.u32 %v2037, 7
      %v2039 = vsub.s32 %v2036, %v2038
      %v2040 = vrot.slane %v2026, %v2039
      %v2041 = vcombine.low %v1976, %v1992
      %v2042 = vcombine.high %v1976, %v1992
      %v2044 = vunpack.c.l.s4 1934713408
      %v2045 = vunpack.c.0.s8 %v2044
      %v2046 = vlaneseq
      %v2047 = vshrl.u32 %v2046, 7
      %v2048 = vsub.s32 %v2045, %v2047
      %v2049 = vrot.slane %v2041, %v2048
      %v2051 = vunpack.c.l.s4 1934713408
      %v2052 = vunpack.c.0.s8 %v2051
      %v2053 = vlaneseq
      %v2054 = vshrl.u32 %v2053, 7
      %v2055 = vsub.s32 %v2052, %v2054
      %v2056 = vrot.slane %v2042, %v2055
      %v2057 = vcombine.low %v2001, %v2033
      %v2058 = vcombine.high %v2001, %v2033
      %v2059 = vcombine.low %v2008, %v2040
      %v2060 = vcombine.high %v2008, %v2040
      %v2061 = vcombine.low %v2017, %v2049
      %v2062 = vcombine.high %v2017, %v2049
      %v2063 = vcombine.low %v2024, %v2056
      %v2064 = vcombine.high %v2024, %v2056
      %v2065 = vcombine.low %v450, %v456
      %v2066 = vcombine.high %v450, %v456
      %v2068 = vunpack.c.l.s4 1983009808
      %v2069 = vunpack.c.0.s8 %v2068
      %v2070 = vlaneseq
      %v2071 = vshrl.u32 %v2070, 7
      %v2072 = vsub.s32 %v2069, %v2071
      %v2073 = vrot.slane %v2065, %v2072
      %v2075 = vunpack.c.l.s4 1983009808
      %v2076 = vunpack.c.0.s8 %v2075
      %v2077 = vlaneseq
      %v2078 = vshrl.u32 %v2077, 7
      %v2079 = vsub.s32 %v2076, %v2078
      %v2080 = vrot.slane %v2066, %v2079
      %v2081 = vcombine.low %v453, %v459
      %v2082 = vcombine.high %v453, %v459
      %v2084 = vunpack.c.l.s4 1983009808
      %v2085 = vunpack.c.0.s8 %v2084
      %v2086 = vlaneseq
      %v2087 = vshrl.u32 %v2086, 7
      %v2088 = vsub.s32 %v2085, %v2087
      %v2089 = vrot.slane %v2081, %v2088
      %v2091 = vunpack.c.l.s4 1983009808
      %v2092 = vunpack.c.0.s8 %v2091
      %v2093 = vlaneseq
      %v2094 = vshrl.u32 %v2093, 7
      %v2095 = vsub.s32 %v2092, %v2094
      %v2096 = vrot.slane %v2082, %v2095
      %v2097 = vcombine.low %v462, %v468
      %v2098 = vcombine.high %v462, %v468
      %v2100 = vunpack.c.l.s4 1983009808
      %v2101 = vunpack.c.0.s8 %v2100
      %v2102 = vlaneseq
      %v2103 = vshrl.u32 %v2102, 7
      %v2104 = vsub.s32 %v2101, %v2103
      %v2105 = vrot.slane %v2097, %v2104
      %v2107 = vunpack.c.l.s4 1983009808
      %v2108 = vunpack.c.0.s8 %v2107
      %v2109 = vlaneseq
      %v2110 = vshrl.u32 %v2109, 7
      %v2111 = vsub.s32 %v2108, %v2110
      %v2112 = vrot.slane %v2098, %v2111
      %v2113 = vcombine.low %v465, %v471
      %v2114 = vcombine.high %v465, %v471
      %v2116 = vunpack.c.l.s4 1983009808
      %v2117 = vunpack.c.0.s8 %v2116
      %v2118 = vlaneseq
      %v2119 = vshrl.u32 %v2118, 7
      %v2120 = vsub.s32 %v2117, %v2119
      %v2121 = vrot.slane %v2113, %v2120
      %v2123 = vunpack.c.l.s4 1983009808
      %v2124 = vunpack.c.0.s8 %v2123
      %v2125 = vlaneseq
      %v2126 = vshrl.u32 %v2125, 7
      %v2127 = vsub.s32 %v2124, %v2126
      %v2128 = vrot.slane %v2114, %v2127
      %v2129 = vcombine.low %v2073, %v2089
      %v2130 = vcombine.high %v2073, %v2089
      %v2132 = vunpack.c.l.s4 1934713408
      %v2133 = vunpack.c.0.s8 %v2132
      %v2134 = vlaneseq
      %v2135 = vshrl.u32 %v2134, 7
      %v2136 = vsub.s32 %v2133, %v2135
      %v2137 = vrot.slane %v2129, %v2136
      %v2139 = vunpack.c.l.s4 1934713408
      %v2140 = vunpack.c.0.s8 %v2139
      %v2141 = vlaneseq
      %v2142 = vshrl.u32 %v2141, 7
      %v2143 = vsub.s32 %v2140, %v2142
      %v2144 = vrot.slane %v2130, %v2143
      %v2145 = vcombine.low %v2080, %v2096
      %v2146 = vcombine.high %v2080, %v2096
      %v2148 = vunpack.c.l.s4 1934713408
      %v2149 = vunpack.c.0.s8 %v2148
      %v2150 = vlaneseq
      %v2151 = vshrl.u32 %v2150, 7
      %v2152 = vsub.s32 %v2149, %v2151
      %v2153 = vrot.slane %v2145, %v2152
      %v2155 = vunpack.c.l.s4 1934713408
      %v2156 = vunpack.c.0.s8 %v2155
      %v2157 = vlaneseq
      %v2158 = vshrl.u32 %v2157, 7
      %v2159 = vsub.s32 %v2156, %v2158
      %v2160 = vrot.slane %v2146, %v2159
      %v2161 = vcombine.low %v2105, %v2121
      %v2162 = vcombine.high %v2105, %v2121
      %v2164 = vunpack.c.l.s4 1934713408
      %v2165 = vunpack.c.0.s8 %v2164
      %v2166 = vlaneseq
      %v2167 = vshrl.u32 %v2166, 7
      %v2168 = vsub.s32 %v2165, %v2167
      %v2169 = vrot.slane %v2161, %v2168
      %v2171 = vunpack.c.l.s4 1934713408
      %v2172 = vunpack.c.0.s8 %v2171
      %v2173 = vlaneseq
      %v2174 = vshrl.u32 %v2173, 7
      %v2175 = vsub.s32 %v2172, %v2174
      %v2176 = vrot.slane %v2162, %v2175
      %v2177 = vcombine.low %v2112, %v2128
      %v2178 = vcombine.high %v2112, %v2128
      %v2180 = vunpack.c.l.s4 1934713408
      %v2181 = vunpack.c.0.s8 %v2180
      %v2182 = vlaneseq
      %v2183 = vshrl.u32 %v2182, 7
      %v2184 = vsub.s32 %v2181, %v2183
      %v2185 = vrot.slane %v2177, %v2184
      %v2187 = vunpack.c.l.s4 1934713408
      %v2188 = vunpack.c.0.s8 %v2187
      %v2189 = vlaneseq
      %v2190 = vshrl.u32 %v2189, 7
      %v2191 = vsub.s32 %v2188, %v2190
      %v2192 = vrot.slane %v2178, %v2191
      %v2193 = vcombine.low %v2137, %v2169
      %v2194 = vcombine.high %v2137, %v2169
      %v2195 = vcombine.low %v2144, %v2176
      %v2196 = vcombine.high %v2144, %v2176
      %v2197 = vcombine.low %v2153, %v2185
      %v2198 = vcombine.high %v2153, %v2185
      %v2199 = vcombine.low %v2160, %v2192
      %v2200 = vcombine.high %v2160, %v2192
      %v2201 = vcombine.low %v474, %v480
      %v2202 = vcombine.high %v474, %v480
      %v2204 = vunpack.c.l.s4 1983009808
      %v2205 = vunpack.c.0.s8 %v2204
      %v2206 = vlaneseq
      %v2207 = vshrl.u32 %v2206, 7
      %v2208 = vsub.s32 %v2205, %v2207
      %v2209 = vrot.slane %v2201, %v2208
      %v2211 = vunpack.c.l.s4 1983009808
      %v2212 = vunpack.c.0.s8 %v2211
      %v2213 = vlaneseq
      %v2214 = vshrl.u32 %v2213, 7
      %v2215 = vsub.s32 %v2212, %v2214
      %v2216 = vrot.slane %v2202, %v2215
      %v2217 = vcombine.low %v477, %v483
      %v2218 = vcombine.high %v477, %v483
      %v2220 = vunpack.c.l.s4 1983009808
      %v2221 = vunpack.c.0.s8 %v2220
      %v2222 = vlaneseq
      %v2223 = vshrl.u32 %v2222, 7
      %v2224 = vsub.s32 %v2221, %v2223
      %v2225 = vrot.slane %v2217, %v2224
      %v2227 = vunpack.c.l.s4 1983009808
      %v2228 = vunpack.c.0.s8 %v2227
      %v2229 = vlaneseq
      %v2230 = vshrl.u32 %v2229, 7
      %v2231 = vsub.s32 %v2228, %v2230
      %v2232 = vrot.slane %v2218, %v2231
      %v2233 = vcombine.low %v486, %v492
      %v2234 = vcombine.high %v486, %v492
      %v2236 = vunpack.c.l.s4 1983009808
      %v2237 = vunpack.c.0.s8 %v2236
      %v2238 = vlaneseq
      %v2239 = vshrl.u32 %v2238, 7
      %v2240 = vsub.s32 %v2237, %v2239
      %v2241 = vrot.slane %v2233, %v2240
      %v2243 = vunpack.c.l.s4 1983009808
      %v2244 = vunpack.c.0.s8 %v2243
      %v2245 = vlaneseq
      %v2246 = vshrl.u32 %v2245, 7
      %v2247 = vsub.s32 %v2244, %v2246
      %v2248 = vrot.slane %v2234, %v2247
      %v2249 = vcombine.low %v489, %v495
      %v2250 = vcombine.high %v489, %v495
      %v2252 = vunpack.c.l.s4 1983009808
      %v2253 = vunpack.c.0.s8 %v2252
      %v2254 = vlaneseq
      %v2255 = vshrl.u32 %v2254, 7
      %v2256 = vsub.s32 %v2253, %v2255
      %v2257 = vrot.slane %v2249, %v2256
      %v2259 = vunpack.c.l.s4 1983009808
      %v2260 = vunpack.c.0.s8 %v2259
      %v2261 = vlaneseq
      %v2262 = vshrl.u32 %v2261, 7
      %v2263 = vsub.s32 %v2260, %v2262
      %v2264 = vrot.slane %v2250, %v2263
      %v2265 = vcombine.low %v2209, %v2225
      %v2266 = vcombine.high %v2209, %v2225
      %v2268 = vunpack.c.l.s4 1934713408
      %v2269 = vunpack.c.0.s8 %v2268
      %v2270 = vlaneseq
      %v2271 = vshrl.u32 %v2270, 7
      %v2272 = vsub.s32 %v2269, %v2271
      %v2273 = vrot.slane %v2265, %v2272
      %v2275 = vunpack.c.l.s4 1934713408
      %v2276 = vunpack.c.0.s8 %v2275
      %v2277 = vlaneseq
      %v2278 = vshrl.u32 %v2277, 7
      %v2279 = vsub.s32 %v2276, %v2278
      %v2280 = vrot.slane %v2266, %v2279
      %v2281 = vcombine.low %v2216, %v2232
      %v2282 = vcombine.high %v2216, %v2232
      %v2284 = vunpack.c.l.s4 1934713408
      %v2285 = vunpack.c.0.s8 %v2284
      %v2286 = vlaneseq
      %v2287 = vshrl.u32 %v2286, 7
      %v2288 = vsub.s32 %v2285, %v2287
      %v2289 = vrot.slane %v2281, %v2288
      %v2291 = vunpack.c.l.s4 1934713408
      %v2292 = vunpack.c.0.s8 %v2291
      %v2293 = vlaneseq
      %v2294 = vshrl.u32 %v2293, 7
      %v2295 = vsub.s32 %v2292, %v2294
      %v2296 = vrot.slane %v2282, %v2295
      %v2297 = vcombine.low %v2241, %v2257
      %v2298 = vcombine.high %v2241, %v2257
      %v2300 = vunpack.c.l.s4 1934713408
      %v2301 = vunpack.c.0.s8 %v2300
      %v2302 = vlaneseq
      %v2303 = vshrl.u32 %v2302, 7
      %v2304 = vsub.s32 %v2301, %v2303
      %v2305 = vrot.slane %v2297, %v2304
      %v2307 = vunpack.c.l.s4 1934713408
      %v2308 = vunpack.c.0.s8 %v2307
      %v2309 = vlaneseq
      %v2310 = vshrl.u32 %v2309, 7
      %v2311 = vsub.s32 %v2308, %v2310
      %v2312 = vrot.slane %v2298, %v2311
      %v2313 = vcombine.low %v2248, %v2264
      %v2314 = vcombine.high %v2248, %v2264
      %v2316 = vunpack.c.l.s4 1934713408
      %v2317 = vunpack.c.0.s8 %v2316
      %v2318 = vlaneseq
      %v2319 = vshrl.u32 %v2318, 7
      %v2320 = vsub.s32 %v2317, %v2319
      %v2321 = vrot.slane %v2313, %v2320
      %v2323 = vunpack.c.l.s4 1934713408
      %v2324 = vunpack.c.0.s8 %v2323
      %v2325 = vlaneseq
      %v2326 = vshrl.u32 %v2325, 7
      %v2327 = vsub.s32 %v2324, %v2326
      %v2328 = vrot.slane %v2314, %v2327
      %v2329 = vcombine.low %v2273, %v2305
      %v2330 = vcombine.high %v2273, %v2305
      %v2331 = vcombine.low %v2280, %v2312
      %v2332 = vcombine.high %v2280, %v2312
      %v2333 = vcombine.low %v2289, %v2321
      %v2334 = vcombine.high %v2289, %v2321
      %v2335 = vcombine.low %v2296, %v2328
      %v2336 = vcombine.high %v2296, %v2328
      %v2337 = vcombine.low %v498, %v504
      %v2338 = vcombine.high %v498, %v504
      %v2340 = vunpack.c.l.s4 1983009808
      %v2341 = vunpack.c.0.s8 %v2340
      %v2342 = vlaneseq
      %v2343 = vshrl.u32 %v2342, 7
      %v2344 = vsub.s32 %v2341, %v2343
      %v2345 = vrot.slane %v2337, %v2344
      %v2347 = vunpack.c.l.s4 1983009808
      %v2348 = vunpack.c.0.s8 %v2347
      %v2349 = vlaneseq
      %v2350 = vshrl.u32 %v2349, 7
      %v2351 = vsub.s32 %v2348, %v2350
      %v2352 = vrot.slane %v2338, %v2351
      %v2353 = vcombine.low %v501, %v507
      %v2354 = vcombine.high %v501, %v507
      %v2356 = vunpack.c.l.s4 1983009808
      %v2357 = vunpack.c.0.s8 %v2356
      %v2358 = vlaneseq
      %v2359 = vshrl.u32 %v2358, 7
      %v2360 = vsub.s32 %v2357, %v2359
      %v2361 = vrot.slane %v2353, %v2360
      %v2363 = vunpack.c.l.s4 1983009808
      %v2364 = vunpack.c.0.s8 %v2363
      %v2365 = vlaneseq
      %v2366 = vshrl.u32 %v2365, 7
      %v2367 = vsub.s32 %v2364, %v2366
      %v2368 = vrot.slane %v2354, %v2367
      %v2369 = vcombine.low %v510, %v516
      %v2370 = vcombine.high %v510, %v516
      %v2372 = vunpack.c.l.s4 1983009808
      %v2373 = vunpack.c.0.s8 %v2372
      %v2374 = vlaneseq
      %v2375 = vshrl.u32 %v2374, 7
      %v2376 = vsub.s32 %v2373, %v2375
      %v2377 = vrot.slane %v2369, %v2376
      %v2379 = vunpack.c.l.s4 1983009808
      %v2380 = vunpack.c.0.s8 %v2379
      %v2381 = vlaneseq
      %v2382 = vshrl.u32 %v2381, 7
      %v2383 = vsub.s32 %v2380, %v2382
      %v2384 = vrot.slane %v2370, %v2383
      %v2385 = vcombine.low %v513, %v519
      %v2386 = vcombine.high %v513, %v519
      %v2388 = vunpack.c.l.s4 1983009808
      %v2389 = vunpack.c.0.s8 %v2388
      %v2390 = vlaneseq
      %v2391 = vshrl.u32 %v2390, 7
      %v2392 = vsub.s32 %v2389, %v2391
      %v2393 = vrot.slane %v2385, %v2392
      %v2395 = vunpack.c.l.s4 1983009808
      %v2396 = vunpack.c.0.s8 %v2395
      %v2397 = vlaneseq
      %v2398 = vshrl.u32 %v2397, 7
      %v2399 = vsub.s32 %v2396, %v2398
      %v2400 = vrot.slane %v2386, %v2399
      %v2401 = vcombine.low %v2345, %v2361
      %v2402 = vcombine.high %v2345, %v2361
      %v2404 = vunpack.c.l.s4 1934713408
      %v2405 = vunpack.c.0.s8 %v2404
      %v2406 = vlaneseq
      %v2407 = vshrl.u32 %v2406, 7
      %v2408 = vsub.s32 %v2405, %v2407
      %v2409 = vrot.slane %v2401, %v2408
      %v2411 = vunpack.c.l.s4 1934713408
      %v2412 = vunpack.c.0.s8 %v2411
      %v2413 = vlaneseq
      %v2414 = vshrl.u32 %v2413, 7
      %v2415 = vsub.s32 %v2412, %v2414
      %v2416 = vrot.slane %v2402, %v2415
      %v2417 = vcombine.low %v2352, %v2368
      %v2418 = vcombine.high %v2352, %v2368
      %v2420 = vunpack.c.l.s4 1934713408
      %v2421 = vunpack.c.0.s8 %v2420
      %v2422 = vlaneseq
      %v2423 = vshrl.u32 %v2422, 7
      %v2424 = vsub.s32 %v2421, %v2423
      %v2425 = vrot.slane %v2417, %v2424
      %v2427 = vunpack.c.l.s4 1934713408
      %v2428 = vunpack.c.0.s8 %v2427
      %v2429 = vlaneseq
      %v2430 = vshrl.u32 %v2429, 7
      %v2431 = vsub.s32 %v2428, %v2430
      %v2432 = vrot.slane %v2418, %v2431
      %v2433 = vcombine.low %v2377, %v2393
      %v2434 = vcombine.high %v2377, %v2393
      %v2436 = vunpack.c.l.s4 1934713408
      %v2437 = vunpack.c.0.s8 %v2436
      %v2438 = vlaneseq
      %v2439 = vshrl.u32 %v2438, 7
      %v2440 = vsub.s32 %v2437, %v2439
      %v2441 = vrot.slane %v2433, %v2440
      %v2443 = vunpack.c.l.s4 1934713408
      %v2444 = vunpack.c.0.s8 %v2443
      %v2445 = vlaneseq
      %v2446 = vshrl.u32 %v2445, 7
      %v2447 = vsub.s32 %v2444, %v2446
      %v2448 = vrot.slane %v2434, %v2447
      %v2449 = vcombine.low %v2384, %v2400
      %v2450 = vcombine.high %v2384, %v2400
      %v2452 = vunpack.c.l.s4 1934713408
      %v2453 = vunpack.c.0.s8 %v2452
      %v2454 = vlaneseq
      %v2455 = vshrl.u32 %v2454, 7
      %v2456 = vsub.s32 %v2453, %v2455
      %v2457 = vrot.slane %v2449, %v2456
      %v2459 = vunpack.c.l.s4 1934713408
      %v2460 = vunpack.c.0.s8 %v2459
      %v2461 = vlaneseq
      %v2462 = vshrl.u32 %v2461, 7
      %v2463 = vsub.s32 %v2460, %v2462
      %v2464 = vrot.slane %v2450, %v2463
      %v2465 = vcombine.low %v2409, %v2441
      %v2466 = vcombine.high %v2409, %v2441
      %v2467 = vcombine.low %v2416, %v2448
      %v2468 = vcombine.high %v2416, %v2448
      %v2469 = vcombine.low %v2425, %v2457
      %v2470 = vcombine.high %v2425, %v2457
      %v2471 = vcombine.low %v2432, %v2464
      %v2472 = vcombine.high %v2432, %v2464
      %v2473 = vcombine.low %v522, %v528
      %v2474 = vcombine.high %v522, %v528
      %v2476 = vunpack.c.l.s4 1983009808
      %v2477 = vunpack.c.0.s8 %v2476
      %v2478 = vlaneseq
      %v2479 = vshrl.u32 %v2478, 7
      %v2480 = vsub.s32 %v2477, %v2479
      %v2481 = vrot.slane %v2473, %v2480
      %v2483 = vunpack.c.l.s4 1983009808
      %v2484 = vunpack.c.0.s8 %v2483
      %v2485 = vlaneseq
      %v2486 = vshrl.u32 %v2485, 7
      %v2487 = vsub.s32 %v2484, %v2486
      %v2488 = vrot.slane %v2474, %v2487
      %v2489 = vcombine.low %v525, %v531
      %v2490 = vcombine.high %v525, %v531
      %v2492 = vunpack.c.l.s4 1983009808
      %v2493 = vunpack.c.0.s8 %v2492
      %v2494 = vlaneseq
      %v2495 = vshrl.u32 %v2494, 7
      %v2496 = vsub.s32 %v2493, %v2495
      %v2497 = vrot.slane %v2489, %v2496
      %v2499 = vunpack.c.l.s4 1983009808
      %v2500 = vunpack.c.0.s8 %v2499
      %v2501 = vlaneseq
      %v2502 = vshrl.u32 %v2501, 7
      %v2503 = vsub.s32 %v2500, %v2502
      %v2504 = vrot.slane %v2490, %v2503
      %v2505 = vcombine.low %v534, %v540
      %v2506 = vcombine.high %v534, %v540
      %v2508 = vunpack.c.l.s4 1983009808
      %v2509 = vunpack.c.0.s8 %v2508
      %v2510 = vlaneseq
      %v2511 = vshrl.u32 %v2510, 7
      %v2512 = vsub.s32 %v2509, %v2511
      %v2513 = vrot.slane %v2505, %v2512
      %v2515 = vunpack.c.l.s4 1983009808
      %v2516 = vunpack.c.0.s8 %v2515
      %v2517 = vlaneseq
      %v2518 = vshrl.u32 %v2517, 7
      %v2519 = vsub.s32 %v2516, %v2518
      %v2520 = vrot.slane %v2506, %v2519
      %v2521 = vcombine.low %v537, %v543
      %v2522 = vcombine.high %v537, %v543
      %v2524 = vunpack.c.l.s4 1983009808
      %v2525 = vunpack.c.0.s8 %v2524
      %v2526 = vlaneseq
      %v2527 = vshrl.u32 %v2526, 7
      %v2528 = vsub.s32 %v2525, %v2527
      %v2529 = vrot.slane %v2521, %v2528
      %v2531 = vunpack.c.l.s4 1983009808
      %v2532 = vunpack.c.0.s8 %v2531
      %v2533 = vlaneseq
      %v2534 = vshrl.u32 %v2533, 7
      %v2535 = vsub.s32 %v2532, %v2534
      %v2536 = vrot.slane %v2522, %v2535
      %v2537 = vcombine.low %v2481, %v2497
      %v2538 = vcombine.high %v2481, %v2497
      %v2540 = vunpack.c.l.s4 1934713408
      %v2541 = vunpack.c.0.s8 %v2540
      %v2542 = vlaneseq
      %v2543 = vshrl.u32 %v2542, 7
      %v2544 = vsub.s32 %v2541, %v2543
      %v2545 = vrot.slane %v2537, %v2544
      %v2547 = vunpack.c.l.s4 1934713408
      %v2548 = vunpack.c.0.s8 %v2547
      %v2549 = vlaneseq
      %v2550 = vshrl.u32 %v2549, 7
      %v2551 = vsub.s32 %v2548, %v2550
      %v2552 = vrot.slane %v2538, %v2551
      %v2553 = vcombine.low %v2488, %v2504
      %v2554 = vcombine.high %v2488, %v2504
      %v2556 = vunpack.c.l.s4 1934713408
      %v2557 = vunpack.c.0.s8 %v2556
      %v2558 = vlaneseq
      %v2559 = vshrl.u32 %v2558, 7
      %v2560 = vsub.s32 %v2557, %v2559
      %v2561 = vrot.slane %v2553, %v2560
      %v2563 = vunpack.c.l.s4 1934713408
      %v2564 = vunpack.c.0.s8 %v2563
      %v2565 = vlaneseq
      %v2566 = vshrl.u32 %v2565, 7
      %v2567 = vsub.s32 %v2564, %v2566
      %v2568 = vrot.slane %v2554, %v2567
      %v2569 = vcombine.low %v2513, %v2529
      %v2570 = vcombine.high %v2513, %v2529
      %v2572 = vunpack.c.l.s4 1934713408
      %v2573 = vunpack.c.0.s8 %v2572
      %v2574 = vlaneseq
      %v2575 = vshrl.u32 %v2574, 7
      %v2576 = vsub.s32 %v2573, %v2575
      %v2577 = vrot.slane %v2569, %v2576
      %v2579 = vunpack.c.l.s4 1934713408
      %v2580 = vunpack.c.0.s8 %v2579
      %v2581 = vlaneseq
      %v2582 = vshrl.u32 %v2581, 7
      %v2583 = vsub.s32 %v2580, %v2582
      %v2584 = vrot.slane %v2570, %v2583
      %v2585 = vcombine.low %v2520, %v2536
      %v2586 = vcombine.high %v2520, %v2536
      %v2588 = vunpack.c.l.s4 1934713408
      %v2589 = vunpack.c.0.s8 %v2588
      %v2590 = vlaneseq
      %v2591 = vshrl.u32 %v2590, 7
      %v2592 = vsub.s32 %v2589, %v2591
      %v2593 = vrot.slane %v2585, %v2592
      %v2595 = vunpack.c.l.s4 1934713408
      %v2596 = vunpack.c.0.s8 %v2595
      %v2597 = vlaneseq
      %v2598 = vshrl.u32 %v2597, 7
      %v2599 = vsub.s32 %v2596, %v2598
      %v2600 = vrot.slane %v2586, %v2599
      %v2601 = vcombine.low %v2545, %v2577
      %v2602 = vcombine.high %v2545, %v2577
      %v2603 = vcombine.low %v2552, %v2584
      %v2604 = vcombine.high %v2552, %v2584
      %v2605 = vcombine.low %v2561, %v2593
      %v2606 = vcombine.high %v2561, %v2593
      %v2607 = vcombine.low %v2568, %v2600
      %v2608 = vcombine.high %v2568, %v2600
      %v2609 = vcombine.low %v546, %v552
      %v2610 = vcombine.high %v546, %v552
      %v2612 = vunpack.c.l.s4 1983009808
      %v2613 = vunpack.c.0.s8 %v2612
      %v2614 = vlaneseq
      %v2615 = vshrl.u32 %v2614, 7
      %v2616 = vsub.s32 %v2613, %v2615
      %v2617 = vrot.slane %v2609, %v2616
      %v2619 = vunpack.c.l.s4 1983009808
      %v2620 = vunpack.c.0.s8 %v2619
      %v2621 = vlaneseq
      %v2622 = vshrl.u32 %v2621, 7
      %v2623 = vsub.s32 %v2620, %v2622
      %v2624 = vrot.slane %v2610, %v2623
      %v2625 = vcombine.low %v549, %v555
      %v2626 = vcombine.high %v549, %v555
      %v2628 = vunpack.c.l.s4 1983009808
      %v2629 = vunpack.c.0.s8 %v2628
      %v2630 = vlaneseq
      %v2631 = vshrl.u32 %v2630, 7
      %v2632 = vsub.s32 %v2629, %v2631
      %v2633 = vrot.slane %v2625, %v2632
      %v2635 = vunpack.c.l.s4 1983009808
      %v2636 = vunpack.c.0.s8 %v2635
      %v2637 = vlaneseq
      %v2638 = vshrl.u32 %v2637, 7
      %v2639 = vsub.s32 %v2636, %v2638
      %v2640 = vrot.slane %v2626, %v2639
      %v2641 = vcombine.low %v558, %v564
      %v2642 = vcombine.high %v558, %v564
      %v2644 = vunpack.c.l.s4 1983009808
      %v2645 = vunpack.c.0.s8 %v2644
      %v2646 = vlaneseq
      %v2647 = vshrl.u32 %v2646, 7
      %v2648 = vsub.s32 %v2645, %v2647
      %v2649 = vrot.slane %v2641, %v2648
      %v2651 = vunpack.c.l.s4 1983009808
      %v2652 = vunpack.c.0.s8 %v2651
      %v2653 = vlaneseq
      %v2654 = vshrl.u32 %v2653, 7
      %v2655 = vsub.s32 %v2652, %v2654
      %v2656 = vrot.slane %v2642, %v2655
      %v2657 = vcombine.low %v561, %v567
      %v2658 = vcombine.high %v561, %v567
      %v2660 = vunpack.c.l.s4 1983009808
      %v2661 = vunpack.c.0.s8 %v2660
      %v2662 = vlaneseq
      %v2663 = vshrl.u32 %v2662, 7
      %v2664 = vsub.s32 %v2661, %v2663
      %v2665 = vrot.slane %v2657, %v2664
      %v2667 = vunpack.c.l.s4 1983009808
      %v2668 = vunpack.c.0.s8 %v2667
      %v2669 = vlaneseq
      %v2670 = vshrl.u32 %v2669, 7
      %v2671 = vsub.s32 %v2668, %v2670
      %v2672 = vrot.slane %v2658, %v2671
      %v2673 = vcombine.low %v2617, %v2633
      %v2674 = vcombine.high %v2617, %v2633
      %v2676 = vunpack.c.l.s4 1934713408
      %v2677 = vunpack.c.0.s8 %v2676
      %v2678 = vlaneseq
      %v2679 = vshrl.u32 %v2678, 7
      %v2680 = vsub.s32 %v2677, %v2679
      %v2681 = vrot.slane %v2673, %v2680
      %v2683 = vunpack.c.l.s4 1934713408
      %v2684 = vunpack.c.0.s8 %v2683
      %v2685 = vlaneseq
      %v2686 = vshrl.u32 %v2685, 7
      %v2687 = vsub.s32 %v2684, %v2686
      %v2688 = vrot.slane %v2674, %v2687
      %v2689 = vcombine.low %v2624, %v2640
      %v2690 = vcombine.high %v2624, %v2640
      %v2692 = vunpack.c.l.s4 1934713408
      %v2693 = vunpack.c.0.s8 %v2692
      %v2694 = vlaneseq
      %v2695 = vshrl.u32 %v2694, 7
      %v2696 = vsub.s32 %v2693, %v2695
      %v2697 = vrot.slane %v2689, %v2696
      %v2699 = vunpack.c.l.s4 1934713408
      %v2700 = vunpack.c.0.s8 %v2699
      %v2701 = vlaneseq
      %v2702 = vshrl.u32 %v2701, 7
      %v2703 = vsub.s32 %v2700, %v2702
      %v2704 = vrot.slane %v2690, %v2703
      %v2705 = vcombine.low %v2649, %v2665
      %v2706 = vcombine.high %v2649, %v2665
      %v2708 = vunpack.c.l.s4 1934713408
      %v2709 = vunpack.c.0.s8 %v2708
      %v2710 = vlaneseq
      %v2711 = vshrl.u32 %v2710, 7
      %v2712 = vsub.s32 %v2709, %v2711
      %v2713 = vrot.slane %v2705, %v2712
      %v2715 = vunpack.c.l.s4 1934713408
      %v2716 = vunpack.c.0.s8 %v2715
      %v2717 = vlaneseq
      %v2718 = vshrl.u32 %v2717, 7
      %v2719 = vsub.s32 %v2716, %v2718
      %v2720 = vrot.slane %v2706, %v2719
      %v2721 = vcombine.low %v2656, %v2672
      %v2722 = vcombine.high %v2656, %v2672
      %v2724 = vunpack.c.l.s4 1934713408
      %v2725 = vunpack.c.0.s8 %v2724
      %v2726 = vlaneseq
      %v2727 = vshrl.u32 %v2726, 7
      %v2728 = vsub.s32 %v2725, %v2727
      %v2729 = vrot.slane %v2721, %v2728
      %v2731 = vunpack.c.l.s4 1934713408
      %v2732 = vunpack.c.0.s8 %v2731
      %v2733 = vlaneseq
      %v2734 = vshrl.u32 %v2733, 7
      %v2735 = vsub.s32 %v2732, %v2734
      %v2736 = vrot.slane %v2722, %v2735
      %v2737 = vcombine.low %v2681, %v2713
      %v2738 = vcombine.high %v2681, %v2713
      %v2739 = vcombine.low %v2688, %v2720
      %v2740 = vcombine.high %v2688, %v2720
      %v2741 = vcombine.low %v2697, %v2729
      %v2742 = vcombine.high %v2697, %v2729
      %v2743 = vcombine.low %v2704, %v2736
      %v2744 = vcombine.high %v2704, %v2736
      %vm2745 = vcmask 15360
      %v2746 = vsel %vm2745, %v697, -inf
      %2747 = vmax.xlane.f32.xlu0 %v2746
      %v2748 = vpop.xlane.xlu0 %2747
      %v2749 = vsel %vm2745, %v833, -inf
      %2750 = vmax.xlane.f32.xlu0 %v2749
      %v2751 = vpop.xlane.xlu0 %2750
      %v2752 = vsel %vm2745, %v969, -inf
      %2753 = vmax.xlane.f32.xlu0 %v2752
      %v2754 = vpop.xlane.xlu0 %2753
      %v2755 = vsel %vm2745, %v1105, -inf
      %2756 = vmax.xlane.f32.xlu0 %v2755
      %v2757 = vpop.xlane.xlu0 %2756
      %v2758 = vsel %vm2745, %v1241, -inf
      %2759 = vmax.xlane.f32.xlu0 %v2758
      %v2760 = vpop.xlane.xlu0 %2759
      %v2761 = vsel %vm2745, %v1377, -inf
      %2762 = vmax.xlane.f32.xlu0 %v2761
      %v2763 = vpop.xlane.xlu0 %2762
      %v2764 = vsel %vm2745, %v1513, -inf
      %2765 = vmax.xlane.f32.xlu0 %v2764
      %v2766 = vpop.xlane.xlu0 %2765
      %v2767 = vsel %vm2745, %v1649, -inf
      %2768 = vmax.xlane.f32.xlu0 %v2767
      %v2769 = vpop.xlane.xlu0 %2768
      %v2770 = vsel %vm2745, %v1785, -inf
      %2771 = vmax.xlane.f32.xlu0 %v2770
      %v2772 = vpop.xlane.xlu0 %2771
      %v2773 = vsel %vm2745, %v1921, -inf
      %2774 = vmax.xlane.f32.xlu0 %v2773
      %v2775 = vpop.xlane.xlu0 %2774
      %v2776 = vsel %vm2745, %v2057, -inf
      %2777 = vmax.xlane.f32.xlu0 %v2776
      %v2778 = vpop.xlane.xlu0 %2777
      %v2779 = vsel %vm2745, %v2193, -inf
      %2780 = vmax.xlane.f32.xlu0 %v2779
      %v2781 = vpop.xlane.xlu0 %2780
      %v2782 = vsel %vm2745, %v2329, -inf
      %2783 = vmax.xlane.f32.xlu0 %v2782
      %v2784 = vpop.xlane.xlu0 %2783
      %v2785 = vsel %vm2745, %v2465, -inf
      %2786 = vmax.xlane.f32.xlu0 %v2785
      %v2787 = vpop.xlane.xlu0 %2786
      %v2788 = vsel %vm2745, %v2601, -inf
      %2789 = vmax.xlane.f32.xlu0 %v2788
      %v2790 = vpop.xlane.xlu0 %2789
      %v2791 = vsel %vm2745, %v2737, -inf
      %2792 = vmax.xlane.f32.xlu0 %v2791
      %v2793 = vpop.xlane.xlu0 %2792
      %v2794 = vsel %vm2745, %v698, -inf
      %2795 = vmax.xlane.f32.xlu0 %v2794
      %v2796 = vpop.xlane.xlu0 %2795
      %v2797 = vsel %vm2745, %v834, -inf
      %2798 = vmax.xlane.f32.xlu0 %v2797
      %v2799 = vpop.xlane.xlu0 %2798
      %v2800 = vsel %vm2745, %v970, -inf
      %2801 = vmax.xlane.f32.xlu0 %v2800
      %v2802 = vpop.xlane.xlu0 %2801
      %v2803 = vsel %vm2745, %v1106, -inf
      %2804 = vmax.xlane.f32.xlu0 %v2803
      %v2805 = vpop.xlane.xlu0 %2804
      %v2806 = vsel %vm2745, %v1242, -inf
      %2807 = vmax.xlane.f32.xlu0 %v2806
      %v2808 = vpop.xlane.xlu0 %2807
      %v2809 = vsel %vm2745, %v1378, -inf
      %2810 = vmax.xlane.f32.xlu0 %v2809
      %v2811 = vpop.xlane.xlu0 %2810
      %v2812 = vsel %vm2745, %v1514, -inf
      %2813 = vmax.xlane.f32.xlu0 %v2812
      %v2814 = vpop.xlane.xlu0 %2813
      %v2815 = vsel %vm2745, %v1650, -inf
      %2816 = vmax.xlane.f32.xlu0 %v2815
      %v2817 = vpop.xlane.xlu0 %2816
      %v2818 = vsel %vm2745, %v1786, -inf
      %2819 = vmax.xlane.f32.xlu0 %v2818
      %v2820 = vpop.xlane.xlu0 %2819
      %v2821 = vsel %vm2745, %v1922, -inf
      %2822 = vmax.xlane.f32.xlu0 %v2821
      %v2823 = vpop.xlane.xlu0 %2822
      %v2824 = vsel %vm2745, %v2058, -inf
      %2825 = vmax.xlane.f32.xlu0 %v2824
      %v2826 = vpop.xlane.xlu0 %2825
      %v2827 = vsel %vm2745, %v2194, -inf
      %2828 = vmax.xlane.f32.xlu0 %v2827
      %v2829 = vpop.xlane.xlu0 %2828
      %v2830 = vsel %vm2745, %v2330, -inf
      %2831 = vmax.xlane.f32.xlu0 %v2830
      %v2832 = vpop.xlane.xlu0 %2831
      %v2833 = vsel %vm2745, %v2466, -inf
      %2834 = vmax.xlane.f32.xlu0 %v2833
      %v2835 = vpop.xlane.xlu0 %2834
      %v2836 = vsel %vm2745, %v2602, -inf
      %2837 = vmax.xlane.f32.xlu0 %v2836
      %v2838 = vpop.xlane.xlu0 %2837
      %v2839 = vsel %vm2745, %v2738, -inf
      %2840 = vmax.xlane.f32.xlu0 %v2839
      %v2841 = vpop.xlane.xlu0 %2840
      %v2842 = vsel %vm2745, %v699, -inf
      %2843 = vmax.xlane.f32.xlu0 %v2842
      %v2844 = vpop.xlane.xlu0 %2843
      %v2845 = vsel %vm2745, %v835, -inf
      %2846 = vmax.xlane.f32.xlu0 %v2845
      %v2847 = vpop.xlane.xlu0 %2846
      %v2848 = vsel %vm2745, %v971, -inf
      %2849 = vmax.xlane.f32.xlu0 %v2848
      %v2850 = vpop.xlane.xlu0 %2849
      %v2851 = vsel %vm2745, %v1107, -inf
      %2852 = vmax.xlane.f32.xlu0 %v2851
      %v2853 = vpop.xlane.xlu0 %2852
      %v2854 = vsel %vm2745, %v1243, -inf
      %2855 = vmax.xlane.f32.xlu0 %v2854
      %v2856 = vpop.xlane.xlu0 %2855
      %v2857 = vsel %vm2745, %v1379, -inf
      %2858 = vmax.xlane.f32.xlu0 %v2857
      %v2859 = vpop.xlane.xlu0 %2858
      %v2860 = vsel %vm2745, %v1515, -inf
      %2861 = vmax.xlane.f32.xlu0 %v2860
      %v2862 = vpop.xlane.xlu0 %2861
      %v2863 = vsel %vm2745, %v1651, -inf
      %2864 = vmax.xlane.f32.xlu0 %v2863
      %v2865 = vpop.xlane.xlu0 %2864
      %v2866 = vsel %vm2745, %v1787, -inf
      %2867 = vmax.xlane.f32.xlu0 %v2866
      %v2868 = vpop.xlane.xlu0 %2867
      %v2869 = vsel %vm2745, %v1923, -inf
      %2870 = vmax.xlane.f32.xlu0 %v2869
      %v2871 = vpop.xlane.xlu0 %2870
      %v2872 = vsel %vm2745, %v2059, -inf
      %2873 = vmax.xlane.f32.xlu0 %v2872
      %v2874 = vpop.xlane.xlu0 %2873
      %v2875 = vsel %vm2745, %v2195, -inf
      %2876 = vmax.xlane.f32.xlu0 %v2875
      %v2877 = vpop.xlane.xlu0 %2876
      %v2878 = vsel %vm2745, %v2331, -inf
      %2879 = vmax.xlane.f32.xlu0 %v2878
      %v2880 = vpop.xlane.xlu0 %2879
      %v2881 = vsel %vm2745, %v2467, -inf
      %2882 = vmax.xlane.f32.xlu0 %v2881
      %v2883 = vpop.xlane.xlu0 %2882
      %v2884 = vsel %vm2745, %v2603, -inf
      %2885 = vmax.xlane.f32.xlu0 %v2884
      %v2886 = vpop.xlane.xlu0 %2885
      %v2887 = vsel %vm2745, %v2739, -inf
      %2888 = vmax.xlane.f32.xlu0 %v2887
      %v2889 = vpop.xlane.xlu0 %2888
      %v2890 = vsel %vm2745, %v700, -inf
      %2891 = vmax.xlane.f32.xlu0 %v2890
      %v2892 = vpop.xlane.xlu0 %2891
      %v2893 = vsel %vm2745, %v836, -inf
      %2894 = vmax.xlane.f32.xlu0 %v2893
      %v2895 = vpop.xlane.xlu0 %2894
      %v2896 = vsel %vm2745, %v972, -inf
      %2897 = vmax.xlane.f32.xlu0 %v2896
      %v2898 = vpop.xlane.xlu0 %2897
      %v2899 = vsel %vm2745, %v1108, -inf
      %2900 = vmax.xlane.f32.xlu0 %v2899
      %v2901 = vpop.xlane.xlu0 %2900
      %v2902 = vsel %vm2745, %v1244, -inf
      %2903 = vmax.xlane.f32.xlu0 %v2902
      %v2904 = vpop.xlane.xlu0 %2903
      %v2905 = vsel %vm2745, %v1380, -inf
      %2906 = vmax.xlane.f32.xlu0 %v2905
      %v2907 = vpop.xlane.xlu0 %2906
      %v2908 = vsel %vm2745, %v1516, -inf
      %2909 = vmax.xlane.f32.xlu0 %v2908
      %v2910 = vpop.xlane.xlu0 %2909
      %v2911 = vsel %vm2745, %v1652, -inf
      %2912 = vmax.xlane.f32.xlu0 %v2911
      %v2913 = vpop.xlane.xlu0 %2912
      %v2914 = vsel %vm2745, %v1788, -inf
      %2915 = vmax.xlane.f32.xlu0 %v2914
      %v2916 = vpop.xlane.xlu0 %2915
      %v2917 = vsel %vm2745, %v1924, -inf
      %2918 = vmax.xlane.f32.xlu0 %v2917
      %v2919 = vpop.xlane.xlu0 %2918
      %v2920 = vsel %vm2745, %v2060, -inf
      %2921 = vmax.xlane.f32.xlu0 %v2920
      %v2922 = vpop.xlane.xlu0 %2921
      %v2923 = vsel %vm2745, %v2196, -inf
      %2924 = vmax.xlane.f32.xlu0 %v2923
      %v2925 = vpop.xlane.xlu0 %2924
      %v2926 = vsel %vm2745, %v2332, -inf
      %2927 = vmax.xlane.f32.xlu0 %v2926
      %v2928 = vpop.xlane.xlu0 %2927
      %v2929 = vsel %vm2745, %v2468, -inf
      %2930 = vmax.xlane.f32.xlu0 %v2929
      %v2931 = vpop.xlane.xlu0 %2930
      %v2932 = vsel %vm2745, %v2604, -inf
      %2933 = vmax.xlane.f32.xlu0 %v2932
      %v2934 = vpop.xlane.xlu0 %2933
      %v2935 = vsel %vm2745, %v2740, -inf
      %2936 = vmax.xlane.f32.xlu0 %v2935
      %v2937 = vpop.xlane.xlu0 %2936
      %v2938 = vsel %vm2745, %v701, -inf
      %2939 = vmax.xlane.f32.xlu0 %v2938
      %v2940 = vpop.xlane.xlu0 %2939
      %v2941 = vsel %vm2745, %v837, -inf
      %2942 = vmax.xlane.f32.xlu0 %v2941
      %v2943 = vpop.xlane.xlu0 %2942
      %v2944 = vsel %vm2745, %v973, -inf
      %2945 = vmax.xlane.f32.xlu0 %v2944
      %v2946 = vpop.xlane.xlu0 %2945
      %v2947 = vsel %vm2745, %v1109, -inf
      %2948 = vmax.xlane.f32.xlu0 %v2947
      %v2949 = vpop.xlane.xlu0 %2948
      %v2950 = vsel %vm2745, %v1245, -inf
      %2951 = vmax.xlane.f32.xlu0 %v2950
      %v2952 = vpop.xlane.xlu0 %2951
      %v2953 = vsel %vm2745, %v1381, -inf
      %2954 = vmax.xlane.f32.xlu0 %v2953
      %v2955 = vpop.xlane.xlu0 %2954
      %v2956 = vsel %vm2745, %v1517, -inf
      %2957 = vmax.xlane.f32.xlu0 %v2956
      %v2958 = vpop.xlane.xlu0 %2957
      %v2959 = vsel %vm2745, %v1653, -inf
      %2960 = vmax.xlane.f32.xlu0 %v2959
      %v2961 = vpop.xlane.xlu0 %2960
      %v2962 = vsel %vm2745, %v1789, -inf
      %2963 = vmax.xlane.f32.xlu0 %v2962
      %v2964 = vpop.xlane.xlu0 %2963
      %v2965 = vsel %vm2745, %v1925, -inf
      %2966 = vmax.xlane.f32.xlu0 %v2965
      %v2967 = vpop.xlane.xlu0 %2966
      %v2968 = vsel %vm2745, %v2061, -inf
      %2969 = vmax.xlane.f32.xlu0 %v2968
      %v2970 = vpop.xlane.xlu0 %2969
      %v2971 = vsel %vm2745, %v2197, -inf
      %2972 = vmax.xlane.f32.xlu0 %v2971
      %v2973 = vpop.xlane.xlu0 %2972
      %v2974 = vsel %vm2745, %v2333, -inf
      %2975 = vmax.xlane.f32.xlu0 %v2974
      %v2976 = vpop.xlane.xlu0 %2975
      %v2977 = vsel %vm2745, %v2469, -inf
      %2978 = vmax.xlane.f32.xlu0 %v2977
      %v2979 = vpop.xlane.xlu0 %2978
      %v2980 = vsel %vm2745, %v2605, -inf
      %2981 = vmax.xlane.f32.xlu0 %v2980
      %v2982 = vpop.xlane.xlu0 %2981
      %v2983 = vsel %vm2745, %v2741, -inf
      %2984 = vmax.xlane.f32.xlu0 %v2983
      %v2985 = vpop.xlane.xlu0 %2984
      %v2986 = vsel %vm2745, %v702, -inf
      %2987 = vmax.xlane.f32.xlu0 %v2986
      %v2988 = vpop.xlane.xlu0 %2987
      %v2989 = vsel %vm2745, %v838, -inf
      %2990 = vmax.xlane.f32.xlu0 %v2989
      %v2991 = vpop.xlane.xlu0 %2990
      %v2992 = vsel %vm2745, %v974, -inf
      %2993 = vmax.xlane.f32.xlu0 %v2992
      %v2994 = vpop.xlane.xlu0 %2993
      %v2995 = vsel %vm2745, %v1110, -inf
      %2996 = vmax.xlane.f32.xlu0 %v2995
      %v2997 = vpop.xlane.xlu0 %2996
      %v2998 = vsel %vm2745, %v1246, -inf
      %2999 = vmax.xlane.f32.xlu0 %v2998
      %v3000 = vpop.xlane.xlu0 %2999
      %v3001 = vsel %vm2745, %v1382, -inf
      %3002 = vmax.xlane.f32.xlu0 %v3001
      %v3003 = vpop.xlane.xlu0 %3002
      %v3004 = vsel %vm2745, %v1518, -inf
      %3005 = vmax.xlane.f32.xlu0 %v3004
      %v3006 = vpop.xlane.xlu0 %3005
      %v3007 = vsel %vm2745, %v1654, -inf
      %3008 = vmax.xlane.f32.xlu0 %v3007
      %v3009 = vpop.xlane.xlu0 %3008
      %v3010 = vsel %vm2745, %v1790, -inf
      %3011 = vmax.xlane.f32.xlu0 %v3010
      %v3012 = vpop.xlane.xlu0 %3011
      %v3013 = vsel %vm2745, %v1926, -inf
      %3014 = vmax.xlane.f32.xlu0 %v3013
      %v3015 = vpop.xlane.xlu0 %3014
      %v3016 = vsel %vm2745, %v2062, -inf
      %3017 = vmax.xlane.f32.xlu0 %v3016
      %v3018 = vpop.xlane.xlu0 %3017
      %v3019 = vsel %vm2745, %v2198, -inf
      %3020 = vmax.xlane.f32.xlu0 %v3019
      %v3021 = vpop.xlane.xlu0 %3020
      %v3022 = vsel %vm2745, %v2334, -inf
      %3023 = vmax.xlane.f32.xlu0 %v3022
      %v3024 = vpop.xlane.xlu0 %3023
      %v3025 = vsel %vm2745, %v2470, -inf
      %3026 = vmax.xlane.f32.xlu0 %v3025
      %v3027 = vpop.xlane.xlu0 %3026
      %v3028 = vsel %vm2745, %v2606, -inf
      %3029 = vmax.xlane.f32.xlu0 %v3028
      %v3030 = vpop.xlane.xlu0 %3029
      %v3031 = vsel %vm2745, %v2742, -inf
      %3032 = vmax.xlane.f32.xlu0 %v3031
      %v3033 = vpop.xlane.xlu0 %3032
      %v3034 = vsel %vm2745, %v703, -inf
      %3035 = vmax.xlane.f32.xlu0 %v3034
      %v3036 = vpop.xlane.xlu0 %3035
      %v3037 = vsel %vm2745, %v839, -inf
      %3038 = vmax.xlane.f32.xlu0 %v3037
      %v3039 = vpop.xlane.xlu0 %3038
      %v3040 = vsel %vm2745, %v975, -inf
      %3041 = vmax.xlane.f32.xlu0 %v3040
      %v3042 = vpop.xlane.xlu0 %3041
      %v3043 = vsel %vm2745, %v1111, -inf
      %3044 = vmax.xlane.f32.xlu0 %v3043
      %v3045 = vpop.xlane.xlu0 %3044
      %v3046 = vsel %vm2745, %v1247, -inf
      %3047 = vmax.xlane.f32.xlu0 %v3046
      %v3048 = vpop.xlane.xlu0 %3047
      %v3049 = vsel %vm2745, %v1383, -inf
      %3050 = vmax.xlane.f32.xlu0 %v3049
      %v3051 = vpop.xlane.xlu0 %3050
      %v3052 = vsel %vm2745, %v1519, -inf
      %3053 = vmax.xlane.f32.xlu0 %v3052
      %v3054 = vpop.xlane.xlu0 %3053
      %v3055 = vsel %vm2745, %v1655, -inf
      %3056 = vmax.xlane.f32.xlu0 %v3055
      %v3057 = vpop.xlane.xlu0 %3056
      %v3058 = vsel %vm2745, %v1791, -inf
      %3059 = vmax.xlane.f32.xlu0 %v3058
      %v3060 = vpop.xlane.xlu0 %3059
      %v3061 = vsel %vm2745, %v1927, -inf
      %3062 = vmax.xlane.f32.xlu0 %v3061
      %v3063 = vpop.xlane.xlu0 %3062
      %v3064 = vsel %vm2745, %v2063, -inf
      %3065 = vmax.xlane.f32.xlu0 %v3064
      %v3066 = vpop.xlane.xlu0 %3065
      %v3067 = vsel %vm2745, %v2199, -inf
      %3068 = vmax.xlane.f32.xlu0 %v3067
      %v3069 = vpop.xlane.xlu0 %3068
      %v3070 = vsel %vm2745, %v2335, -inf
      %3071 = vmax.xlane.f32.xlu0 %v3070
      %v3072 = vpop.xlane.xlu0 %3071
      %v3073 = vsel %vm2745, %v2471, -inf
      %3074 = vmax.xlane.f32.xlu0 %v3073
      %v3075 = vpop.xlane.xlu0 %3074
      %v3076 = vsel %vm2745, %v2607, -inf
      %3077 = vmax.xlane.f32.xlu0 %v3076
      %v3078 = vpop.xlane.xlu0 %3077
      %v3079 = vsel %vm2745, %v2743, -inf
      %3080 = vmax.xlane.f32.xlu0 %v3079
      %v3081 = vpop.xlane.xlu0 %3080
      %v3082 = vsel %vm2745, %v704, -inf
      %3083 = vmax.xlane.f32.xlu0 %v3082
      %v3084 = vpop.xlane.xlu0 %3083
      %v3085 = vsel %vm2745, %v840, -inf
      %3086 = vmax.xlane.f32.xlu0 %v3085
      %v3087 = vpop.xlane.xlu0 %3086
      %v3088 = vsel %vm2745, %v976, -inf
      %3089 = vmax.xlane.f32.xlu0 %v3088
      %v3090 = vpop.xlane.xlu0 %3089
      %v3091 = vsel %vm2745, %v1112, -inf
      %3092 = vmax.xlane.f32.xlu0 %v3091
      %v3093 = vpop.xlane.xlu0 %3092
      %v3094 = vsel %vm2745, %v1248, -inf
      %3095 = vmax.xlane.f32.xlu0 %v3094
      %v3096 = vpop.xlane.xlu0 %3095
      %v3097 = vsel %vm2745, %v1384, -inf
      %3098 = vmax.xlane.f32.xlu0 %v3097
      %v3099 = vpop.xlane.xlu0 %3098
      %v3100 = vsel %vm2745, %v1520, -inf
      %3101 = vmax.xlane.f32.xlu0 %v3100
      %v3102 = vpop.xlane.xlu0 %3101
      %v3103 = vsel %vm2745, %v1656, -inf
      %3104 = vmax.xlane.f32.xlu0 %v3103
      %v3105 = vpop.xlane.xlu0 %3104
      %v3106 = vsel %vm2745, %v1792, -inf
      %3107 = vmax.xlane.f32.xlu0 %v3106
      %v3108 = vpop.xlane.xlu0 %3107
      %v3109 = vsel %vm2745, %v1928, -inf
      %3110 = vmax.xlane.f32.xlu0 %v3109
      %v3111 = vpop.xlane.xlu0 %3110
      %v3112 = vsel %vm2745, %v2064, -inf
      %3113 = vmax.xlane.f32.xlu0 %v3112
      %v3114 = vpop.xlane.xlu0 %3113
      %v3115 = vsel %vm2745, %v2200, -inf
      %3116 = vmax.xlane.f32.xlu0 %v3115
      %v3117 = vpop.xlane.xlu0 %3116
      %v3118 = vsel %vm2745, %v2336, -inf
      %3119 = vmax.xlane.f32.xlu0 %v3118
      %v3120 = vpop.xlane.xlu0 %3119
      %v3121 = vsel %vm2745, %v2472, -inf
      %3122 = vmax.xlane.f32.xlu0 %v3121
      %v3123 = vpop.xlane.xlu0 %3122
      %v3124 = vsel %vm2745, %v2608, -inf
      %3125 = vmax.xlane.f32.xlu0 %v3124
      %v3126 = vpop.xlane.xlu0 %3125
      %v3127 = vsel %vm2745, %v2744, -inf
      %3128 = vmax.xlane.f32.xlu0 %v3127
      %v3129 = vpop.xlane.xlu0 %3128
      %v3130 = vmax.f32 %v2748, %v2751
      %v3131 = vmax.f32 %v2754, %v2757
      %v3132 = vmax.f32 %v2760, %v2763
      %v3133 = vmax.f32 %v2766, %v2769
      %v3134 = vmax.f32 %v2772, %v2775
      %v3135 = vmax.f32 %v2778, %v2781
      %v3136 = vmax.f32 %v2784, %v2787
      %v3137 = vmax.f32 %v2790, %v2793
      %v3138 = vmax.f32 %v2796, %v2799
      %v3139 = vmax.f32 %v2802, %v2805
      %v3140 = vmax.f32 %v2808, %v2811
      %v3141 = vmax.f32 %v2814, %v2817
      %v3142 = vmax.f32 %v2820, %v2823
      %v3143 = vmax.f32 %v2826, %v2829
      %v3144 = vmax.f32 %v2832, %v2835
      %v3145 = vmax.f32 %v2838, %v2841
      %v3146 = vmax.f32 %v2844, %v2847
      %v3147 = vmax.f32 %v2850, %v2853
      %v3148 = vmax.f32 %v2856, %v2859
      %v3149 = vmax.f32 %v2862, %v2865
      %v3150 = vmax.f32 %v2868, %v2871
      %v3151 = vmax.f32 %v2874, %v2877
      %v3152 = vmax.f32 %v2880, %v2883
      %v3153 = vmax.f32 %v2886, %v2889
      %v3154 = vmax.f32 %v2892, %v2895
      %v3155 = vmax.f32 %v2898, %v2901
      %v3156 = vmax.f32 %v2904, %v2907
      %v3157 = vmax.f32 %v2910, %v2913
      %v3158 = vmax.f32 %v2916, %v2919
      %v3159 = vmax.f32 %v2922, %v2925
      %v3160 = vmax.f32 %v2928, %v2931
      %v3161 = vmax.f32 %v2934, %v2937
      %v3162 = vmax.f32 %v2940, %v2943
      %v3163 = vmax.f32 %v2946, %v2949
      %v3164 = vmax.f32 %v2952, %v2955
      %v3165 = vmax.f32 %v2958, %v2961
      %v3166 = vmax.f32 %v2964, %v2967
      %v3167 = vmax.f32 %v2970, %v2973
      %v3168 = vmax.f32 %v2976, %v2979
      %v3169 = vmax.f32 %v2982, %v2985
      %v3170 = vmax.f32 %v2988, %v2991
      %v3171 = vmax.f32 %v2994, %v2997
      %v3172 = vmax.f32 %v3000, %v3003
      %v3173 = vmax.f32 %v3006, %v3009
      %v3174 = vmax.f32 %v3012, %v3015
      %v3175 = vmax.f32 %v3018, %v3021
      %v3176 = vmax.f32 %v3024, %v3027
      %v3177 = vmax.f32 %v3030, %v3033
      %v3178 = vmax.f32 %v3036, %v3039
      %v3179 = vmax.f32 %v3042, %v3045
      %v3180 = vmax.f32 %v3048, %v3051
      %v3181 = vmax.f32 %v3054, %v3057
      %v3182 = vmax.f32 %v3060, %v3063
      %v3183 = vmax.f32 %v3066, %v3069
      %v3184 = vmax.f32 %v3072, %v3075
      %v3185 = vmax.f32 %v3078, %v3081
      %v3186 = vmax.f32 %v3084, %v3087
      %v3187 = vmax.f32 %v3090, %v3093
      %v3188 = vmax.f32 %v3096, %v3099
      %v3189 = vmax.f32 %v3102, %v3105
      %v3190 = vmax.f32 %v3108, %v3111
      %v3191 = vmax.f32 %v3114, %v3117
      %v3192 = vmax.f32 %v3120, %v3123
      %v3193 = vmax.f32 %v3126, %v3129
      %v3258 = vlaneseq
      %v3259 = vand.u32 %v3258, 127
      %v3260 = vlaneseq
      %v3261 = vshrl.u32 %v3260, 7
      %v3262 = vsub.s32 %v3259, %v3261
      %v3263 = vrot.slane %v3130, %v3262
      %v3264 = vadd.s32 %v3259, 4294967288
      %v3265 = vlaneseq
      %v3266 = vshrl.u32 %v3265, 7
      %v3267 = vsub.s32 %v3264, %v3266
      %v3268 = vrot.slane %v3131, %v3267
      %vm3269 = vcmask 130112
      %v3270 = vsel %vm3269, %v3268, %v3263
      %v3271 = vadd.s32 %v3259, 4294967280
      %v3272 = vlaneseq
      %v3273 = vshrl.u32 %v3272, 7
      %v3274 = vsub.s32 %v3271, %v3273
      %v3275 = vrot.slane %v3132, %v3274
      %vm3276 = vcmask 195712
      %v3277 = vsel %vm3276, %v3275, %v3270
      %v3278 = vadd.s32 %v3259, 4294967272
      %v3279 = vlaneseq
      %v3280 = vshrl.u32 %v3279, 7
      %v3281 = vsub.s32 %v3278, %v3280
      %v3282 = vrot.slane %v3133, %v3281
      %vm3283 = vcmask 261312
      %v3284 = vsel %vm3283, %v3282, %v3277
      %v3285 = vadd.s32 %v3259, 4294967264
      %v3286 = vlaneseq
      %v3287 = vshrl.u32 %v3286, 7
      %v3288 = vsub.s32 %v3285, %v3287
      %v3289 = vrot.slane %v3134, %v3288
      %vm3290 = vcmask 326912
      %v3291 = vsel %vm3290, %v3289, %v3284
      %v3292 = vadd.s32 %v3259, 4294967256
      %v3293 = vlaneseq
      %v3294 = vshrl.u32 %v3293, 7
      %v3295 = vsub.s32 %v3292, %v3294
      %v3296 = vrot.slane %v3135, %v3295
      %vm3297 = vcmask 392512
      %v3298 = vsel %vm3297, %v3296, %v3291
      %v3299 = vadd.s32 %v3259, 4294967248
      %v3300 = vlaneseq
      %v3301 = vshrl.u32 %v3300, 7
      %v3302 = vsub.s32 %v3299, %v3301
      %v3303 = vrot.slane %v3136, %v3302
      %vm3304 = vcmask 458112
      %v3305 = vsel %vm3304, %v3303, %v3298
      %v3306 = vadd.s32 %v3259, 4294967240
      %v3307 = vlaneseq
      %v3308 = vshrl.u32 %v3307, 7
      %v3309 = vsub.s32 %v3306, %v3308
      %v3310 = vrot.slane %v3137, %v3309
      %vm3311 = vcmask 523712
      %v3312 = vsel %vm3311, %v3310, %v3305
      %v3313 = vadd.s32 %v3259, 4294967232
      %v3314 = vlaneseq
      %v3315 = vshrl.u32 %v3314, 7
      %v3316 = vsub.s32 %v3313, %v3315
      %v3317 = vrot.slane %v3138, %v3316
      %vm3318 = vcmask 589312
      %v3319 = vsel %vm3318, %v3317, %v3312
      %v3320 = vadd.s32 %v3259, 4294967224
      %v3321 = vlaneseq
      %v3322 = vshrl.u32 %v3321, 7
      %v3323 = vsub.s32 %v3320, %v3322
      %v3324 = vrot.slane %v3139, %v3323
      %vm3325 = vcmask 654912
      %v3326 = vsel %vm3325, %v3324, %v3319
      %v3327 = vadd.s32 %v3259, 4294967216
      %v3328 = vlaneseq
      %v3329 = vshrl.u32 %v3328, 7
      %v3330 = vsub.s32 %v3327, %v3329
      %v3331 = vrot.slane %v3140, %v3330
      %vm3332 = vcmask 720512
      %v3333 = vsel %vm3332, %v3331, %v3326
      %v3334 = vadd.s32 %v3259, 4294967208
      %v3335 = vlaneseq
      %v3336 = vshrl.u32 %v3335, 7
      %v3337 = vsub.s32 %v3334, %v3336
      %v3338 = vrot.slane %v3141, %v3337
      %vm3339 = vcmask 786112
      %v3340 = vsel %vm3339, %v3338, %v3333
      %v3341 = vadd.s32 %v3259, 4294967200
      %v3342 = vlaneseq
      %v3343 = vshrl.u32 %v3342, 7
      %v3344 = vsub.s32 %v3341, %v3343
      %v3345 = vrot.slane %v3142, %v3344
      %vm3346 = vcmask 851712
      %v3347 = vsel %vm3346, %v3345, %v3340
      %v3348 = vadd.s32 %v3259, 4294967192
      %v3349 = vlaneseq
      %v3350 = vshrl.u32 %v3349, 7
      %v3351 = vsub.s32 %v3348, %v3350
      %v3352 = vrot.slane %v3143, %v3351
      %vm3353 = vcmask 917312
      %v3354 = vsel %vm3353, %v3352, %v3347
      %v3355 = vadd.s32 %v3259, 4294967184
      %v3356 = vlaneseq
      %v3357 = vshrl.u32 %v3356, 7
      %v3358 = vsub.s32 %v3355, %v3357
      %v3359 = vrot.slane %v3144, %v3358
      %vm3360 = vcmask 982912
      %v3361 = vsel %vm3360, %v3359, %v3354
      %v3362 = vadd.s32 %v3259, 4294967176
      %v3363 = vlaneseq
      %v3364 = vshrl.u32 %v3363, 7
      %v3365 = vsub.s32 %v3362, %v3364
      %v3366 = vrot.slane %v3145, %v3365
      %vm3367 = vcmask 1048512
      %v3368 = vsel %vm3367, %v3366, %v3361
      %v3369 = vlaneseq
      %v3370 = vshrl.u32 %v3369, 7
      %v3371 = vsub.s32 %v3259, %v3370
      %v3372 = vrot.slane %v3146, %v3371
      %v3373 = vlaneseq
      %v3374 = vshrl.u32 %v3373, 7
      %v3375 = vsub.s32 %v3264, %v3374
      %v3376 = vrot.slane %v3147, %v3375
      %v3377 = vsel %vm3269, %v3376, %v3372
      %v3378 = vlaneseq
      %v3379 = vshrl.u32 %v3378, 7
      %v3380 = vsub.s32 %v3271, %v3379
      %v3381 = vrot.slane %v3148, %v3380
      %v3382 = vsel %vm3276, %v3381, %v3377
      %v3383 = vlaneseq
      %v3384 = vshrl.u32 %v3383, 7
      %v3385 = vsub.s32 %v3278, %v3384
      %v3386 = vrot.slane %v3149, %v3385
      %v3387 = vsel %vm3283, %v3386, %v3382
      %v3388 = vlaneseq
      %v3389 = vshrl.u32 %v3388, 7
      %v3390 = vsub.s32 %v3285, %v3389
      %v3391 = vrot.slane %v3150, %v3390
      %v3392 = vsel %vm3290, %v3391, %v3387
      %v3393 = vlaneseq
      %v3394 = vshrl.u32 %v3393, 7
      %v3395 = vsub.s32 %v3292, %v3394
      %v3396 = vrot.slane %v3151, %v3395
      %v3397 = vsel %vm3297, %v3396, %v3392
      %v3398 = vlaneseq
      %v3399 = vshrl.u32 %v3398, 7
      %v3400 = vsub.s32 %v3299, %v3399
      %v3401 = vrot.slane %v3152, %v3400
      %v3402 = vsel %vm3304, %v3401, %v3397
      %v3403 = vlaneseq
      %v3404 = vshrl.u32 %v3403, 7
      %v3405 = vsub.s32 %v3306, %v3404
      %v3406 = vrot.slane %v3153, %v3405
      %v3407 = vsel %vm3311, %v3406, %v3402
      %v3408 = vlaneseq
      %v3409 = vshrl.u32 %v3408, 7
      %v3410 = vsub.s32 %v3313, %v3409
      %v3411 = vrot.slane %v3154, %v3410
      %v3412 = vsel %vm3318, %v3411, %v3407
      %v3413 = vlaneseq
      %v3414 = vshrl.u32 %v3413, 7
      %v3415 = vsub.s32 %v3320, %v3414
      %v3416 = vrot.slane %v3155, %v3415
      %v3417 = vsel %vm3325, %v3416, %v3412
      %v3418 = vlaneseq
      %v3419 = vshrl.u32 %v3418, 7
      %v3420 = vsub.s32 %v3327, %v3419
      %v3421 = vrot.slane %v3156, %v3420
      %v3422 = vsel %vm3332, %v3421, %v3417
      %v3423 = vlaneseq
      %v3424 = vshrl.u32 %v3423, 7
      %v3425 = vsub.s32 %v3334, %v3424
      %v3426 = vrot.slane %v3157, %v3425
      %v3427 = vsel %vm3339, %v3426, %v3422
      %v3428 = vlaneseq
      %v3429 = vshrl.u32 %v3428, 7
      %v3430 = vsub.s32 %v3341, %v3429
      %v3431 = vrot.slane %v3158, %v3430
      %v3432 = vsel %vm3346, %v3431, %v3427
      %v3433 = vlaneseq
      %v3434 = vshrl.u32 %v3433, 7
      %v3435 = vsub.s32 %v3348, %v3434
      %v3436 = vrot.slane %v3159, %v3435
      %v3437 = vsel %vm3353, %v3436, %v3432
      %v3438 = vlaneseq
      %v3439 = vshrl.u32 %v3438, 7
      %v3440 = vsub.s32 %v3355, %v3439
      %v3441 = vrot.slane %v3160, %v3440
      %v3442 = vsel %vm3360, %v3441, %v3437
      %v3443 = vlaneseq
      %v3444 = vshrl.u32 %v3443, 7
      %v3445 = vsub.s32 %v3362, %v3444
      %v3446 = vrot.slane %v3161, %v3445
      %v3447 = vsel %vm3367, %v3446, %v3442
      %v3448 = vlaneseq
      %v3449 = vshrl.u32 %v3448, 7
      %v3450 = vsub.s32 %v3259, %v3449
      %v3451 = vrot.slane %v3162, %v3450
      %v3452 = vlaneseq
      %v3453 = vshrl.u32 %v3452, 7
      %v3454 = vsub.s32 %v3264, %v3453
      %v3455 = vrot.slane %v3163, %v3454
      %v3456 = vsel %vm3269, %v3455, %v3451
      %v3457 = vlaneseq
      %v3458 = vshrl.u32 %v3457, 7
      %v3459 = vsub.s32 %v3271, %v3458
      %v3460 = vrot.slane %v3164, %v3459
      %v3461 = vsel %vm3276, %v3460, %v3456
      %v3462 = vlaneseq
      %v3463 = vshrl.u32 %v3462, 7
      %v3464 = vsub.s32 %v3278, %v3463
      %v3465 = vrot.slane %v3165, %v3464
      %v3466 = vsel %vm3283, %v3465, %v3461
      %v3467 = vlaneseq
      %v3468 = vshrl.u32 %v3467, 7
      %v3469 = vsub.s32 %v3285, %v3468
      %v3470 = vrot.slane %v3166, %v3469
      %v3471 = vsel %vm3290, %v3470, %v3466
      %v3472 = vlaneseq
      %v3473 = vshrl.u32 %v3472, 7
      %v3474 = vsub.s32 %v3292, %v3473
      %v3475 = vrot.slane %v3167, %v3474
      %v3476 = vsel %vm3297, %v3475, %v3471
      %v3477 = vlaneseq
      %v3478 = vshrl.u32 %v3477, 7
      %v3479 = vsub.s32 %v3299, %v3478
      %v3480 = vrot.slane %v3168, %v3479
      %v3481 = vsel %vm3304, %v3480, %v3476
      %v3482 = vlaneseq
      %v3483 = vshrl.u32 %v3482, 7
      %v3484 = vsub.s32 %v3306, %v3483
      %v3485 = vrot.slane %v3169, %v3484
      %v3486 = vsel %vm3311, %v3485, %v3481
      %v3487 = vlaneseq
      %v3488 = vshrl.u32 %v3487, 7
      %v3489 = vsub.s32 %v3313, %v3488
      %v3490 = vrot.slane %v3170, %v3489
      %v3491 = vsel %vm3318, %v3490, %v3486
      %v3492 = vlaneseq
      %v3493 = vshrl.u32 %v3492, 7
      %v3494 = vsub.s32 %v3320, %v3493
      %v3495 = vrot.slane %v3171, %v3494
      %v3496 = vsel %vm3325, %v3495, %v3491
      %v3497 = vlaneseq
      %v3498 = vshrl.u32 %v3497, 7
      %v3499 = vsub.s32 %v3327, %v3498
      %v3500 = vrot.slane %v3172, %v3499
      %v3501 = vsel %vm3332, %v3500, %v3496
      %v3502 = vlaneseq
      %v3503 = vshrl.u32 %v3502, 7
      %v3504 = vsub.s32 %v3334, %v3503
      %v3505 = vrot.slane %v3173, %v3504
      %v3506 = vsel %vm3339, %v3505, %v3501
      %v3507 = vlaneseq
      %v3508 = vshrl.u32 %v3507, 7
      %v3509 = vsub.s32 %v3341, %v3508
      %v3510 = vrot.slane %v3174, %v3509
      %v3511 = vsel %vm3346, %v3510, %v3506
      %v3512 = vlaneseq
      %v3513 = vshrl.u32 %v3512, 7
      %v3514 = vsub.s32 %v3348, %v3513
      %v3515 = vrot.slane %v3175, %v3514
      %v3516 = vsel %vm3353, %v3515, %v3511
      %v3517 = vlaneseq
      %v3518 = vshrl.u32 %v3517, 7
      %v3519 = vsub.s32 %v3355, %v3518
      %v3520 = vrot.slane %v3176, %v3519
      %v3521 = vsel %vm3360, %v3520, %v3516
      %v3522 = vlaneseq
      %v3523 = vshrl.u32 %v3522, 7
      %v3524 = vsub.s32 %v3362, %v3523
      %v3525 = vrot.slane %v3177, %v3524
      %v3526 = vsel %vm3367, %v3525, %v3521
      %v3527 = vlaneseq
      %v3528 = vshrl.u32 %v3527, 7
      %v3529 = vsub.s32 %v3259, %v3528
      %v3530 = vrot.slane %v3178, %v3529
      %v3531 = vlaneseq
      %v3532 = vshrl.u32 %v3531, 7
      %v3533 = vsub.s32 %v3264, %v3532
      %v3534 = vrot.slane %v3179, %v3533
      %v3535 = vsel %vm3269, %v3534, %v3530
      %v3536 = vlaneseq
      %v3537 = vshrl.u32 %v3536, 7
      %v3538 = vsub.s32 %v3271, %v3537
      %v3539 = vrot.slane %v3180, %v3538
      %v3540 = vsel %vm3276, %v3539, %v3535
      %v3541 = vlaneseq
      %v3542 = vshrl.u32 %v3541, 7
      %v3543 = vsub.s32 %v3278, %v3542
      %v3544 = vrot.slane %v3181, %v3543
      %v3545 = vsel %vm3283, %v3544, %v3540
      %v3546 = vlaneseq
      %v3547 = vshrl.u32 %v3546, 7
      %v3548 = vsub.s32 %v3285, %v3547
      %v3549 = vrot.slane %v3182, %v3548
      %v3550 = vsel %vm3290, %v3549, %v3545
      %v3551 = vlaneseq
      %v3552 = vshrl.u32 %v3551, 7
      %v3553 = vsub.s32 %v3292, %v3552
      %v3554 = vrot.slane %v3183, %v3553
      %v3555 = vsel %vm3297, %v3554, %v3550
      %v3556 = vlaneseq
      %v3557 = vshrl.u32 %v3556, 7
      %v3558 = vsub.s32 %v3299, %v3557
      %v3559 = vrot.slane %v3184, %v3558
      %v3560 = vsel %vm3304, %v3559, %v3555
      %v3561 = vlaneseq
      %v3562 = vshrl.u32 %v3561, 7
      %v3563 = vsub.s32 %v3306, %v3562
      %v3564 = vrot.slane %v3185, %v3563
      %v3565 = vsel %vm3311, %v3564, %v3560
      %v3566 = vlaneseq
      %v3567 = vshrl.u32 %v3566, 7
      %v3568 = vsub.s32 %v3313, %v3567
      %v3569 = vrot.slane %v3186, %v3568
      %v3570 = vsel %vm3318, %v3569, %v3565
      %v3571 = vlaneseq
      %v3572 = vshrl.u32 %v3571, 7
      %v3573 = vsub.s32 %v3320, %v3572
      %v3574 = vrot.slane %v3187, %v3573
      %v3575 = vsel %vm3325, %v3574, %v3570
      %v3576 = vlaneseq
      %v3577 = vshrl.u32 %v3576, 7
      %v3578 = vsub.s32 %v3327, %v3577
      %v3579 = vrot.slane %v3188, %v3578
      %v3580 = vsel %vm3332, %v3579, %v3575
      %v3581 = vlaneseq
      %v3582 = vshrl.u32 %v3581, 7
      %v3583 = vsub.s32 %v3334, %v3582
      %v3584 = vrot.slane %v3189, %v3583
      %v3585 = vsel %vm3339, %v3584, %v3580
      %v3586 = vlaneseq
      %v3587 = vshrl.u32 %v3586, 7
      %v3588 = vsub.s32 %v3341, %v3587
      %v3589 = vrot.slane %v3190, %v3588
      %v3590 = vsel %vm3346, %v3589, %v3585
      %v3591 = vlaneseq
      %v3592 = vshrl.u32 %v3591, 7
      %v3593 = vsub.s32 %v3348, %v3592
      %v3594 = vrot.slane %v3191, %v3593
      %v3595 = vsel %vm3353, %v3594, %v3590
      %v3596 = vlaneseq
      %v3597 = vshrl.u32 %v3596, 7
      %v3598 = vsub.s32 %v3355, %v3597
      %v3599 = vrot.slane %v3192, %v3598
      %v3600 = vsel %vm3360, %v3599, %v3595
      %v3601 = vlaneseq
      %v3602 = vshrl.u32 %v3601, 7
      %v3603 = vsub.s32 %v3362, %v3602
      %v3604 = vrot.slane %v3193, %v3603
      %v3605 = vsel %vm3367, %v3604, %v3600
      %vm3606 = vcmask 1041409
      %v3607 = vsel %vm3606, %v3447, %v3368
      %vm3608 = vcmask 1042434
      %v3609 = vsel %vm3608, %v3526, %v3607
      %vm3610 = vcmask 1043459
      %v3611 = vsel %vm3610, %v3605, %v3609
      %3613 = vst [vmem:[%s168] sm:$0xf] %v3611
      %p3614 = scmp.lt.s32.totalorder %s14, 1
      %s3615 = scalar_select %p3614, %s14, 1
      %s3616 = smul.addr %s3615, 4
      %s3617 = scalar_lea.vmem %s3, %s3616
      // Predicated region
      $region33: #{conv_block.3} parent=31 // pred_check
        %p3618 = pneg %p100
      $region34: #{conv_block.3} parent=31 // pred_check_branch
        %3620 = sbr.rel (%p3618) target = $region36
      $region35: #{conv_block.3} parent=31 // pred_region
        _
      $region36: #{conv_block.3} parent=31 // pred_fallthru
        _
    $region32: #{conv_block.3} parent=5 // pred_fallthru
      _
    %p3621 = scmp.le.s32.totalorder 2, %s9
    // Predicated region
    $region37: #{conv_block.3} parent=5 // pred_check
      %p3622 = pneg %p3621
    $region38: #{conv_block.3} parent=5 // pred_check_branch
      %3624 = sbr.rel (%p3622) target = $region40
    $region39: #{conv_block.3} parent=5 // pred_region
      %s3625 = ssub.s32 %s9, 2
      // Predicated region
      $region41: #{conv_block.3} parent=39 // pred_check
        %p3626 = pneg %p106
      $region42: #{conv_block.3} parent=39 // pred_check_branch
        %3628 = sbr.rel (%p3626) target = $region44
      $region43: #{conv_block.3} parent=39 // pred_region
        %p3629 = scmp.lt.s32.totalorder %s15, 1
        %s3630 = scalar_select %p3629, %s15, 1
        %s3631 = smul.addr %s3630, 4
        %s3632 = scalar_lea.vmem %s3, %s3631
      $region44: #{conv_block.3} parent=39 // pred_fallthru
        _
    $region40: #{conv_block.3} parent=5 // pred_fallthru
      _
  $region6: #{conv_block.3} parent=0 // loop_footer
    %s13 = sadd.s32 1, %s9
  $region7: #{conv_block.3} parent=0 // loop_footer_branch
    %8 = sbr.rel target = $region3
  $region8: #{conv_block.3} parent=0 // loop_exit
    _

// kernel: conv_block.2
$region0: #{conv_block.2}
  #allocation0 [shape = 'u32[]', space=smem, size = 0x4, offset = 0x4, fixed_abs, tag = 'smem constant byte address 0x4 - core index']
  #allocation1 [shape = 'u32[144,128]{1,0:T(1,128)}', space=vmem, size = 0x12000, scoped, tag = 'internal scratch']
  %s0 = inlined_call_operand.hbm [shape: f32[2,4,16,16], index: 0, kind: input, shape index: {}]
  %s1 = inlined_call_operand.vmem [shape: f32[9,8,4], index: 1, kind: input, shape index: {}]
  %s2 = inlined_call_operand.vmem [shape: f32[2,8,256], index: 2, kind: output, shape index: {0}]
  %s3 = inlined_call_operand.vmem [shape: f32[2,8,2], index: 3, kind: output, shape index: {1}]
  %4 = xla_tuple %s2, %s3
  %s5 = sld [smem:[#allocation0]]
  $region53: #{conv_block.2} parent=0
    _
  %s7 = ssub.s32 1, %s5
  %s8 = scalar_select 0, %s7, %s5
  $region1: #{conv_block.2} parent=0
    #allocation2 [shape = 'u8[65536]{0}', space=vmem, size = 0x10000, scoped, tag = 'input window, operand 0']
    #allocation3 [shape = 's32[2]{0}', space=sflag, size = 0x8, scoped, tag = 'scoped memory for conv_block.2']
    %9 = vsyncpa [#allocation3], 0
    %s10 = scalar_lea.sflag [#allocation3], 1
    %11 = vsyncpa %s10, 0
    loop: start=0, step=1, limit=4
    $region2: #{conv_block.2} parent=1 // loop_pre_header
      _
    $region3: #{conv_block.2} parent=1 // loop_header
      %s13 = sphi 0, %s17
      %p14 = scmp.ge.s32.totalorder %s13, 4
      %s23 = sphi 0, %s25
      %s26 = sphi 0, %s23
      %s27 = sphi 0, %s26
      %s43 = sphi 0, %s27
      %s47 = sphi 0, %s47
      %s49 = sphi 0, %s47
      %s50 = sphi 0, %s49
      %s64 = sphi 0, %s50
      %s70 = sphi 0, %s72
      %s73 = sphi 0, %s70
      %s74 = sphi 0, %s73
      %s90 = sphi 0, %s74
      %s96 = sphi 0, %s98
      %s99 = sphi 0, %s96
      %s100 = sphi 0, %s99
      %s116 = sphi 0, %s100
    $region4: #{conv_block.2} parent=1 // loop_header_branch
      %16 = sbr.rel (%p14) target = $region8
    $region5: #{conv_block.2} parent=1 // loop_body
      %s18 = ssub.s32 %s13, 1
      %s19 = ssub.s32 %s13, 2
      %s20 = sadd.s32 %s13, 1
      %s21 = ssub.s32 %s13, %s20
      %p22 = scmp.eq.s32.totalorder %s21, 0
      %s24 = sadd.s32 %s23, 1
      %s25 = scalar_select %p22, %s23, %s24
      %p28 = pneg %p22
      %p29 = scmp.eq.s32.totalorder %s13, 1
      %p30 = por %p28, %p29
      %p31 = scmp.ne.s32.totalorder %s23, %s26
      %p32 = scmp.eq.s32.totalorder %s13, 0
      %p33 = por %p31, %p32
      %p34 = scmp.ne.s32.totalorder %s23, %s26
      %p35 = scmp.eq.s32.totalorder %s18, 1
      %p36 = por %p34, %p35
      %p37 = scmp.ne.s32.totalorder %s26, %s27
      %p38 = scmp.eq.s32.totalorder %s18, 0
      %p39 = por %p37, %p38
      %p40 = scmp.ne.s32.totalorder %s26, %s27
      %p41 = scmp.eq.s32.totalorder %s19, 1
      %p42 = por %p40, %p41
      %p44 = scmp.ne.s32.totalorder %s27, %s43
      %p45 = scmp.eq.s32.totalorder %s19, 0
      %p46 = por %p44, %p45
      %s48 = sadd.s32 %s47, 1
      %p51 = scmp.eq.s32.totalorder %s13, 1
      %p52 = scmp.ne.s32.totalorder %s47, %s49
      %p53 = scmp.eq.s32.totalorder %s13, 0
      %p54 = por %p52, %p53
      %p55 = scmp.ne.s32.totalorder %s47, %s49
      %p56 = scmp.eq.s32.totalorder %s18, 1
      %p57 = por %p55, %p56
      %p58 = scmp.ne.s32.totalorder %s49, %s50
      %p59 = scmp.eq.s32.totalorder %s18, 0
      %p60 = por %p58, %p59
      %p61 = scmp.ne.s32.totalorder %s49, %s50
      %p62 = scmp.eq.s32.totalorder %s19, 1
      %p63 = por %p61, %p62
      %p65 = scmp.ne.s32.totalorder %s50, %s64
      %p66 = scmp.eq.s32.totalorder %s19, 0
      %p67 = por %p65, %p66
      %s68 = ssub.s32 %s13, %s20
      %p69 = scmp.eq.s32.totalorder %s68, 0
      %s71 = sadd.s32 %s70, 1
      %s72 = scalar_select %p69, %s70, %s71
      %p75 = pneg %p69
      %p76 = scmp.eq.s32.totalorder %s13, 1
      %p77 = por %p75, %p76
      %p78 = scmp.ne.s32.totalorder %s70, %s73
      %p79 = scmp.eq.s32.totalorder %s13, 0
      %p80 = por %p78, %p79
      %p81 = scmp.ne.s32.totalorder %s70, %s73
      %p82 = scmp.eq.s32.totalorder %s18, 1
      %p83 = por %p81, %p82
      %p84 = scmp.ne.s32.totalorder %s73, %s74
      %p85 = scmp.eq.s32.totalorder %s18, 0
      %p86 = por %p84, %p85
      %p87 = scmp.ne.s32.totalorder %s73, %s74
      %p88 = scmp.eq.s32.totalorder %s19, 1
      %p89 = por %p87, %p88
      %p91 = scmp.ne.s32.totalorder %s74, %s90
      %p92 = scmp.eq.s32.totalorder %s19, 0
      %p93 = por %p91, %p92
      %s94 = ssub.s32 %s13, %s20
      %p95 = scmp.eq.s32.totalorder %s94, 0
      %s97 = sadd.s32 %s96, 1
      %s98 = scalar_select %p95, %s96, %s97
      %p101 = pneg %p95
      %p102 = scmp.eq.s32.totalorder %s13, 1
      %p103 = por %p101, %p102
      %p104 = scmp.ne.s32.totalorder %s96, %s99
      %p105 = scmp.eq.s32.totalorder %s13, 0
      %p106 = por %p104, %p105
      %p107 = scmp.ne.s32.totalorder %s96, %s99
      %p108 = scmp.eq.s32.totalorder %s18, 1
      %p109 = por %p107, %p108
      %p110 = scmp.ne.s32.totalorder %s99, %s100
      %p111 = scmp.eq.s32.totalorder %s18, 0
      %p112 = por %p110, %p111
      %p113 = scmp.ne.s32.totalorder %s99, %s100
      %p114 = scmp.eq.s32.totalorder %s19, 1
      %p115 = por %p113, %p114
      %p117 = scmp.ne.s32.totalorder %s100, %s116
      %p118 = scmp.eq.s32.totalorder %s19, 0
      %p119 = por %p117, %p118
      %p120 = scmp.le.s32.totalorder 1, %s13
      %p121 = scmp.lt.s32.totalorder %s13, 3
      %p122 = pnand %p120, %p121
      %p123 = pneg %p122
      // Predicated region
      $region9: #{conv_block.2} parent=5 // pred_check
        _
      $region10: #{conv_block.2} parent=5 // pred_check_branch
        %125 = sbr.rel (%p122) target = $region12
      $region11: #{conv_block.2} parent=5 // pred_region
        %s126 = ssub.s32 %s13, 1
        // Predicated region
        $region13: #{conv_block.2} parent=11 // pred_check
          %p127 = pneg %p60
        $region14: #{conv_block.2} parent=11 // pred_check_branch
          %129 = sbr.rel (%p127) target = $region16
        $region15: #{conv_block.2} parent=11 // pred_region
          _
        $region16: #{conv_block.2} parent=11 // pred_fallthru
          _
      $region12: #{conv_block.2} parent=5 // pred_fallthru
        _
      %p130 = scmp.lt.s32.totalorder %s13, 2
      // Predicated region
      $region17: #{conv_block.2} parent=5 // pred_check
        %p131 = pneg %p130
      $region18: #{conv_block.2} parent=5 // pred_check_branch
        %133 = sbr.rel (%p131) target = $region20
      $region19: #{conv_block.2} parent=5 // pred_region
        // Predicated region
        $region21: #{conv_block.2} parent=19 // pred_check
          %p134 = pneg %p33
        $region22: #{conv_block.2} parent=19 // pred_check_branch
          %136 = sbr.rel (%p134) target = $region24
        $region23: #{conv_block.2} parent=19 // pred_region
          %s137 = sand.u32 %s23, 1
          %s138 = scalar_lea.sflag [#allocation3], %s137
          %s139 = sand.u32 %s23, 1
          %s140 = smul.addr %s139, 64
          %s141 = scalar_lea.vmem [#allocation2], %s140
          %s143 = ssub.s32 1024, 1024
          %144 = vsyncadd %s138, %s143
          %s145 = smul.addr %s13, 8
          %s146 = smul.addr %s145, 128
          %s147 = scalar_lea.hbm %s0, %s146
          %s148 = sshll.u32 %s141, 4
          %s149 = int_to_ptr.vmem [resolvable:$true] %s148
          %154 = dma.hbm_to_vmem [thread:$0]  %s147, 1024, %s149, %s138, 128, 128, 8
        $region24: #{conv_block.2} parent=19 // pred_fallthru
          _
      $region20: #{conv_block.2} parent=5 // pred_fallthru
        _
      %p155 = scmp.le.s32.totalorder 1, %s13
      %p156 = scmp.lt.s32.totalorder %s13, 3
      %p157 = pnand %p155, %p156
      %p158 = pneg %p157
      // Predicated region
      $region25: #{conv_block.2} parent=5 // pred_check
        _
      $region26: #{conv_block.2} parent=5 // pred_check_branch
        %160 = sbr.rel (%p157) target = $region28
      $region27: #{conv_block.2} parent=5 // pred_region
        %s161 = ssub.s32 %s13, 1
        %s162 = sand.u32 %s26, 1
        %s163 = scalar_lea.sflag [#allocation3], %s162
        %s164 = sand.u32 %s26, 1
        %s165 = smul.addr %s164, 64
        %s166 = scalar_lea.vmem [#allocation2], %s165
        // Predicated region
        $region29: #{conv_block.2} parent=27 // pred_check
          %p167 = pneg %p39
        $region30: #{conv_block.2} parent=27 // pred_check_branch
          %169 = sbr.rel (%p167) target = $region32
        $region31: #{conv_block.2} parent=27 // pred_region
          %170 = dma.done %s163, 1024
        $region32: #{conv_block.2} parent=27 // pred_fallthru
          _
        %s171 = sand.u32 %s26, 1
        %s172 = scalar_lea.sflag [#allocation3], %s171
        %s173 = sand.u32 %s26, 1
        %s174 = smul.addr %s173, 64
        %s175 = scalar_lea.vmem [#allocation2], %s174
        %p176 = pneg %p39
        %p177 = pneg %p36
        %p178 = pneg %p60
        %p179 = pneg %p57
        %p180 = pneg %p86
        %p181 = pneg %p83
        %p182 = scmp.lt.s32.totalorder %s18, 1
        %s183 = scalar_select %p182, %s18, 1
        %s184 = smul.addr %s183, 2
        %s185 = smul.addr %s184, 8
        %s186 = scalar_lea.vmem %s2, %s185
        %p187 = pneg %p112
        %p188 = pneg %p109
        %p189 = scmp.lt.s32.totalorder %s18, 1
        %s190 = scalar_select %p189, %s18, 1
        %s191 = smul.addr %s190, 8
        %s192 = scalar_lea.vmem %s3, %s191
        %p193 = scmp.lt.s32.totalorder %s18, 1
        %s194 = scalar_select %p193, %s18, 1
        %s195 = smul.addr %s194, 2
        %s196 = smul.addr %s195, 8
        %s197 = scalar_lea.vmem %s2, %s196
        %p198 = scmp.lt.s32.totalorder %s18, 1
        %s199 = scalar_select %p198, %s18, 1
        %s200 = smul.addr %s199, 8
        %s201 = scalar_lea.vmem %s3, %s200
        %v202 = vld [vmem:[%s166] sm:$0xff]
        %v203 = vld [vmem:[%s166 + $0x8] sm:$0xff]
        %v204 = vld [vmem:[%s166 + $0x10] sm:$0xff]
        %v205 = vld [vmem:[%s166 + $0x18] sm:$0xff]
        %v206 = vld [vmem:[%s166 + $0x20] sm:$0xff]
        %v207 = vld [vmem:[%s166 + $0x28] sm:$0xff]
        %v208 = vld [vmem:[%s166 + $0x30] sm:$0xff]
        %v209 = vld [vmem:[%s166 + $0x38] sm:$0xff]
        %218 = vrot.lane.b32.xlu0 %v202, 1
        %v219 = vpop.permute.xlu0 %218
        %220 = vrot.lane.b32.xlu0 %v203, 1
        %v221 = vpop.permute.xlu0 %220
        %222 = vrot.lane.b32.xlu0 %v204, 1
        %v223 = vpop.permute.xlu0 %222
        %224 = vrot.lane.b32.xlu0 %v205, 1
        %v225 = vpop.permute.xlu0 %224
        %226 = vrot.lane.b32.xlu0 %v206, 1
        %v227 = vpop.permute.xlu0 %226
        %228 = vrot.lane.b32.xlu0 %v207, 1
        %v229 = vpop.permute.xlu0 %228
        %230 = vrot.lane.b32.xlu0 %v208, 1
        %v231 = vpop.permute.xlu0 %230
        %232 = vrot.lane.b32.xlu0 %v209, 1
        %v233 = vpop.permute.xlu0 %232
        %vm242 = vcmask 7168
        %v243 = vsel %vm242, 0.0, %v219
        %v244 = vsel %vm242, 0.0, %v221
        %v245 = vsel %vm242, 0.0, %v223
        %v246 = vsel %vm242, 0.0, %v225
        %v247 = vsel %vm242, 0.0, %v227
        %v248 = vsel %vm242, 0.0, %v229
        %v249 = vsel %vm242, 0.0, %v231
        %v250 = vsel %vm242, 0.0, %v233
        %vm251 = vcmask 138240
        %v252 = vsel %vm251, %v243, 0.0
        %v253 = vsel %vm251, %v244, 0.0
        %v254 = vsel %vm251, %v245, 0.0
        %v255 = vsel %vm251, %v246, 0.0
        %v256 = vsel %vm251, %v247, 0.0
        %v257 = vsel %vm251, %v248, 0.0
        %v258 = vsel %vm251, %v249, 0.0
        %v259 = vsel %vm251, %v250, 0.0
        %vm268 = vcmask 1040384
        %v269 = vrot.slane %v252, 7
        %v270 = vrot.slane %v253, 7
        %v271 = vsel %vm268, %v269, %v270
        %v272 = vrot.slane %v254, 7
        %v273 = vrot.slane %v255, 7
        %v274 = vsel %vm268, %v272, %v273
        %v275 = vrot.slane %v256, 7
        %v276 = vrot.slane %v257, 7
        %v277 = vsel %vm268, %v275, %v276
        %v278 = vrot.slane %v258, 7
        %v279 = vrot.slane %v259, 7
        %v280 = vsel %vm268, %v278, %v279
        %v293 = vsel %vm268, 0.0, %v269
        %v294 = vsel %vm268, 0.0, %v272
        %v295 = vsel %vm268, 0.0, %v275
        %v296 = vsel %vm268, 0.0, %v278
        %v297 = vsel %vm268, %v270, 0.0
        %v298 = vsel %vm268, %v273, 0.0
        %v299 = vsel %vm268, %v276, 0.0
        %v300 = vsel %vm268, %v279, 0.0
        %v301 = vcombine.low %v293, %v295
        %v302 = vcombine.high %v293, %v295
        %v304 = vunpack.c.l.s4 1983009808
        %v305 = vunpack.c.0.s8 %v304
        %v306 = vlaneseq
        %v307 = vshrl.u32 %v306, 7
        %v308 = vsub.s32 %v305, %v307
        %v309 = vrot.slane %v301, %v308
        %v311 = vunpack.c.l.s4 1983009808
        %v312 = vunpack.c.0.s8 %v311
        %v313 = vlaneseq
        %v314 = vshrl.u32 %v313, 7
        %v315 = vsub.s32 %v312, %v314
        %v316 = vrot.slane %v302, %v315
        %v317 = vcombine.low %v294, %v296
        %v318 = vcombine.high %v294, %v296
        %v320 = vunpack.c.l.s4 1983009808
        %v321 = vunpack.c.0.s8 %v320
        %v322 = vlaneseq
        %v323 = vshrl.u32 %v322, 7
        %v324 = vsub.s32 %v321, %v323
        %v325 = vrot.slane %v317, %v324
        %v327 = vunpack.c.l.s4 1983009808
        %v328 = vunpack.c.0.s8 %v327
        %v329 = vlaneseq
        %v330 = vshrl.u32 %v329, 7
        %v331 = vsub.s32 %v328, %v330
        %v332 = vrot.slane %v318, %v331
        %v333 = vcombine.low %v309, %v325
        %v334 = vcombine.high %v309, %v325
        %v336 = vunpack.c.l.s4 1934713408
        %v337 = vunpack.c.0.s8 %v336
        %v338 = vlaneseq
        %v339 = vshrl.u32 %v338, 7
        %v340 = vsub.s32 %v337, %v339
        %v341 = vrot.slane %v333, %v340
        %v343 = vunpack.c.l.s4 1934713408
        %v344 = vunpack.c.0.s8 %v343
        %v345 = vlaneseq
        %v346 = vshrl.u32 %v345, 7
        %v347 = vsub.s32 %v344, %v346
        %v348 = vrot.slane %v334, %v347
        %v349 = vcombine.low %v316, %v332
        %v350 = vcombine.high %v316, %v332
        %v352 = vunpack.c.l.s4 1934713408
        %v353 = vunpack.c.0.s8 %v352
        %v354 = vlaneseq
        %v355 = vshrl.u32 %v354, 7
        %v356 = vsub.s32 %v353, %v355
        %v357 = vrot.slane %v349, %v356
        %v359 = vunpack.c.l.s4 1934713408
        %v360 = vunpack.c.0.s8 %v359
        %v361 = vlaneseq
        %v362 = vshrl.u32 %v361, 7
        %v363 = vsub.s32 %v360, %v362
        %v364 = vrot.slane %v350, %v363
        %v365 = vcombine.high %v341, 0.0
        %v366 = vcombine.high %v348, 0.0
        %v367 = vcombine.high %v357, 0.0
        %v368 = vcombine.high %v364, 0.0
        %v369 = vcombine.low %v271, %v277
        %v370 = vcombine.high %v271, %v277
        %v372 = vunpack.c.l.s4 1983009808
        %v373 = vunpack.c.0.s8 %v372
        %v374 = vlaneseq
        %v375 = vshrl.u32 %v374, 7
        %v376 = vsub.s32 %v373, %v375
        %v377 = vrot.slane %v369, %v376
        %v379 = vunpack.c.l.s4 1983009808
        %v380 = vunpack.c.0.s8 %v379
        %v381 = vlaneseq
        %v382 = vshrl.u32 %v381, 7
        %v383 = vsub.s32 %v380, %v382
        %v384 = vrot.slane %v370, %v383
        %v385 = vcombine.low %v274, %v280
        %v386 = vcombine.high %v274, %v280
        %v388 = vunpack.c.l.s4 1983009808
        %v389 = vunpack.c.0.s8 %v388
        %v390 = vlaneseq
        %v391 = vshrl.u32 %v390, 7
        %v392 = vsub.s32 %v389, %v391
        %v393 = vrot.slane %v385, %v392
        %v395 = vunpack.c.l.s4 1983009808
        %v396 = vunpack.c.0.s8 %v395
        %v397 = vlaneseq
        %v398 = vshrl.u32 %v397, 7
        %v399 = vsub.s32 %v396, %v398
        %v400 = vrot.slane %v386, %v399
        %v401 = vcombine.low %v377, %v393
        %v402 = vcombine.high %v377, %v393
        %v404 = vunpack.c.l.s4 1934713408
        %v405 = vunpack.c.0.s8 %v404
        %v406 = vlaneseq
        %v407 = vshrl.u32 %v406, 7
        %v408 = vsub.s32 %v405, %v407
        %v409 = vrot.slane %v401, %v408
        %v411 = vunpack.c.l.s4 1934713408
        %v412 = vunpack.c.0.s8 %v411
        %v413 = vlaneseq
        %v414 = vshrl.u32 %v413, 7
        %v415 = vsub.s32 %v412, %v414
        %v416 = vrot.slane %v402, %v415
        %v417 = vcombine.low %v384, %v400
        %v418 = vcombine.high %v384, %v400
        %v420 = vunpack.c.l.s4 1934713408
        %v421 = vunpack.c.0.s8 %v420
        %v422 = vlaneseq
        %v423 = vshrl.u32 %v422, 7
        %v424 = vsub.s32 %v421, %v423
        %v425 = vrot.slane %v417, %v424
        %v427 = vunpack.c.l.s4 1934713408
        %v428 = vunpack.c.0.s8 %v427
        %v429 = vlaneseq
        %v430 = vshrl.u32 %v429, 7
        %v431 = vsub.s32 %v428, %v430
        %v432 = vrot.slane %v418, %v431
        %v433 = vcombine.high %v409, 0.0
        %v434 = vcombine.high %v416, 0.0
        %v435 = vcombine.high %v425, 0.0
        %v436 = vcombine.high %v432, 0.0
        %v437 = vcombine.low %v297, %v299
        %v439 = vunpack.c.l.s4 1983009808
        %v440 = vunpack.c.0.s8 %v439
        %v441 = vlaneseq
        %v442 = vshrl.u32 %v441, 7
        %v443 = vsub.s32 %v440, %v442
        %v444 = vrot.slane %v437, %v443
        %v445 = vcombine.low %v298, %v300
        %v447 = vunpack.c.l.s4 1983009808
        %v448 = vunpack.c.0.s8 %v447
        %v449 = vlaneseq
        %v450 = vshrl.u32 %v449, 7
        %v451 = vsub.s32 %v448, %v450
        %v452 = vrot.slane %v445, %v451
        %v453 = vcombine.low %v444, %v452
        %v454 = vcombine.high %v444, %v452
        %v456 = vunpack.c.l.s4 1934713408
        %v457 = vunpack.c.0.s8 %v456
        %v458 = vlaneseq
        %v459 = vshrl.u32 %v458, 7
        %v460 = vsub.s32 %v457, %v459
        %v461 = vrot.slane %v453, %v460
        %v462 = vcombine.high %v461, 0.0
        %v464 = vunpack.c.l.s4 1934713408
        %v465 = vunpack.c.0.s8 %v464
        %v466 = vlaneseq
        %v467 = vshrl.u32 %v466, 7
        %v468 = vsub.s32 %v465, %v467
        %v469 = vrot.slane %v454, %v468
        %471 = vrot.lane.b32.xlu0 %v365, 18
        %v472 = vpop.permute.xlu0 %471
        %475 = vrot.lane.b32.xlu0 %v348, 36
        %v476 = vpop.permute.xlu0 %475
        %479 = vrot.lane.b32.xlu0 %v366, 54
        %v480 = vpop.permute.xlu0 %479
        %483 = vrot.lane.b32.xlu0 %v357, 72
        %v484 = vpop.permute.xlu0 %483
        %487 = vrot.lane.b32.xlu0 %v367, 90
        %v488 = vpop.permute.xlu0 %487
        %491 = vrot.lane.b32.xlu0 %v364, 108
        %v492 = vpop.permute.xlu0 %491
        %495 = vrot.lane.b32.xlu0 %v368, 126
        %v496 = vpop.permute.xlu0 %495
        %499 = vrot.lane.b32.xlu0 %v409, 16
        %v500 = vpop.permute.xlu0 %499
        %503 = vrot.lane.b32.xlu0 %v433, 34
        %v504 = vpop.permute.xlu0 %503
        %507 = vrot.lane.b32.xlu0 %v416, 52
        %v508 = vpop.permute.xlu0 %507
        %511 = vrot.lane.b32.xlu0 %v434, 70
        %v512 = vpop.permute.xlu0 %511
        %515 = vrot.lane.b32.xlu0 %v425, 88
        %v516 = vpop.permute.xlu0 %515
        %519 = vrot.lane.b32.xlu0 %v435, 106
        %v520 = vpop.permute.xlu0 %519
        %523 = vrot.lane.b32.xlu0 %v432, 124
        %v524 = vpop.permute.xlu0 %523
        %527 = vrot.lane.b32.xlu0 %v436, 14
        %v528 = vpop.permute.xlu0 %527
        %531 = vrot.lane.b32.xlu0 %v461, 32
        %v532 = vpop.permute.xlu0 %531
        %535 = vrot.lane.b32.xlu0 %v462, 50
        %v536 = vpop.permute.xlu0 %535
        %539 = vrot.lane.b32.xlu0 %v469, 68
        %v540 = vpop.permute.xlu0 %539
        %vm542 = vcmask 146432
        %v543 = vsel %vm542, %v341, %v472
        %vm544 = vcmask 293888
        %v545 = vsel %vm544, %v543, %v476
        %vm546 = vcmask 441344
        %v547 = vsel %vm546, %v545, %v480
        %vm548 = vcmask 588800
        %v549 = vsel %vm548, %v547, %v484
        %vm550 = vcmask 736256
        %v551 = vsel %vm550, %v549, %v488
        %vm552 = vcmask 883712
        %v553 = vsel %vm552, %v551, %v492
        %vm554 = vcmask 1031168
        %v555 = vsel %vm554, %v553, %v496
        %vm556 = vcmask 130048
        %v557 = vsel %vm556, %v496, %v500
        %vm558 = vcmask 277504
        %v559 = vsel %vm558, %v557, %v504
        %vm560 = vcmask 424960
        %v561 = vsel %vm560, %v559, %v508
        %vm562 = vcmask 572416
        %v563 = vsel %vm562, %v561, %v512
        %vm564 = vcmask 719872
        %v565 = vsel %vm564, %v563, %v516
        %vm566 = vcmask 867328
        %v567 = vsel %vm566, %v565, %v520
        %vm568 = vcmask 1014784
        %v569 = vsel %vm568, %v567, %v524
        %vm570 = vcmask 113664
        %v571 = vsel %vm570, %v524, %v528
        %vm572 = vcmask 261120
        %v573 = vsel %vm572, %v571, %v532
        %vm574 = vcmask 408576
        %v575 = vsel %vm574, %v573, %v536
        %vm576 = vcmask 556032
        %v577 = vsel %vm576, %v575, %v540
        %v578 = vld [vmem:[%s1] sm:$0xff]
        %s579 = scalar_lea.vmem %s1, 8
        %v580 = vld [vmem:[%s579] sm:$0xff]
        %584 = vrot.lane.b32.xlu0 %v555, 127
        %v585 = vpop.permute.xlu0 %584
        %586 = vrot.lane.b32.xlu0 %v569, 127
        %v587 = vpop.permute.xlu0 %586
        %588 = vrot.lane.b32.xlu0 %v577, 127
        %v589 = vpop.permute.xlu0 %588
        %vm590 = vcmask 1039360
        %v591 = vsel %vm590, %v585, %v587
        %v592 = vsel %vm590, %v587, %v589
        %vm593 = vcmask 31744
        %v595 = vsel %vm593, %v580, 0
        %vm597 = vcmask 1043456
        %v598 = vsel %vm597, %v591, 0
        %v600 = vsel %vm597, %v592, 0
        %v602 = vsel %vm597, %v589, 0
        %604 = vmatprep.subr.mxu0 0.0
        %605 = vmatpush1.msra.mxu0 0.0
        %606 = vmatprep.subr.mxu0 0.0
        %607 = vmatpush1.msra.mxu0 0.0
        %608 = vmatprep.subr.mxu0 0.0
        %609 = vmatpush1.msra.mxu0 0.0
        %610 = vmatprep.subr.mxu0 0.0
        %611 = vmatpush1.msra.mxu0 0.0
        %612 = vmatprep.subr.mxu0 0.0
        %613 = vmatpush1.msra.mxu0 0.0
        %614 = vmatprep.subr.mxu0 0.0
        %615 = vmatpush1.msra.mxu0 0.0
        %616 = vmatprep.subr.mxu0 0.0
        %617 = vmatpush1.msra.mxu0 0.0
        %618 = vmatprep.subr.mxu0 0.0
        %619 = vmatpush1.msra.mxu0 0.0
        %620 = vmatprep.subr.mxu0 0.0
        %621 = vmatpush1.msra.mxu0 0.0
        %622 = vmatprep.subr.mxu0 0.0
        %623 = vmatpush1.msra.mxu0 0.0
        %624 = vmatprep.subr.mxu0 0.0
        %625 = vmatpush1.msra.mxu0 0.0
        %626 = vmatprep.subr.mxu0 0.0
        %627 = vmatpush1.msra.mxu0 0.0
        %628 = vmatprep.subr.mxu0 0.0
        %629 = vmatpush1.msra.mxu0 0.0
        %630 = vmatprep.subr.mxu0 0.0
        %631 = vmatpush1.msra.mxu0 0.0
        %632 = vmatprep.subr.mxu0 0.0
        %633 = vmatpush1.msra.mxu0 0.0
        %634 = vmatprep.subr.mxu0 %v600
        %635 = vmatpush1.msra.mxu0 %v598
        %636 = vmatprep.subr.mxu0 0.0
        %637 = vmatpush2.msra.mxu0 0.0
        %638 = vmatprep.subr.mxu0 0.0
        %639 = vmatpush2.msra.mxu0 0.0
        %640 = vmatprep.subr.mxu0 0.0
        %641 = vmatpush2.msra.mxu0 0.0
        %642 = vmatprep.subr.mxu0 0.0
        %643 = vmatpush2.msra.mxu0 0.0
        %644 = vmatprep.subr.mxu0 0.0
        %645 = vmatpush2.msra.mxu0 0.0
        %646 = vmatprep.subr.mxu0 0.0
        %647 = vmatpush2.msra.mxu0 0.0
        %648 = vmatprep.subr.mxu0 0.0
        %649 = vmatpush2.msra.mxu0 0.0
        %650 = vmatprep.subr.mxu0 0.0
        %651 = vmatpush2.msra.mxu0 0.0
        %652 = vmatprep.subr.mxu0 0.0
        %653 = vmatpush2.msra.mxu0 0.0
        %654 = vmatprep.subr.mxu0 0.0
        %655 = vmatpush2.msra.mxu0 0.0
        %656 = vmatprep.subr.mxu0 0.0
        %657 = vmatpush2.msra.mxu0 0.0
        %658 = vmatprep.subr.mxu0 0.0
        %659 = vmatpush2.msra.mxu0 0.0
        %660 = vmatprep.subr.mxu0 0.0
        %661 = vmatpush2.msra.mxu0 0.0
        %662 = vmatprep.subr.mxu0 0.0
        %663 = vmatpush2.msra.mxu0 0.0
        %664 = vmatprep.subr.mxu0 0.0
        %665 = vmatpush2.msra.mxu0 0.0
        %666 = vmatprep.subr.mxu0 0.0
        %667 = vmatpush2.msra.mxu0 0.0
        %668 = vmatprep.mubr.f32.mxu0 0.0
        %669 = vmatmul.mubr.f32.gmra.mxu0 %v595
        %v670 = vpop.f32.mrf.mxu0
        %v671 = vadd.f32 0.0, %v670
        %v672 = vpop.f32.mrf.mxu0
        %v673 = vadd.f32 0.0, %v672
        %674 = vdwg.mxu0
        %675 = vmatprep.subr.mxu0 0.0
        %676 = vmatpush1.msra.mxu0 0.0
        %677 = vmatprep.subr.mxu0 0.0
        %678 = vmatpush1.msra.mxu0 0.0
        %679 = vmatprep.subr.mxu0 0.0
        %680 = vmatpush1.msra.mxu0 0.0
        %681 = vmatprep.subr.mxu0 0.0
        %682 = vmatpush1.msra.mxu0 0.0
        %683 = vmatprep.subr.mxu0 0.0
        %684 = vmatpush1.msra.mxu0 0.0
        %685 = vmatprep.subr.mxu0 0.0
        %686 = vmatpush1.msra.mxu0 0.0
        %687 = vmatprep.subr.mxu0 0.0
        %688 = vmatpush1.msra.mxu0 0.0
        %689 = vmatprep.subr.mxu0 0.0
        %690 = vmatpush1.msra.mxu0 0.0
        %691 = vmatprep.subr.mxu0 0.0
        %692 = vmatpush1.msra.mxu0 0.0
        %693 = vmatprep.subr.mxu0 0.0
        %694 = vmatpush1.msra.mxu0 0.0
        %695 = vmatprep.subr.mxu0 0.0
        %696 = vmatpush1.msra.mxu0 0.0
        %697 = vmatprep.subr.mxu0 0.0
        %698 = vmatpush1.msra.mxu0 0.0
        %699 = vmatprep.subr.mxu0 0.0
        %700 = vmatpush1.msra.mxu0 0.0
        %701 = vmatprep.subr.mxu0 0.0
        %702 = vmatpush1.msra.mxu0 0.0
        %703 = vmatprep.subr.mxu0 0.0
        %704 = vmatpush1.msra.mxu0 0.0
        %705 = vmatprep.subr.mxu0 0.0
        %706 = vmatpush1.msra.mxu0 %v602
        %707 = vmatprep.subr.mxu0 0.0
        %708 = vmatpush2.msra.mxu0 0.0
        %709 = vmatprep.subr.mxu0 0.0
        %710 = vmatpush2.msra.mxu0 0.0
        %711 = vmatprep.subr.mxu0 0.0
        %712 = vmatpush2.msra.mxu0 0.0
        %713 = vmatprep.subr.mxu0 0.0
        %714 = vmatpush2.msra.mxu0 0.0
        %715 = vmatprep.subr.mxu0 0.0
        %716 = vmatpush2.msra.mxu0 0.0
        %717 = vmatprep.subr.mxu0 0.0
        %718 = vmatpush2.msra.mxu0 0.0
        %719 = vmatprep.subr.mxu0 0.0
        %720 = vmatpush2.msra.mxu0 0.0
        %721 = vmatprep.subr.mxu0 0.0
        %722 = vmatpush2.msra.mxu0 0.0
        %723 = vmatprep.subr.mxu0 0.0
        %724 = vmatpush2.msra.mxu0 0.0
        %725 = vmatprep.subr.mxu0 0.0
        %726 = vmatpush2.msra.mxu0 0.0
        %727 = vmatprep.subr.mxu0 0.0
        %728 = vmatpush2.msra.mxu0 0.0
        %729 = vmatprep.subr.mxu0 0.0
        %730 = vmatpush2.msra.mxu0 0.0
        %731 = vmatprep.subr.mxu0 0.0
        %732 = vmatpush2.msra.mxu0 0.0
        %733 = vmatprep.subr.mxu0 0.0
        %734 = vmatpush2.msra.mxu0 0.0
        %735 = vmatprep.subr.mxu0 0.0
        %736 = vmatpush2.msra.mxu0 0.0
        %737 = vmatprep.subr.mxu0 0.0
        %738 = vmatpush2.msra.mxu0 0.0
        %739 = vmatprep.mubr.f32.mxu0 0.0
        %740 = vmatmul.mubr.f32.gmra.mxu0 %v595
        %v741 = vpop.f32.mrf.mxu0
        %v742 = vadd.f32 0.0, %v741
        %v743 = vpop.f32.mrf.mxu0
        %744 = vdwg.mxu0
        %v746 = vsel %vm593, %v578, 0
        %v748 = vsel %vm597, %v555, 0
        %v750 = vsel %vm597, %v569, 0
        %v752 = vsel %vm597, %v577, 0
        %754 = vmatprep.subr.mxu0 0.0
        %755 = vmatpush1.msra.mxu0 0.0
        %756 = vmatprep.subr.mxu0 0.0
        %757 = vmatpush1.msra.mxu0 0.0
        %758 = vmatprep.subr.mxu0 0.0
        %759 = vmatpush1.msra.mxu0 0.0
        %760 = vmatprep.subr.mxu0 0.0
        %761 = vmatpush1.msra.mxu0 0.0
        %762 = vmatprep.subr.mxu0 0.0
        %763 = vmatpush1.msra.mxu0 0.0
        %764 = vmatprep.subr.mxu0 0.0
        %765 = vmatpush1.msra.mxu0 0.0
        %766 = vmatprep.subr.mxu0 0.0
        %767 = vmatpush1.msra.mxu0 0.0
        %768 = vmatprep.subr.mxu0 0.0
        %769 = vmatpush1.msra.mxu0 0.0
        %770 = vmatprep.subr.mxu0 0.0
        %771 = vmatpush1.msra.mxu0 0.0
        %772 = vmatprep.subr.mxu0 0.0
        %773 = vmatpush1.msra.mxu0 0.0
        %774 = vmatprep.subr.mxu0 0.0
        %775 = vmatpush1.msra.mxu0 0.0
        %776 = vmatprep.subr.mxu0 0.0
        %777 = vmatpush1.msra.mxu0 0.0
        %778 = vmatprep.subr.mxu0 0.0
        %779 = vmatpush1.msra.mxu0 0.0
        %780 = vmatprep.subr.mxu0 0.0
        %781 = vmatpush1.msra.mxu0 0.0
        %782 = vmatprep.subr.mxu0 0.0
        %783 = vmatpush1.msra.mxu0 0.0
        %784 = vmatprep.subr.mxu0 %v750
        %785 = vmatpush1.msra.mxu0 %v748
        %786 = vmatprep.subr.mxu0 0.0
        %787 = vmatpush2.msra.mxu0 0.0
        %788 = vmatprep.subr.mxu0 0.0
        %789 = vmatpush2.msra.mxu0 0.0
        %790 = vmatprep.subr.mxu0 0.0
        %791 = vmatpush2.msra.mxu0 0.0
        %792 = vmatprep.subr.mxu0 0.0
        %793 = vmatpush2.msra.mxu0 0.0
        %794 = vmatprep.subr.mxu0 0.0
        %795 = vmatpush2.msra.mxu0 0.0
        %796 = vmatprep.subr.mxu0 0.0
        %797 = vmatpush2.msra.mxu0 0.0
        %798 = vmatprep.subr.mxu0 0.0
        %799 = vmatpush2.msra.mxu0 0.0
        %800 = vmatprep.subr.mxu0 0.0
        %801 = vmatpush2.msra.mxu0 0.0
        %802 = vmatprep.subr.mxu0 0.0
        %803 = vmatpush2.msra.mxu0 0.0
        %804 = vmatprep.subr.mxu0 0.0
        %805 = vmatpush2.msra.mxu0 0.0
        %806 = vmatprep.subr.mxu0 0.0
        %807 = vmatpush2.msra.mxu0 0.0
        %808 = vmatprep.subr.mxu0 0.0
        %809 = vmatpush2.msra.mxu0 0.0
        %810 = vmatprep.subr.mxu0 0.0
        %811 = vmatpush2.msra.mxu0 0.0
        %812 = vmatprep.subr.mxu0 0.0
        %813 = vmatpush2.msra.mxu0 0.0
        %814 = vmatprep.subr.mxu0 0.0
        %815 = vmatpush2.msra.mxu0 0.0
        %816 = vmatprep.subr.mxu0 0.0
        %817 = vmatpush2.msra.mxu0 0.0
        %818 = vmatprep.mubr.f32.mxu0 0.0
        %819 = vmatmul.mubr.f32.gmra.mxu0 %v746
        %v820 = vpop.f32.mrf.mxu0
        %v821 = vadd.f32 %v671, %v820
        %v822 = vpop.f32.mrf.mxu0
        %v823 = vadd.f32 %v673, %v822
        %824 = vdwg.mxu0
        %825 = vmatprep.subr.mxu0 0.0
        %826 = vmatpush1.msra.mxu0 0.0
        %827 = vmatprep.subr.mxu0 0.0
        %828 = vmatpush1.msra.mxu0 0.0
        %829 = vmatprep.subr.mxu0 0.0
        %830 = vmatpush1.msra.mxu0 0.0
        %831 = vmatprep.subr.mxu0 0.0
        %832 = vmatpush1.msra.mxu0 0.0
        %833 = vmatprep.subr.mxu0 0.0
        %834 = vmatpush1.msra.mxu0 0.0
        %835 = vmatprep.subr.mxu0 0.0
        %836 = vmatpush1.msra.mxu0 0.0
        %837 = vmatprep.subr.mxu0 0.0
        %838 = vmatpush1.msra.mxu0 0.0
        %839 = vmatprep.subr.mxu0 0.0
        %840 = vmatpush1.msra.mxu0 0.0
        %841 = vmatprep.subr.mxu0 0.0
        %842 = vmatpush1.msra.mxu0 0.0
        %843 = vmatprep.subr.mxu0 0.0
        %844 = vmatpush1.msra.mxu0 0.0
        %845 = vmatprep.subr.mxu0 0.0
        %846 = vmatpush1.msra.mxu0 0.0
        %847 = vmatprep.subr.mxu0 0.0
        %848 = vmatpush1.msra.mxu0 0.0
        %849 = vmatprep.subr.mxu0 0.0
        %850 = vmatpush1.msra.mxu0 0.0
        %851 = vmatprep.subr.mxu0 0.0
        %852 = vmatpush1.msra.mxu0 0.0
        %853 = vmatprep.subr.mxu0 0.0
        %854 = vmatpush1.msra.mxu0 0.0
        %855 = vmatprep.subr.mxu0 0.0
        %856 = vmatpush1.msra.mxu0 %v752
        %857 = vmatprep.subr.mxu0 0.0
        %858 = vmatpush2.msra.mxu0 0.0
        %859 = vmatprep.subr.mxu0 0.0
        %860 = vmatpush2.msra.mxu0 0.0
        %861 = vmatprep.subr.mxu0 0.0
        %862 = vmatpush2.msra.mxu0 0.0
        %863 = vmatprep.subr.mxu0 0.0
        %864 = vmatpush2.msra.mxu0 0.0
        %865 = vmatprep.subr.mxu0 0.0
        %866 = vmatpush2.msra.mxu0 0.0
        %867 = vmatprep.subr.mxu0 0.0
        %868 = vmatpush2.msra.mxu0 0.0
        %869 = vmatprep.subr.mxu0 0.0
        %870 = vmatpush2.msra.mxu0 0.0
        %871 = vmatprep.subr.mxu0 0.0
        %872 = vmatpush2.msra.mxu0 0.0
        %873 = vmatprep.subr.mxu0 0.0
        %874 = vmatpush2.msra.mxu0 0.0
        %875 = vmatprep.subr.mxu0 0.0
        %876 = vmatpush2.msra.mxu0 0.0
        %877 = vmatprep.subr.mxu0 0.0
        %878 = vmatpush2.msra.mxu0 0.0
        %879 = vmatprep.subr.mxu0 0.0
        %880 = vmatpush2.msra.mxu0 0.0
        %881 = vmatprep.subr.mxu0 0.0
        %882 = vmatpush2.msra.mxu0 0.0
        %883 = vmatprep.subr.mxu0 0.0
        %884 = vmatpush2.msra.mxu0 0.0
        %885 = vmatprep.subr.mxu0 0.0
        %886 = vmatpush2.msra.mxu0 0.0
        %887 = vmatprep.subr.mxu0 0.0
        %888 = vmatpush2.msra.mxu0 0.0
        %889 = vmatprep.mubr.f32.mxu0 0.0
        %890 = vmatmul.mubr.f32.gmra.mxu0 %v746
        %v891 = vpop.f32.mrf.mxu0
        %v892 = vadd.f32 %v742, %v891
        %v893 = vpop.f32.mrf.mxu0
        %894 = vdwg.mxu0
        %s895 = scalar_lea.vmem %s1, 16
        %v896 = vld [vmem:[%s895] sm:$0xff]
        %897 = vrot.lane.b32.xlu0 %v555, 126
        %v898 = vpop.permute.xlu0 %897
        %899 = vrot.lane.b32.xlu0 %v569, 126
        %v900 = vpop.permute.xlu0 %899
        %901 = vrot.lane.b32.xlu0 %v577, 126
        %v902 = vpop.permute.xlu0 %901
        %v903 = vsel %vm554, %v898, %v900
        %v904 = vsel %vm554, %v900, %v902
        %v906 = vsel %vm593, %v896, 0
        %v908 = vsel %vm597, %v903, 0
        %v910 = vsel %vm597, %v904, 0
        %v912 = vsel %vm597, %v902, 0
        %914 = vmatprep.subr.mxu0 0.0
        %915 = vmatpush1.msra.mxu0 0.0
        %916 = vmatprep.subr.mxu0 0.0
        %917 = vmatpush1.msra.mxu0 0.0
        %918 = vmatprep.subr.mxu0 0.0
        %919 = vmatpush1.msra.mxu0 0.0
        %920 = vmatprep.subr.mxu0 0.0
        %921 = vmatpush1.msra.mxu0 0.0
        %922 = vmatprep.subr.mxu0 0.0
        %923 = vmatpush1.msra.mxu0 0.0
        %924 = vmatprep.subr.mxu0 0.0
        %925 = vmatpush1.msra.mxu0 0.0
        %926 = vmatprep.subr.mxu0 0.0
        %927 = vmatpush1.msra.mxu0 0.0
        %928 = vmatprep.subr.mxu0 0.0
        %929 = vmatpush1.msra.mxu0 0.0
        %930 = vmatprep.subr.mxu0 0.0
        %931 = vmatpush1.msra.mxu0 0.0
        %932 = vmatprep.subr.mxu0 0.0
        %933 = vmatpush1.msra.mxu0 0.0
        %934 = vmatprep.subr.mxu0 0.0
        %935 = vmatpush1.msra.mxu0 0.0
        %936 = vmatprep.subr.mxu0 0.0
        %937 = vmatpush1.msra.mxu0 0.0
        %938 = vmatprep.subr.mxu0 0.0
        %939 = vmatpush1.msra.mxu0 0.0
        %940 = vmatprep.subr.mxu0 0.0
        %941 = vmatpush1.msra.mxu0 0.0
        %942 = vmatprep.subr.mxu0 0.0
        %943 = vmatpush1.msra.mxu0 0.0
        %944 = vmatprep.subr.mxu0 %v910
        %945 = vmatpush1.msra.mxu0 %v908
        %946 = vmatprep.subr.mxu0 0.0
        %947 = vmatpush2.msra.mxu0 0.0
        %948 = vmatprep.subr.mxu0 0.0
        %949 = vmatpush2.msra.mxu0 0.0
        %950 = vmatprep.subr.mxu0 0.0
        %951 = vmatpush2.msra.mxu0 0.0
        %952 = vmatprep.subr.mxu0 0.0
        %953 = vmatpush2.msra.mxu0 0.0
        %954 = vmatprep.subr.mxu0 0.0
        %955 = vmatpush2.msra.mxu0 0.0
        %956 = vmatprep.subr.mxu0 0.0
        %957 = vmatpush2.msra.mxu0 0.0
        %958 = vmatprep.subr.mxu0 0.0
        %959 = vmatpush2.msra.mxu0 0.0
        %960 = vmatprep.subr.mxu0 0.0
        %961 = vmatpush2.msra.mxu0 0.0
        %962 = vmatprep.subr.mxu0 0.0
        %963 = vmatpush2.msra.mxu0 0.0
        %964 = vmatprep.subr.mxu0 0.0
        %965 = vmatpush2.msra.mxu0 0.0
        %966 = vmatprep.subr.mxu0 0.0
        %967 = vmatpush2.msra.mxu0 0.0
        %968 = vmatprep.subr.mxu0 0.0
        %969 = vmatpush2.msra.mxu0 0.0
        %970 = vmatprep.subr.mxu0 0.0
        %971 = vmatpush2.msra.mxu0 0.0
        %972 = vmatprep.subr.mxu0 0.0
        %973 = vmatpush2.msra.mxu0 0.0
        %974 = vmatprep.subr.mxu0 0.0
        %975 = vmatpush2.msra.mxu0 0.0
        %976 = vmatprep.subr.mxu0 0.0
        %977 = vmatpush2.msra.mxu0 0.0
        %978 = vmatprep.mubr.f32.mxu0 0.0
        %979 = vmatmul.mubr.f32.gmra.mxu0 %v906
        %v980 = vpop.f32.mrf.mxu0
        %v981 = vadd.f32 0.0, %v980
        %v982 = vpop.f32.mrf.mxu0
        %v983 = vadd.f32 0.0, %v982
        %984 = vdwg.mxu0
        %985 = vmatprep.subr.mxu0 0.0
        %986 = vmatpush1.msra.mxu0 0.0
        %987 = vmatprep.subr.mxu0 0.0
        %988 = vmatpush1.msra.mxu0 0.0
        %989 = vmatprep.subr.mxu0 0.0
        %990 = vmatpush1.msra.mxu0 0.0
        %991 = vmatprep.subr.mxu0 0.0
        %992 = vmatpush1.msra.mxu0 0.0
        %993 = vmatprep.subr.mxu0 0.0
        %994 = vmatpush1.msra.mxu0 0.0
        %995 = vmatprep.subr.mxu0 0.0
        %996 = vmatpush1.msra.mxu0 0.0
        %997 = vmatprep.subr.mxu0 0.0
        %998 = vmatpush1.msra.mxu0 0.0
        %999 = vmatprep.subr.mxu0 0.0
        %1000 = vmatpush1.msra.mxu0 0.0
        %1001 = vmatprep.subr.mxu0 0.0
        %1002 = vmatpush1.msra.mxu0 0.0
        %1003 = vmatprep.subr.mxu0 0.0
        %1004 = vmatpush1.msra.mxu0 0.0
        %1005 = vmatprep.subr.mxu0 0.0
        %1006 = vmatpush1.msra.mxu0 0.0
        %1007 = vmatprep.subr.mxu0 0.0
        %1008 = vmatpush1.msra.mxu0 0.0
        %1009 = vmatprep.subr.mxu0 0.0
        %1010 = vmatpush1.msra.mxu0 0.0
        %1011 = vmatprep.subr.mxu0 0.0
        %1012 = vmatpush1.msra.mxu0 0.0
        %1013 = vmatprep.subr.mxu0 0.0
        %1014 = vmatpush1.msra.mxu0 0.0
        %1015 = vmatprep.subr.mxu0 0.0
        %1016 = vmatpush1.msra.mxu0 %v912
        %1017 = vmatprep.subr.mxu0 0.0
        %1018 = vmatpush2.msra.mxu0 0.0
        %1019 = vmatprep.subr.mxu0 0.0
        %1020 = vmatpush2.msra.mxu0 0.0
        %1021 = vmatprep.subr.mxu0 0.0
        %1022 = vmatpush2.msra.mxu0 0.0
        %1023 = vmatprep.subr.mxu0 0.0
        %1024 = vmatpush2.msra.mxu0 0.0
        %1025 = vmatprep.subr.mxu0 0.0
        %1026 = vmatpush2.msra.mxu0 0.0
        %1027 = vmatprep.subr.mxu0 0.0
        %1028 = vmatpush2.msra.mxu0 0.0
        %1029 = vmatprep.subr.mxu0 0.0
        %1030 = vmatpush2.msra.mxu0 0.0
        %1031 = vmatprep.subr.mxu0 0.0
        %1032 = vmatpush2.msra.mxu0 0.0
        %1033 = vmatprep.subr.mxu0 0.0
        %1034 = vmatpush2.msra.mxu0 0.0
        %1035 = vmatprep.subr.mxu0 0.0
        %1036 = vmatpush2.msra.mxu0 0.0
        %1037 = vmatprep.subr.mxu0 0.0
        %1038 = vmatpush2.msra.mxu0 0.0
        %1039 = vmatprep.subr.mxu0 0.0
        %1040 = vmatpush2.msra.mxu0 0.0
        %1041 = vmatprep.subr.mxu0 0.0
        %1042 = vmatpush2.msra.mxu0 0.0
        %1043 = vmatprep.subr.mxu0 0.0
        %1044 = vmatpush2.msra.mxu0 0.0
        %1045 = vmatprep.subr.mxu0 0.0
        %1046 = vmatpush2.msra.mxu0 0.0
        %1047 = vmatprep.subr.mxu0 0.0
        %1048 = vmatpush2.msra.mxu0 0.0
        %1049 = vmatprep.mubr.f32.mxu0 0.0
        %1050 = vmatmul.mubr.f32.gmra.mxu0 %v906
        %v1051 = vpop.f32.mrf.mxu0
        %v1052 = vadd.f32 0.0, %v1051
        %v1053 = vpop.f32.mrf.mxu0
        %1054 = vdwg.mxu0
        %v1055 = vadd.f32 %v821, %v981
        %v1056 = vadd.f32 %v823, %v983
        %v1057 = vadd.f32 %v892, %v1052
        %s1058 = scalar_lea.vmem %s1, 24
        %v1059 = vld [vmem:[%s1058] sm:$0xff]
        %1060 = vrot.lane.b32.xlu0 %v555, 110
        %v1061 = vpop.permute.xlu0 %1060
        %1062 = vrot.lane.b32.xlu0 %v569, 110
        %v1063 = vpop.permute.xlu0 %1062
        %1064 = vrot.lane.b32.xlu0 %v577, 110
        %v1065 = vpop.permute.xlu0 %1064
        %vm1066 = vcmask 900096
        %v1067 = vsel %vm1066, %v1061, %v1063
        %v1068 = vsel %vm1066, %v1063, %v1065
        %v1070 = vsel %vm593, %v1059, 0
        %v1072 = vsel %vm597, %v1067, 0
        %v1074 = vsel %vm597, %v1068, 0
        %v1076 = vsel %vm597, %v1065, 0
        %1078 = vmatprep.subr.mxu0 0.0
        %1079 = vmatpush1.msra.mxu0 0.0
        %1080 = vmatprep.subr.mxu0 0.0
        %1081 = vmatpush1.msra.mxu0 0.0
        %1082 = vmatprep.subr.mxu0 0.0
        %1083 = vmatpush1.msra.mxu0 0.0
        %1084 = vmatprep.subr.mxu0 0.0
        %1085 = vmatpush1.msra.mxu0 0.0
        %1086 = vmatprep.subr.mxu0 0.0
        %1087 = vmatpush1.msra.mxu0 0.0
        %1088 = vmatprep.subr.mxu0 0.0
        %1089 = vmatpush1.msra.mxu0 0.0
        %1090 = vmatprep.subr.mxu0 0.0
        %1091 = vmatpush1.msra.mxu0 0.0
        %1092 = vmatprep.subr.mxu0 0.0
        %1093 = vmatpush1.msra.mxu0 0.0
        %1094 = vmatprep.subr.mxu0 0.0
        %1095 = vmatpush1.msra.mxu0 0.0
        %1096 = vmatprep.subr.mxu0 0.0
        %1097 = vmatpush1.msra.mxu0 0.0
        %1098 = vmatprep.subr.mxu0 0.0
        %1099 = vmatpush1.msra.mxu0 0.0
        %1100 = vmatprep.subr.mxu0 0.0
        %1101 = vmatpush1.msra.mxu0 0.0
        %1102 = vmatprep.subr.mxu0 0.0
        %1103 = vmatpush1.msra.mxu0 0.0
        %1104 = vmatprep.subr.mxu0 0.0
        %1105 = vmatpush1.msra.mxu0 0.0
        %1106 = vmatprep.subr.mxu0 0.0
        %1107 = vmatpush1.msra.mxu0 0.0
        %1108 = vmatprep.subr.mxu0 %v1074
        %1109 = vmatpush1.msra.mxu0 %v1072
        %1110 = vmatprep.subr.mxu0 0.0
        %1111 = vmatpush2.msra.mxu0 0.0
        %1112 = vmatprep.subr.mxu0 0.0
        %1113 = vmatpush2.msra.mxu0 0.0
        %1114 = vmatprep.subr.mxu0 0.0
        %1115 = vmatpush2.msra.mxu0 0.0
        %1116 = vmatprep.subr.mxu0 0.0
        %1117 = vmatpush2.msra.mxu0 0.0
        %1118 = vmatprep.subr.mxu0 0.0
        %1119 = vmatpush2.msra.mxu0 0.0
        %1120 = vmatprep.subr.mxu0 0.0
        %1121 = vmatpush2.msra.mxu0 0.0
        %1122 = vmatprep.subr.mxu0 0.0
        %1123 = vmatpush2.msra.mxu0 0.0
        %1124 = vmatprep.subr.mxu0 0.0
        %1125 = vmatpush2.msra.mxu0 0.0
        %1126 = vmatprep.subr.mxu0 0.0
        %1127 = vmatpush2.msra.mxu0 0.0
        %1128 = vmatprep.subr.mxu0 0.0
        %1129 = vmatpush2.msra.mxu0 0.0
        %1130 = vmatprep.subr.mxu0 0.0
        %1131 = vmatpush2.msra.mxu0 0.0
        %1132 = vmatprep.subr.mxu0 0.0
        %1133 = vmatpush2.msra.mxu0 0.0
        %1134 = vmatprep.subr.mxu0 0.0
        %1135 = vmatpush2.msra.mxu0 0.0
        %1136 = vmatprep.subr.mxu0 0.0
        %1137 = vmatpush2.msra.mxu0 0.0
        %1138 = vmatprep.subr.mxu0 0.0
        %1139 = vmatpush2.msra.mxu0 0.0
        %1140 = vmatprep.subr.mxu0 0.0
        %1141 = vmatpush2.msra.mxu0 0.0
        %1142 = vmatprep.mubr.f32.mxu0 0.0
        %1143 = vmatmul.mubr.f32.gmra.mxu0 %v1070
        %v1144 = vpop.f32.mrf.mxu0
        %v1145 = vadd.f32 0.0, %v1144
        %v1146 = vpop.f32.mrf.mxu0
        %v1147 = vadd.f32 0.0, %v1146
        %1148 = vdwg.mxu0
        %1149 = vmatprep.subr.mxu0 0.0
        %1150 = vmatpush1.msra.mxu0 0.0
        %1151 = vmatprep.subr.mxu0 0.0
        %1152 = vmatpush1.msra.mxu0 0.0
        %1153 = vmatprep.subr.mxu0 0.0
        %1154 = vmatpush1.msra.mxu0 0.0
        %1155 = vmatprep.subr.mxu0 0.0
        %1156 = vmatpush1.msra.mxu0 0.0
        %1157 = vmatprep.subr.mxu0 0.0
        %1158 = vmatpush1.msra.mxu0 0.0
        %1159 = vmatprep.subr.mxu0 0.0
        %1160 = vmatpush1.msra.mxu0 0.0
        %1161 = vmatprep.subr.mxu0 0.0
        %1162 = vmatpush1.msra.mxu0 0.0
        %1163 = vmatprep.subr.mxu0 0.0
        %1164 = vmatpush1.msra.mxu0 0.0
        %1165 = vmatprep.subr.mxu0 0.0
        %1166 = vmatpush1.msra.mxu0 0.0
        %1167 = vmatprep.subr.mxu0 0.0
        %1168 = vmatpush1.msra.mxu0 0.0
        %1169 = vmatprep.subr.mxu0 0.0
        %1170 = vmatpush1.msra.mxu0 0.0
        %1171 = vmatprep.subr.mxu0 0.0
        %1172 = vmatpush1.msra.mxu0 0.0
        %1173 = vmatprep.subr.mxu0 0.0
        %1174 = vmatpush1.msra.mxu0 0.0
        %1175 = vmatprep.subr.mxu0 0.0
        %1176 = vmatpush1.msra.mxu0 0.0
        %1177 = vmatprep.subr.mxu0 0.0
        %1178 = vmatpush1.msra.mxu0 0.0
        %1179 = vmatprep.subr.mxu0 0.0
        %1180 = vmatpush1.msra.mxu0 %v1076
        %1181 = vmatprep.subr.mxu0 0.0
        %1182 = vmatpush2.msra.mxu0 0.0
        %1183 = vmatprep.subr.mxu0 0.0
        %1184 = vmatpush2.msra.mxu0 0.0
        %1185 = vmatprep.subr.mxu0 0.0
        %1186 = vmatpush2.msra.mxu0 0.0
        %1187 = vmatprep.subr.mxu0 0.0
        %1188 = vmatpush2.msra.mxu0 0.0
        %1189 = vmatprep.subr.mxu0 0.0
        %1190 = vmatpush2.msra.mxu0 0.0
        %1191 = vmatprep.subr.mxu0 0.0
        %1192 = vmatpush2.msra.mxu0 0.0
        %1193 = vmatprep.subr.mxu0 0.0
        %1194 = vmatpush2.msra.mxu0 0.0
        %1195 = vmatprep.subr.mxu0 0.0
        %1196 = vmatpush2.msra.mxu0 0.0
        %1197 = vmatprep.subr.mxu0 0.0
        %1198 = vmatpush2.msra.mxu0 0.0
        %1199 = vmatprep.subr.mxu0 0.0
        %1200 = vmatpush2.msra.mxu0 0.0
        %1201 = vmatprep.subr.mxu0 0.0
        %1202 = vmatpush2.msra.mxu0 0.0
        %1203 = vmatprep.subr.mxu0 0.0
        %1204 = vmatpush2.msra.mxu0 0.0
        %1205 = vmatprep.subr.mxu0 0.0
        %1206 = vmatpush2.msra.mxu0 0.0
        %1207 = vmatprep.subr.mxu0 0.0
        %1208 = vmatpush2.msra.mxu0 0.0
        %1209 = vmatprep.subr.mxu0 0.0
        %1210 = vmatpush2.msra.mxu0 0.0
        %1211 = vmatprep.subr.mxu0 0.0
        %1212 = vmatpush2.msra.mxu0 0.0
        %1213 = vmatprep.mubr.f32.mxu0 0.0
        %1214 = vmatmul.mubr.f32.gmra.mxu0 %v1070
        %v1215 = vpop.f32.mrf.mxu0
        %v1216 = vadd.f32 0.0, %v1215
        %v1217 = vpop.f32.mrf.mxu0
        %1218 = vdwg.mxu0
        %v1219 = vadd.f32 %v1055, %v1145
        %v1220 = vadd.f32 %v1056, %v1147
        %v1221 = vadd.f32 %v1057, %v1216
        %s1222 = scalar_lea.vmem %s1, 32
        %v1223 = vld [vmem:[%s1222] sm:$0xff]
        %1224 = vrot.lane.b32.xlu0 %v555, 109
        %v1225 = vpop.permute.xlu0 %1224
        %1226 = vrot.lane.b32.xlu0 %v569, 109
        %v1227 = vpop.permute.xlu0 %1226
        %1228 = vrot.lane.b32.xlu0 %v577, 109
        %v1229 = vpop.permute.xlu0 %1228
        %vm1230 = vcmask 891904
        %v1231 = vsel %vm1230, %v1225, %v1227
        %v1232 = vsel %vm1230, %v1227, %v1229
        %v1234 = vsel %vm593, %v1223, 0
        %v1236 = vsel %vm597, %v1231, 0
        %v1238 = vsel %vm597, %v1232, 0
        %v1240 = vsel %vm597, %v1229, 0
        %1242 = vmatprep.subr.mxu0 0.0
        %1243 = vmatpush1.msra.mxu0 0.0
        %1244 = vmatprep.subr.mxu0 0.0
        %1245 = vmatpush1.msra.mxu0 0.0
        %1246 = vmatprep.subr.mxu0 0.0
        %1247 = vmatpush1.msra.mxu0 0.0
        %1248 = vmatprep.subr.mxu0 0.0
        %1249 = vmatpush1.msra.mxu0 0.0
        %1250 = vmatprep.subr.mxu0 0.0
        %1251 = vmatpush1.msra.mxu0 0.0
        %1252 = vmatprep.subr.mxu0 0.0
        %1253 = vmatpush1.msra.mxu0 0.0
        %1254 = vmatprep.subr.mxu0 0.0
        %1255 = vmatpush1.msra.mxu0 0.0
        %1256 = vmatprep.subr.mxu0 0.0
        %1257 = vmatpush1.msra.mxu0 0.0
        %1258 = vmatprep.subr.mxu0 0.0
        %1259 = vmatpush1.msra.mxu0 0.0
        %1260 = vmatprep.subr.mxu0 0.0
        %1261 = vmatpush1.msra.mxu0 0.0
        %1262 = vmatprep.subr.mxu0 0.0
        %1263 = vmatpush1.msra.mxu0 0.0
        %1264 = vmatprep.subr.mxu0 0.0
        %1265 = vmatpush1.msra.mxu0 0.0
        %1266 = vmatprep.subr.mxu0 0.0
        %1267 = vmatpush1.msra.mxu0 0.0
        %1268 = vmatprep.subr.mxu0 0.0
        %1269 = vmatpush1.msra.mxu0 0.0
        %1270 = vmatprep.subr.mxu0 0.0
        %1271 = vmatpush1.msra.mxu0 0.0
        %1272 = vmatprep.subr.mxu0 %v1238
        %1273 = vmatpush1.msra.mxu0 %v1236
        %1274 = vmatprep.subr.mxu0 0.0
        %1275 = vmatpush2.msra.mxu0 0.0
        %1276 = vmatprep.subr.mxu0 0.0
        %1277 = vmatpush2.msra.mxu0 0.0
        %1278 = vmatprep.subr.mxu0 0.0
        %1279 = vmatpush2.msra.mxu0 0.0
        %1280 = vmatprep.subr.mxu0 0.0
        %1281 = vmatpush2.msra.mxu0 0.0
        %1282 = vmatprep.subr.mxu0 0.0
        %1283 = vmatpush2.msra.mxu0 0.0
        %1284 = vmatprep.subr.mxu0 0.0
        %1285 = vmatpush2.msra.mxu0 0.0
        %1286 = vmatprep.subr.mxu0 0.0
        %1287 = vmatpush2.msra.mxu0 0.0
        %1288 = vmatprep.subr.mxu0 0.0
        %1289 = vmatpush2.msra.mxu0 0.0
        %1290 = vmatprep.subr.mxu0 0.0
        %1291 = vmatpush2.msra.mxu0 0.0
        %1292 = vmatprep.subr.mxu0 0.0
        %1293 = vmatpush2.msra.mxu0 0.0
        %1294 = vmatprep.subr.mxu0 0.0
        %1295 = vmatpush2.msra.mxu0 0.0
        %1296 = vmatprep.subr.mxu0 0.0
        %1297 = vmatpush2.msra.mxu0 0.0
        %1298 = vmatprep.subr.mxu0 0.0
        %1299 = vmatpush2.msra.mxu0 0.0
        %1300 = vmatprep.subr.mxu0 0.0
        %1301 = vmatpush2.msra.mxu0 0.0
        %1302 = vmatprep.subr.mxu0 0.0
        %1303 = vmatpush2.msra.mxu0 0.0
        %1304 = vmatprep.subr.mxu0 0.0
        %1305 = vmatpush2.msra.mxu0 0.0
        %1306 = vmatprep.mubr.f32.mxu0 0.0
        %1307 = vmatmul.mubr.f32.gmra.mxu0 %v1234
        %v1308 = vpop.f32.mrf.mxu0
        %v1309 = vadd.f32 0.0, %v1308
        %v1310 = vpop.f32.mrf.mxu0
        %v1311 = vadd.f32 0.0, %v1310
        %1312 = vdwg.mxu0
        %1313 = vmatprep.subr.mxu0 0.0
        %1314 = vmatpush1.msra.mxu0 0.0
        %1315 = vmatprep.subr.mxu0 0.0
        %1316 = vmatpush1.msra.mxu0 0.0
        %1317 = vmatprep.subr.mxu0 0.0
        %1318 = vmatpush1.msra.mxu0 0.0
        %1319 = vmatprep.subr.mxu0 0.0
        %1320 = vmatpush1.msra.mxu0 0.0
        %1321 = vmatprep.subr.mxu0 0.0
        %1322 = vmatpush1.msra.mxu0 0.0
        %1323 = vmatprep.subr.mxu0 0.0
        %1324 = vmatpush1.msra.mxu0 0.0
        %1325 = vmatprep.subr.mxu0 0.0
        %1326 = vmatpush1.msra.mxu0 0.0
        %1327 = vmatprep.subr.mxu0 0.0
        %1328 = vmatpush1.msra.mxu0 0.0
        %1329 = vmatprep.subr.mxu0 0.0
        %1330 = vmatpush1.msra.mxu0 0.0
        %1331 = vmatprep.subr.mxu0 0.0
        %1332 = vmatpush1.msra.mxu0 0.0
        %1333 = vmatprep.subr.mxu0 0.0
        %1334 = vmatpush1.msra.mxu0 0.0
        %1335 = vmatprep.subr.mxu0 0.0
        %1336 = vmatpush1.msra.mxu0 0.0
        %1337 = vmatprep.subr.mxu0 0.0
        %1338 = vmatpush1.msra.mxu0 0.0
        %1339 = vmatprep.subr.mxu0 0.0
        %1340 = vmatpush1.msra.mxu0 0.0
        %1341 = vmatprep.subr.mxu0 0.0
        %1342 = vmatpush1.msra.mxu0 0.0
        %1343 = vmatprep.subr.mxu0 0.0
        %1344 = vmatpush1.msra.mxu0 %v1240
        %1345 = vmatprep.subr.mxu0 0.0
        %1346 = vmatpush2.msra.mxu0 0.0
        %1347 = vmatprep.subr.mxu0 0.0
        %1348 = vmatpush2.msra.mxu0 0.0
        %1349 = vmatprep.subr.mxu0 0.0
        %1350 = vmatpush2.msra.mxu0 0.0
        %1351 = vmatprep.subr.mxu0 0.0
        %1352 = vmatpush2.msra.mxu0 0.0
        %1353 = vmatprep.subr.mxu0 0.0
        %1354 = vmatpush2.msra.mxu0 0.0
        %1355 = vmatprep.subr.mxu0 0.0
        %1356 = vmatpush2.msra.mxu0 0.0
        %1357 = vmatprep.subr.mxu0 0.0
        %1358 = vmatpush2.msra.mxu0 0.0
        %1359 = vmatprep.subr.mxu0 0.0
        %1360 = vmatpush2.msra.mxu0 0.0
        %1361 = vmatprep.subr.mxu0 0.0
        %1362 = vmatpush2.msra.mxu0 0.0
        %1363 = vmatprep.subr.mxu0 0.0
        %1364 = vmatpush2.msra.mxu0 0.0
        %1365 = vmatprep.subr.mxu0 0.0
        %1366 = vmatpush2.msra.mxu0 0.0
        %1367 = vmatprep.subr.mxu0 0.0
        %1368 = vmatpush2.msra.mxu0 0.0
        %1369 = vmatprep.subr.mxu0 0.0
        %1370 = vmatpush2.msra.mxu0 0.0
        %1371 = vmatprep.subr.mxu0 0.0
        %1372 = vmatpush2.msra.mxu0 0.0
        %1373 = vmatprep.subr.mxu0 0.0
        %1374 = vmatpush2.msra.mxu0 0.0
        %1375 = vmatprep.subr.mxu0 0.0
        %1376 = vmatpush2.msra.mxu0 0.0
        %1377 = vmatprep.mubr.f32.mxu0 0.0
        %1378 = vmatmul.mubr.f32.gmra.mxu0 %v1234
        %v1379 = vpop.f32.mrf.mxu0
        %v1380 = vadd.f32 0.0, %v1379
        %v1381 = vpop.f32.mrf.mxu0
        %1382 = vdwg.mxu0
        %v1383 = vadd.f32 %v1219, %v1309
        %v1384 = vadd.f32 %v1220, %v1311
        %v1385 = vadd.f32 %v1221, %v1380
        %s1386 = scalar_lea.vmem %s1, 40
        %v1387 = vld [vmem:[%s1386] sm:$0xff]
        %1388 = vrot.lane.b32.xlu0 %v555, 108
        %v1389 = vpop.permute.xlu0 %1388
        %1390 = vrot.lane.b32.xlu0 %v569, 108
        %v1391 = vpop.permute.xlu0 %1390
        %1392 = vrot.lane.b32.xlu0 %v577, 108
        %v1393 = vpop.permute.xlu0 %1392
        %v1394 = vsel %vm552, %v1389, %v1391
        %v1395 = vsel %vm552, %v1391, %v1393
        %v1397 = vsel %vm593, %v1387, 0
        %v1399 = vsel %vm597, %v1394, 0
        %v1401 = vsel %vm597, %v1395, 0
        %v1403 = vsel %vm597, %v1393, 0
        %1405 = vmatprep.subr.mxu0 0.0
        %1406 = vmatpush1.msra.mxu0 0.0
        %1407 = vmatprep.subr.mxu0 0.0
        %1408 = vmatpush1.msra.mxu0 0.0
        %1409 = vmatprep.subr.mxu0 0.0
        %1410 = vmatpush1.msra.mxu0 0.0
        %1411 = vmatprep.subr.mxu0 0.0
        %1412 = vmatpush1.msra.mxu0 0.0
        %1413 = vmatprep.subr.mxu0 0.0
        %1414 = vmatpush1.msra.mxu0 0.0
        %1415 = vmatprep.subr.mxu0 0.0
        %1416 = vmatpush1.msra.mxu0 0.0
        %1417 = vmatprep.subr.mxu0 0.0
        %1418 = vmatpush1.msra.mxu0 0.0
        %1419 = vmatprep.subr.mxu0 0.0
        %1420 = vmatpush1.msra.mxu0 0.0
        %1421 = vmatprep.subr.mxu0 0.0
        %1422 = vmatpush1.msra.mxu0 0.0
        %1423 = vmatprep.subr.mxu0 0.0
        %1424 = vmatpush1.msra.mxu0 0.0
        %1425 = vmatprep.subr.mxu0 0.0
        %1426 = vmatpush1.msra.mxu0 0.0
        %1427 = vmatprep.subr.mxu0 0.0
        %1428 = vmatpush1.msra.mxu0 0.0
        %1429 = vmatprep.subr.mxu0 0.0
        %1430 = vmatpush1.msra.mxu0 0.0
        %1431 = vmatprep.subr.mxu0 0.0
        %1432 = vmatpush1.msra.mxu0 0.0
        %1433 = vmatprep.subr.mxu0 0.0
        %1434 = vmatpush1.msra.mxu0 0.0
        %1435 = vmatprep.subr.mxu0 %v1401
        %1436 = vmatpush1.msra.mxu0 %v1399
        %1437 = vmatprep.subr.mxu0 0.0
        %1438 = vmatpush2.msra.mxu0 0.0
        %1439 = vmatprep.subr.mxu0 0.0
        %1440 = vmatpush2.msra.mxu0 0.0
        %1441 = vmatprep.subr.mxu0 0.0
        %1442 = vmatpush2.msra.mxu0 0.0
        %1443 = vmatprep.subr.mxu0 0.0
        %1444 = vmatpush2.msra.mxu0 0.0
        %1445 = vmatprep.subr.mxu0 0.0
        %1446 = vmatpush2.msra.mxu0 0.0
        %1447 = vmatprep.subr.mxu0 0.0
        %1448 = vmatpush2.msra.mxu0 0.0
        %1449 = vmatprep.subr.mxu0 0.0
        %1450 = vmatpush2.msra.mxu0 0.0
        %1451 = vmatprep.subr.mxu0 0.0
        %1452 = vmatpush2.msra.mxu0 0.0
        %1453 = vmatprep.subr.mxu0 0.0
        %1454 = vmatpush2.msra.mxu0 0.0
        %1455 = vmatprep.subr.mxu0 0.0
        %1456 = vmatpush2.msra.mxu0 0.0
        %1457 = vmatprep.subr.mxu0 0.0
        %1458 = vmatpush2.msra.mxu0 0.0
        %1459 = vmatprep.subr.mxu0 0.0
        %1460 = vmatpush2.msra.mxu0 0.0
        %1461 = vmatprep.subr.mxu0 0.0
        %1462 = vmatpush2.msra.mxu0 0.0
        %1463 = vmatprep.subr.mxu0 0.0
        %1464 = vmatpush2.msra.mxu0 0.0
        %1465 = vmatprep.subr.mxu0 0.0
        %1466 = vmatpush2.msra.mxu0 0.0
        %1467 = vmatprep.subr.mxu0 0.0
        %1468 = vmatpush2.msra.mxu0 0.0
        %1469 = vmatprep.mubr.f32.mxu0 0.0
        %1470 = vmatmul.mubr.f32.gmra.mxu0 %v1397
        %v1471 = vpop.f32.mrf.mxu0
        %v1472 = vadd.f32 0.0, %v1471
        %v1473 = vpop.f32.mrf.mxu0
        %v1474 = vadd.f32 0.0, %v1473
        %1475 = vdwg.mxu0
        %1476 = vmatprep.subr.mxu0 0.0
        %1477 = vmatpush1.msra.mxu0 0.0
        %1478 = vmatprep.subr.mxu0 0.0
        %1479 = vmatpush1.msra.mxu0 0.0
        %1480 = vmatprep.subr.mxu0 0.0
        %1481 = vmatpush1.msra.mxu0 0.0
        %1482 = vmatprep.subr.mxu0 0.0
        %1483 = vmatpush1.msra.mxu0 0.0
        %1484 = vmatprep.subr.mxu0 0.0
        %1485 = vmatpush1.msra.mxu0 0.0
        %1486 = vmatprep.subr.mxu0 0.0
        %1487 = vmatpush1.msra.mxu0 0.0
        %1488 = vmatprep.subr.mxu0 0.0
        %1489 = vmatpush1.msra.mxu0 0.0
        %1490 = vmatprep.subr.mxu0 0.0
        %1491 = vmatpush1.msra.mxu0 0.0
        %1492 = vmatprep.subr.mxu0 0.0
        %1493 = vmatpush1.msra.mxu0 0.0
        %1494 = vmatprep.subr.mxu0 0.0
        %1495 = vmatpush1.msra.mxu0 0.0
        %1496 = vmatprep.subr.mxu0 0.0
        %1497 = vmatpush1.msra.mxu0 0.0
        %1498 = vmatprep.subr.mxu0 0.0
        %1499 = vmatpush1.msra.mxu0 0.0
        %1500 = vmatprep.subr.mxu0 0.0
        %1501 = vmatpush1.msra.mxu0 0.0
        %1502 = vmatprep.subr.mxu0 0.0
        %1503 = vmatpush1.msra.mxu0 0.0
        %1504 = vmatprep.subr.mxu0 0.0
        %1505 = vmatpush1.msra.mxu0 0.0
        %1506 = vmatprep.subr.mxu0 0.0
        %1507 = vmatpush1.msra.mxu0 %v1403
        %1508 = vmatprep.subr.mxu0 0.0
        %1509 = vmatpush2.msra.mxu0 0.0
        %1510 = vmatprep.subr.mxu0 0.0
        %1511 = vmatpush2.msra.mxu0 0.0
        %1512 = vmatprep.subr.mxu0 0.0
        %1513 = vmatpush2.msra.mxu0 0.0
        %1514 = vmatprep.subr.mxu0 0.0
        %1515 = vmatpush2.msra.mxu0 0.0
        %1516 = vmatprep.subr.mxu0 0.0
        %1517 = vmatpush2.msra.mxu0 0.0
        %1518 = vmatprep.subr.mxu0 0.0
        %1519 = vmatpush2.msra.mxu0 0.0
        %1520 = vmatprep.subr.mxu0 0.0
        %1521 = vmatpush2.msra.mxu0 0.0
        %1522 = vmatprep.subr.mxu0 0.0
        %1523 = vmatpush2.msra.mxu0 0.0
        %1524 = vmatprep.subr.mxu0 0.0
        %1525 = vmatpush2.msra.mxu0 0.0
        %1526 = vmatprep.subr.mxu0 0.0
        %1527 = vmatpush2.msra.mxu0 0.0
        %1528 = vmatprep.subr.mxu0 0.0
        %1529 = vmatpush2.msra.mxu0 0.0
        %1530 = vmatprep.subr.mxu0 0.0
        %1531 = vmatpush2.msra.mxu0 0.0
        %1532 = vmatprep.subr.mxu0 0.0
        %1533 = vmatpush2.msra.mxu0 0.0
        %1534 = vmatprep.subr.mxu0 0.0
        %1535 = vmatpush2.msra.mxu0 0.0
        %1536 = vmatprep.subr.mxu0 0.0
        %1537 = vmatpush2.msra.mxu0 0.0
        %1538 = vmatprep.subr.mxu0 0.0
        %1539 = vmatpush2.msra.mxu0 0.0
        %1540 = vmatprep.mubr.f32.mxu0 0.0
        %1541 = vmatmul.mubr.f32.gmra.mxu0 %v1397
        %v1542 = vpop.f32.mrf.mxu0
        %v1543 = vadd.f32 0.0, %v1542
        %v1544 = vpop.f32.mrf.mxu0
        %1545 = vdwg.mxu0
        %v1546 = vadd.f32 %v1383, %v1472
        %v1547 = vadd.f32 %v1384, %v1474
        %v1548 = vadd.f32 %v1385, %v1543
        %s1549 = scalar_lea.vmem %s1, 48
        %v1550 = vld [vmem:[%s1549] sm:$0xff]
        %1551 = vrot.lane.b32.xlu0 %v555, 92
        %v1552 = vpop.permute.xlu0 %1551
        %1553 = vrot.lane.b32.xlu0 %v569, 92
        %v1554 = vpop.permute.xlu0 %1553
        %1555 = vrot.lane.b32.xlu0 %v577, 92
        %v1556 = vpop.permute.xlu0 %1555
        %vm1557 = vcmask 752640
        %v1558 = vsel %vm1557, %v1552, %v1554
        %v1559 = vsel %vm1557, %v1554, %v1556
        %v1561 = vsel %vm593, %v1550, 0
        %v1563 = vsel %vm597, %v1558, 0
        %v1565 = vsel %vm597, %v1559, 0
        %v1567 = vsel %vm597, %v1556, 0
        %1569 = vmatprep.subr.mxu0 0.0
        %1570 = vmatpush1.msra.mxu0 0.0
        %1571 = vmatprep.subr.mxu0 0.0
        %1572 = vmatpush1.msra.mxu0 0.0
        %1573 = vmatprep.subr.mxu0 0.0
        %1574 = vmatpush1.msra.mxu0 0.0
        %1575 = vmatprep.subr.mxu0 0.0
        %1576 = vmatpush1.msra.mxu0 0.0
        %1577 = vmatprep.subr.mxu0 0.0
        %1578 = vmatpush1.msra.mxu0 0.0
        %1579 = vmatprep.subr.mxu0 0.0
        %1580 = vmatpush1.msra.mxu0 0.0
        %1581 = vmatprep.subr.mxu0 0.0
        %1582 = vmatpush1.msra.mxu0 0.0
        %1583 = vmatprep.subr.mxu0 0.0
        %1584 = vmatpush1.msra.mxu0 0.0
        %1585 = vmatprep.subr.mxu0 0.0
        %1586 = vmatpush1.msra.mxu0 0.0
        %1587 = vmatprep.subr.mxu0 0.0
        %1588 = vmatpush1.msra.mxu0 0.0
        %1589 = vmatprep.subr.mxu0 0.0
        %1590 = vmatpush1.msra.mxu0 0.0
        %1591 = vmatprep.subr.mxu0 0.0
        %1592 = vmatpush1.msra.mxu0 0.0
        %1593 = vmatprep.subr.mxu0 0.0
        %1594 = vmatpush1.msra.mxu0 0.0
        %1595 = vmatprep.subr.mxu0 0.0
        %1596 = vmatpush1.msra.mxu0 0.0
        %1597 = vmatprep.subr.mxu0 0.0
        %1598 = vmatpush1.msra.mxu0 0.0
        %1599 = vmatprep.subr.mxu0 %v1565
        %1600 = vmatpush1.msra.mxu0 %v1563
        %1601 = vmatprep.subr.mxu0 0.0
        %1602 = vmatpush2.msra.mxu0 0.0
        %1603 = vmatprep.subr.mxu0 0.0
        %1604 = vmatpush2.msra.mxu0 0.0
        %1605 = vmatprep.subr.mxu0 0.0
        %1606 = vmatpush2.msra.mxu0 0.0
        %1607 = vmatprep.subr.mxu0 0.0
        %1608 = vmatpush2.msra.mxu0 0.0
        %1609 = vmatprep.subr.mxu0 0.0
        %1610 = vmatpush2.msra.mxu0 0.0
        %1611 = vmatprep.subr.mxu0 0.0
        %1612 = vmatpush2.msra.mxu0 0.0
        %1613 = vmatprep.subr.mxu0 0.0
        %1614 = vmatpush2.msra.mxu0 0.0
        %1615 = vmatprep.subr.mxu0 0.0
        %1616 = vmatpush2.msra.mxu0 0.0
        %1617 = vmatprep.subr.mxu0 0.0
        %1618 = vmatpush2.msra.mxu0 0.0
        %1619 = vmatprep.subr.mxu0 0.0
        %1620 = vmatpush2.msra.mxu0 0.0
        %1621 = vmatprep.subr.mxu0 0.0
        %1622 = vmatpush2.msra.mxu0 0.0
        %1623 = vmatprep.subr.mxu0 0.0
        %1624 = vmatpush2.msra.mxu0 0.0
        %1625 = vmatprep.subr.mxu0 0.0
        %1626 = vmatpush2.msra.mxu0 0.0
        %1627 = vmatprep.subr.mxu0 0.0
        %1628 = vmatpush2.msra.mxu0 0.0
        %1629 = vmatprep.subr.mxu0 0.0
        %1630 = vmatpush2.msra.mxu0 0.0
        %1631 = vmatprep.subr.mxu0 0.0
        %1632 = vmatpush2.msra.mxu0 0.0
        %1633 = vmatprep.mubr.f32.mxu0 0.0
        %1634 = vmatmul.mubr.f32.gmra.mxu0 %v1561
        %v1635 = vpop.f32.mrf.mxu0
        %v1636 = vadd.f32 0.0, %v1635
        %v1637 = vpop.f32.mrf.mxu0
        %v1638 = vadd.f32 0.0, %v1637
        %1639 = vdwg.mxu0
        %1640 = vmatprep.subr.mxu0 0.0
        %1641 = vmatpush1.msra.mxu0 0.0
        %1642 = vmatprep.subr.mxu0 0.0
        %1643 = vmatpush1.msra.mxu0 0.0
        %1644 = vmatprep.subr.mxu0 0.0
        %1645 = vmatpush1.msra.mxu0 0.0
        %1646 = vmatprep.subr.mxu0 0.0
        %1647 = vmatpush1.msra.mxu0 0.0
        %1648 = vmatprep.subr.mxu0 0.0
        %1649 = vmatpush1.msra.mxu0 0.0
        %1650 = vmatprep.subr.mxu0 0.0
        %1651 = vmatpush1.msra.mxu0 0.0
        %1652 = vmatprep.subr.mxu0 0.0
        %1653 = vmatpush1.msra.mxu0 0.0
        %1654 = vmatprep.subr.mxu0 0.0
        %1655 = vmatpush1.msra.mxu0 0.0
        %1656 = vmatprep.subr.mxu0 0.0
        %1657 = vmatpush1.msra.mxu0 0.0
        %1658 = vmatprep.subr.mxu0 0.0
        %1659 = vmatpush1.msra.mxu0 0.0
        %1660 = vmatprep.subr.mxu0 0.0
        %1661 = vmatpush1.msra.mxu0 0.0
        %1662 = vmatprep.subr.mxu0 0.0
        %1663 = vmatpush1.msra.mxu0 0.0
        %1664 = vmatprep.subr.mxu0 0.0
        %1665 = vmatpush1.msra.mxu0 0.0
        %1666 = vmatprep.subr.mxu0 0.0
        %1667 = vmatpush1.msra.mxu0 0.0
        %1668 = vmatprep.subr.mxu0 0.0
        %1669 = vmatpush1.msra.mxu0 0.0
        %1670 = vmatprep.subr.mxu0 0.0
        %1671 = vmatpush1.msra.mxu0 %v1567
        %1672 = vmatprep.subr.mxu0 0.0
        %1673 = vmatpush2.msra.mxu0 0.0
        %1674 = vmatprep.subr.mxu0 0.0
        %1675 = vmatpush2.msra.mxu0 0.0
        %1676 = vmatprep.subr.mxu0 0.0
        %1677 = vmatpush2.msra.mxu0 0.0
        %1678 = vmatprep.subr.mxu0 0.0
        %1679 = vmatpush2.msra.mxu0 0.0
        %1680 = vmatprep.subr.mxu0 0.0
        %1681 = vmatpush2.msra.mxu0 0.0
        %1682 = vmatprep.subr.mxu0 0.0
        %1683 = vmatpush2.msra.mxu0 0.0
        %1684 = vmatprep.subr.mxu0 0.0
        %1685 = vmatpush2.msra.mxu0 0.0
        %1686 = vmatprep.subr.mxu0 0.0
        %1687 = vmatpush2.msra.mxu0 0.0
        %1688 = vmatprep.subr.mxu0 0.0
        %1689 = vmatpush2.msra.mxu0 0.0
        %1690 = vmatprep.subr.mxu0 0.0
        %1691 = vmatpush2.msra.mxu0 0.0
        %1692 = vmatprep.subr.mxu0 0.0
        %1693 = vmatpush2.msra.mxu0 0.0
        %1694 = vmatprep.subr.mxu0 0.0
        %1695 = vmatpush2.msra.mxu0 0.0
        %1696 = vmatprep.subr.mxu0 0.0
        %1697 = vmatpush2.msra.mxu0 0.0
        %1698 = vmatprep.subr.mxu0 0.0
        %1699 = vmatpush2.msra.mxu0 0.0
        %1700 = vmatprep.subr.mxu0 0.0
        %1701 = vmatpush2.msra.mxu0 0.0
        %1702 = vmatprep.subr.mxu0 0.0
        %1703 = vmatpush2.msra.mxu0 0.0
        %1704 = vmatprep.mubr.f32.mxu0 0.0
        %1705 = vmatmul.mubr.f32.gmra.mxu0 %v1561
        %v1706 = vpop.f32.mrf.mxu0
        %v1707 = vadd.f32 0.0, %v1706
        %v1708 = vpop.f32.mrf.mxu0
        %1709 = vdwg.mxu0
        %v1710 = vadd.f32 %v1546, %v1636
        %v1711 = vadd.f32 %v1547, %v1638
        %v1712 = vadd.f32 %v1548, %v1707
        %s1713 = scalar_lea.vmem %s1, 56
        %v1714 = vld [vmem:[%s1713] sm:$0xff]
        %1715 = vrot.lane.b32.xlu0 %v555, 91
        %v1716 = vpop.permute.xlu0 %1715
        %1717 = vrot.lane.b32.xlu0 %v569, 91
        %v1718 = vpop.permute.xlu0 %1717
        %1719 = vrot.lane.b32.xlu0 %v577, 91
        %v1720 = vpop.permute.xlu0 %1719
        %vm1721 = vcmask 744448
        %v1722 = vsel %vm1721, %v1716, %v1718
        %v1723 = vsel %vm1721, %v1718, %v1720
        %v1725 = vsel %vm593, %v1714, 0
        %v1727 = vsel %vm597, %v1722, 0
        %v1729 = vsel %vm597, %v1723, 0
        %v1731 = vsel %vm597, %v1720, 0
        %1733 = vmatprep.subr.mxu0 0.0
        %1734 = vmatpush1.msra.mxu0 0.0
        %1735 = vmatprep.subr.mxu0 0.0
        %1736 = vmatpush1.msra.mxu0 0.0
        %1737 = vmatprep.subr.mxu0 0.0
        %1738 = vmatpush1.msra.mxu0 0.0
        %1739 = vmatprep.subr.mxu0 0.0
        %1740 = vmatpush1.msra.mxu0 0.0
        %1741 = vmatprep.subr.mxu0 0.0
        %1742 = vmatpush1.msra.mxu0 0.0
        %1743 = vmatprep.subr.mxu0 0.0
        %1744 = vmatpush1.msra.mxu0 0.0
        %1745 = vmatprep.subr.mxu0 0.0
        %1746 = vmatpush1.msra.mxu0 0.0
        %1747 = vmatprep.subr.mxu0 0.0
        %1748 = vmatpush1.msra.mxu0 0.0
        %1749 = vmatprep.subr.mxu0 0.0
        %1750 = vmatpush1.msra.mxu0 0.0
        %1751 = vmatprep.subr.mxu0 0.0
        %1752 = vmatpush1.msra.mxu0 0.0
        %1753 = vmatprep.subr.mxu0 0.0
        %1754 = vmatpush1.msra.mxu0 0.0
        %1755 = vmatprep.subr.mxu0 0.0
        %1756 = vmatpush1.msra.mxu0 0.0
        %1757 = vmatprep.subr.mxu0 0.0
        %1758 = vmatpush1.msra.mxu0 0.0
        %1759 = vmatprep.subr.mxu0 0.0
        %1760 = vmatpush1.msra.mxu0 0.0
        %1761 = vmatprep.subr.mxu0 0.0
        %1762 = vmatpush1.msra.mxu0 0.0
        %1763 = vmatprep.subr.mxu0 %v1729
        %1764 = vmatpush1.msra.mxu0 %v1727
        %1765 = vmatprep.subr.mxu0 0.0
        %1766 = vmatpush2.msra.mxu0 0.0
        %1767 = vmatprep.subr.mxu0 0.0
        %1768 = vmatpush2.msra.mxu0 0.0
        %1769 = vmatprep.subr.mxu0 0.0
        %1770 = vmatpush2.msra.mxu0 0.0
        %1771 = vmatprep.subr.mxu0 0.0
        %1772 = vmatpush2.msra.mxu0 0.0
        %1773 = vmatprep.subr.mxu0 0.0
        %1774 = vmatpush2.msra.mxu0 0.0
        %1775 = vmatprep.subr.mxu0 0.0
        %1776 = vmatpush2.msra.mxu0 0.0
        %1777 = vmatprep.subr.mxu0 0.0
        %1778 = vmatpush2.msra.mxu0 0.0
        %1779 = vmatprep.subr.mxu0 0.0
        %1780 = vmatpush2.msra.mxu0 0.0
        %1781 = vmatprep.subr.mxu0 0.0
        %1782 = vmatpush2.msra.mxu0 0.0
        %1783 = vmatprep.subr.mxu0 0.0
        %1784 = vmatpush2.msra.mxu0 0.0
        %1785 = vmatprep.subr.mxu0 0.0
        %1786 = vmatpush2.msra.mxu0 0.0
        %1787 = vmatprep.subr.mxu0 0.0
        %1788 = vmatpush2.msra.mxu0 0.0
        %1789 = vmatprep.subr.mxu0 0.0
        %1790 = vmatpush2.msra.mxu0 0.0
        %1791 = vmatprep.subr.mxu0 0.0
        %1792 = vmatpush2.msra.mxu0 0.0
        %1793 = vmatprep.subr.mxu0 0.0
        %1794 = vmatpush2.msra.mxu0 0.0
        %1795 = vmatprep.subr.mxu0 0.0
        %1796 = vmatpush2.msra.mxu0 0.0
        %1797 = vmatprep.mubr.f32.mxu0 0.0
        %1798 = vmatmul.mubr.f32.gmra.mxu0 %v1725
        %v1799 = vpop.f32.mrf.mxu0
        %v1800 = vadd.f32 0.0, %v1799
        %v1801 = vpop.f32.mrf.mxu0
        %v1802 = vadd.f32 0.0, %v1801
        %1803 = vdwg.mxu0
        %1804 = vmatprep.subr.mxu0 0.0
        %1805 = vmatpush1.msra.mxu0 0.0
        %1806 = vmatprep.subr.mxu0 0.0
        %1807 = vmatpush1.msra.mxu0 0.0
        %1808 = vmatprep.subr.mxu0 0.0
        %1809 = vmatpush1.msra.mxu0 0.0
        %1810 = vmatprep.subr.mxu0 0.0
        %1811 = vmatpush1.msra.mxu0 0.0
        %1812 = vmatprep.subr.mxu0 0.0
        %1813 = vmatpush1.msra.mxu0 0.0
        %1814 = vmatprep.subr.mxu0 0.0
        %1815 = vmatpush1.msra.mxu0 0.0
        %1816 = vmatprep.subr.mxu0 0.0
        %1817 = vmatpush1.msra.mxu0 0.0
        %1818 = vmatprep.subr.mxu0 0.0
        %1819 = vmatpush1.msra.mxu0 0.0
        %1820 = vmatprep.subr.mxu0 0.0
        %1821 = vmatpush1.msra.mxu0 0.0
        %1822 = vmatprep.subr.mxu0 0.0
        %1823 = vmatpush1.msra.mxu0 0.0
        %1824 = vmatprep.subr.mxu0 0.0
        %1825 = vmatpush1.msra.mxu0 0.0
        %1826 = vmatprep.subr.mxu0 0.0
        %1827 = vmatpush1.msra.mxu0 0.0
        %1828 = vmatprep.subr.mxu0 0.0
        %1829 = vmatpush1.msra.mxu0 0.0
        %1830 = vmatprep.subr.mxu0 0.0
        %1831 = vmatpush1.msra.mxu0 0.0
        %1832 = vmatprep.subr.mxu0 0.0
        %1833 = vmatpush1.msra.mxu0 0.0
        %1834 = vmatprep.subr.mxu0 0.0
        %1835 = vmatpush1.msra.mxu0 %v1731
        %1836 = vmatprep.subr.mxu0 0.0
        %1837 = vmatpush2.msra.mxu0 0.0
        %1838 = vmatprep.subr.mxu0 0.0
        %1839 = vmatpush2.msra.mxu0 0.0
        %1840 = vmatprep.subr.mxu0 0.0
        %1841 = vmatpush2.msra.mxu0 0.0
        %1842 = vmatprep.subr.mxu0 0.0
        %1843 = vmatpush2.msra.mxu0 0.0
        %1844 = vmatprep.subr.mxu0 0.0
        %1845 = vmatpush2.msra.mxu0 0.0
        %1846 = vmatprep.subr.mxu0 0.0
        %1847 = vmatpush2.msra.mxu0 0.0
        %1848 = vmatprep.subr.mxu0 0.0
        %1849 = vmatpush2.msra.mxu0 0.0
        %1850 = vmatprep.subr.mxu0 0.0
        %1851 = vmatpush2.msra.mxu0 0.0
        %1852 = vmatprep.subr.mxu0 0.0
        %1853 = vmatpush2.msra.mxu0 0.0
        %1854 = vmatprep.subr.mxu0 0.0
        %1855 = vmatpush2.msra.mxu0 0.0
        %1856 = vmatprep.subr.mxu0 0.0
        %1857 = vmatpush2.msra.mxu0 0.0
        %1858 = vmatprep.subr.mxu0 0.0
        %1859 = vmatpush2.msra.mxu0 0.0
        %1860 = vmatprep.subr.mxu0 0.0
        %1861 = vmatpush2.msra.mxu0 0.0
        %1862 = vmatprep.subr.mxu0 0.0
        %1863 = vmatpush2.msra.mxu0 0.0
        %1864 = vmatprep.subr.mxu0 0.0
        %1865 = vmatpush2.msra.mxu0 0.0
        %1866 = vmatprep.subr.mxu0 0.0
        %1867 = vmatpush2.msra.mxu0 0.0
        %1868 = vmatprep.mubr.f32.mxu0 0.0
        %1869 = vmatmul.mubr.f32.gmra.mxu0 %v1725
        %v1870 = vpop.f32.mrf.mxu0
        %v1871 = vadd.f32 0.0, %v1870
        %v1872 = vpop.f32.mrf.mxu0
        %1873 = vdwg.mxu0
        %v1874 = vadd.f32 %v1710, %v1800
        %v1875 = vadd.f32 %v1711, %v1802
        %v1876 = vadd.f32 %v1712, %v1871
        %s1877 = scalar_lea.vmem %s1, 64
        %v1878 = vld [vmem:[%s1877] sm:$0xff]
        %1879 = vrot.lane.b32.xlu0 %v555, 90
        %v1880 = vpop.permute.xlu0 %1879
        %1881 = vrot.lane.b32.xlu0 %v569, 90
        %v1882 = vpop.permute.xlu0 %1881
        %1883 = vrot.lane.b32.xlu0 %v577, 90
        %v1884 = vpop.permute.xlu0 %1883
        %v1885 = vsel %vm550, %v1880, %v1882
        %v1886 = vsel %vm550, %v1882, %v1884
        %v1888 = vsel %vm593, %v1878, 0
        %v1890 = vsel %vm597, %v1885, 0
        %v1892 = vsel %vm597, %v1886, 0
        %v1894 = vsel %vm597, %v1884, 0
        %1896 = vmatprep.subr.mxu0 0.0
        %1897 = vmatpush1.msra.mxu0 0.0
        %1898 = vmatprep.subr.mxu0 0.0
        %1899 = vmatpush1.msra.mxu0 0.0
        %1900 = vmatprep.subr.mxu0 0.0
        %1901 = vmatpush1.msra.mxu0 0.0
        %1902 = vmatprep.subr.mxu0 0.0
        %1903 = vmatpush1.msra.mxu0 0.0
        %1904 = vmatprep.subr.mxu0 0.0
        %1905 = vmatpush1.msra.mxu0 0.0
        %1906 = vmatprep.subr.mxu0 0.0
        %1907 = vmatpush1.msra.mxu0 0.0
        %1908 = vmatprep.subr.mxu0 0.0
        %1909 = vmatpush1.msra.mxu0 0.0
        %1910 = vmatprep.subr.mxu0 0.0
        %1911 = vmatpush1.msra.mxu0 0.0
        %1912 = vmatprep.subr.mxu0 0.0
        %1913 = vmatpush1.msra.mxu0 0.0
        %1914 = vmatprep.subr.mxu0 0.0
        %1915 = vmatpush1.msra.mxu0 0.0
        %1916 = vmatprep.subr.mxu0 0.0
        %1917 = vmatpush1.msra.mxu0 0.0
        %1918 = vmatprep.subr.mxu0 0.0
        %1919 = vmatpush1.msra.mxu0 0.0
        %1920 = vmatprep.subr.mxu0 0.0
        %1921 = vmatpush1.msra.mxu0 0.0
        %1922 = vmatprep.subr.mxu0 0.0
        %1923 = vmatpush1.msra.mxu0 0.0
        %1924 = vmatprep.subr.mxu0 0.0
        %1925 = vmatpush1.msra.mxu0 0.0
        %1926 = vmatprep.subr.mxu0 %v1892
        %1927 = vmatpush1.msra.mxu0 %v1890
        %1928 = vmatprep.subr.mxu0 0.0
        %1929 = vmatpush2.msra.mxu0 0.0
        %1930 = vmatprep.subr.mxu0 0.0
        %1931 = vmatpush2.msra.mxu0 0.0
        %1932 = vmatprep.subr.mxu0 0.0
        %1933 = vmatpush2.msra.mxu0 0.0
        %1934 = vmatprep.subr.mxu0 0.0
        %1935 = vmatpush2.msra.mxu0 0.0
        %1936 = vmatprep.subr.mxu0 0.0
        %1937 = vmatpush2.msra.mxu0 0.0
        %1938 = vmatprep.subr.mxu0 0.0
        %1939 = vmatpush2.msra.mxu0 0.0
        %1940 = vmatprep.subr.mxu0 0.0
        %1941 = vmatpush2.msra.mxu0 0.0
        %1942 = vmatprep.subr.mxu0 0.0
        %1943 = vmatpush2.msra.mxu0 0.0
        %1944 = vmatprep.subr.mxu0 0.0
        %1945 = vmatpush2.msra.mxu0 0.0
        %1946 = vmatprep.subr.mxu0 0.0
        %1947 = vmatpush2.msra.mxu0 0.0
        %1948 = vmatprep.subr.mxu0 0.0
        %1949 = vmatpush2.msra.mxu0 0.0
        %1950 = vmatprep.subr.mxu0 0.0
        %1951 = vmatpush2.msra.mxu0 0.0
        %1952 = vmatprep.subr.mxu0 0.0
        %1953 = vmatpush2.msra.mxu0 0.0
        %1954 = vmatprep.subr.mxu0 0.0
        %1955 = vmatpush2.msra.mxu0 0.0
        %1956 = vmatprep.subr.mxu0 0.0
        %1957 = vmatpush2.msra.mxu0 0.0
        %1958 = vmatprep.subr.mxu0 0.0
        %1959 = vmatpush2.msra.mxu0 0.0
        %1960 = vmatprep.mubr.f32.mxu0 0.0
        %1961 = vmatmul.mubr.f32.gmra.mxu0 %v1888
        %v1962 = vpop.f32.mrf.mxu0
        %v1963 = vadd.f32 0.0, %v1962
        %v1964 = vpop.f32.mrf.mxu0
        %v1965 = vadd.f32 0.0, %v1964
        %1966 = vdwg.mxu0
        %1967 = vmatprep.subr.mxu0 0.0
        %1968 = vmatpush1.msra.mxu0 0.0
        %1969 = vmatprep.subr.mxu0 0.0
        %1970 = vmatpush1.msra.mxu0 0.0
        %1971 = vmatprep.subr.mxu0 0.0
        %1972 = vmatpush1.msra.mxu0 0.0
        %1973 = vmatprep.subr.mxu0 0.0
        %1974 = vmatpush1.msra.mxu0 0.0
        %1975 = vmatprep.subr.mxu0 0.0
        %1976 = vmatpush1.msra.mxu0 0.0
        %1977 = vmatprep.subr.mxu0 0.0
        %1978 = vmatpush1.msra.mxu0 0.0
        %1979 = vmatprep.subr.mxu0 0.0
        %1980 = vmatpush1.msra.mxu0 0.0
        %1981 = vmatprep.subr.mxu0 0.0
        %1982 = vmatpush1.msra.mxu0 0.0
        %1983 = vmatprep.subr.mxu0 0.0
        %1984 = vmatpush1.msra.mxu0 0.0
        %1985 = vmatprep.subr.mxu0 0.0
        %1986 = vmatpush1.msra.mxu0 0.0
        %1987 = vmatprep.subr.mxu0 0.0
        %1988 = vmatpush1.msra.mxu0 0.0
        %1989 = vmatprep.subr.mxu0 0.0
        %1990 = vmatpush1.msra.mxu0 0.0
        %1991 = vmatprep.subr.mxu0 0.0
        %1992 = vmatpush1.msra.mxu0 0.0
        %1993 = vmatprep.subr.mxu0 0.0
        %1994 = vmatpush1.msra.mxu0 0.0
        %1995 = vmatprep.subr.mxu0 0.0
        %1996 = vmatpush1.msra.mxu0 0.0
        %1997 = vmatprep.subr.mxu0 0.0
        %1998 = vmatpush1.msra.mxu0 %v1894
        %1999 = vmatprep.subr.mxu0 0.0
        %2000 = vmatpush2.msra.mxu0 0.0
        %2001 = vmatprep.subr.mxu0 0.0
        %2002 = vmatpush2.msra.mxu0 0.0
        %2003 = vmatprep.subr.mxu0 0.0
        %2004 = vmatpush2.msra.mxu0 0.0
        %2005 = vmatprep.subr.mxu0 0.0
        %2006 = vmatpush2.msra.mxu0 0.0
        %2007 = vmatprep.subr.mxu0 0.0
        %2008 = vmatpush2.msra.mxu0 0.0
        %2009 = vmatprep.subr.mxu0 0.0
        %2010 = vmatpush2.msra.mxu0 0.0
        %2011 = vmatprep.subr.mxu0 0.0
        %2012 = vmatpush2.msra.mxu0 0.0
        %2013 = vmatprep.subr.mxu0 0.0
        %2014 = vmatpush2.msra.mxu0 0.0
        %2015 = vmatprep.subr.mxu0 0.0
        %2016 = vmatpush2.msra.mxu0 0.0
        %2017 = vmatprep.subr.mxu0 0.0
        %2018 = vmatpush2.msra.mxu0 0.0
        %2019 = vmatprep.subr.mxu0 0.0
        %2020 = vmatpush2.msra.mxu0 0.0
        %2021 = vmatprep.subr.mxu0 0.0
        %2022 = vmatpush2.msra.mxu0 0.0
        %2023 = vmatprep.subr.mxu0 0.0
        %2024 = vmatpush2.msra.mxu0 0.0
        %2025 = vmatprep.subr.mxu0 0.0
        %2026 = vmatpush2.msra.mxu0 0.0
        %2027 = vmatprep.subr.mxu0 0.0
        %2028 = vmatpush2.msra.mxu0 0.0
        %2029 = vmatprep.subr.mxu0 0.0
        %2030 = vmatpush2.msra.mxu0 0.0
        %2031 = vmatprep.mubr.f32.mxu0 0.0
        %2032 = vmatmul.mubr.f32.gmra.mxu0 %v1888
        %v2033 = vpop.f32.mrf.mxu0
        %v2034 = vadd.f32 0.0, %v2033
        %v2035 = vpop.f32.mrf.mxu0
        %2036 = vdwg.mxu0
        %v2037 = vadd.f32 %v1874, %v1963
        %v2038 = vadd.f32 %v1875, %v1965
        %v2039 = vadd.f32 %v1876, %v2034
        %2041 = vrot.lane.b32.xlu0 %v2037, 110
        %v2042 = vpop.permute.xlu0 %2041
        %2044 = vrot.lane.b32.xlu0 %v2037, 92
        %v2045 = vpop.permute.xlu0 %2044
        %2047 = vrot.lane.b32.xlu0 %v2037, 74
        %v2048 = vpop.permute.xlu0 %2047
        %2050 = vrot.lane.b32.xlu0 %v2037, 56
        %v2051 = vpop.permute.xlu0 %2050
        %2053 = vrot.lane.b32.xlu0 %v2037, 38
        %v2054 = vpop.permute.xlu0 %2053
        %2056 = vrot.lane.b32.xlu0 %v2037, 20
        %v2057 = vpop.permute.xlu0 %2056
        %2060 = vrot.lane.b32.xlu0 %v2037, 2
        %v2061 = vpop.permute.xlu0 %2060
        %2062 = vrot.lane.b32.xlu0 %v2038, 2
        %v2063 = vpop.permute.xlu0 %2062
        %vm2064 = vcmask 15360
        %v2065 = vsel %vm2064, %v2061, %v2063
        %2067 = vrot.lane.b32.xlu0 %v2038, 112
        %v2068 = vpop.permute.xlu0 %2067
        %2070 = vrot.lane.b32.xlu0 %v2038, 94
        %v2071 = vpop.permute.xlu0 %2070
        %2073 = vrot.lane.b32.xlu0 %v2038, 76
        %v2074 = vpop.permute.xlu0 %2073
        %2076 = vrot.lane.b32.xlu0 %v2038, 58
        %v2077 = vpop.permute.xlu0 %2076
        %2079 = vrot.lane.b32.xlu0 %v2038, 40
        %v2080 = vpop.permute.xlu0 %2079
        %2082 = vrot.lane.b32.xlu0 %v2038, 22
        %v2083 = vpop.permute.xlu0 %2082
        %2086 = vrot.lane.b32.xlu0 %v2038, 4
        %v2087 = vpop.permute.xlu0 %2086
        %2088 = vrot.lane.b32.xlu0 %v2039, 4
        %v2089 = vpop.permute.xlu0 %2088
        %v2090 = vsel %vm593, %v2087, %v2089
        %2092 = vrot.lane.b32.xlu0 %v2039, 114
        %v2093 = vpop.permute.xlu0 %2092
        %v2095 = vcombine.low %v2037, %v2045
        %v2096 = vcombine.high %v2037, %v2045
        %v2098 = vunpack.c.l.s4 1983009808
        %v2099 = vunpack.c.0.s8 %v2098
        %v2100 = vlaneseq
        %v2101 = vshrl.u32 %v2100, 7
        %v2102 = vsub.s32 %v2099, %v2101
        %v2103 = vrot.slane %v2095, %v2102
        %v2105 = vunpack.c.l.s4 1983009808
        %v2106 = vunpack.c.0.s8 %v2105
        %v2107 = vlaneseq
        %v2108 = vshrl.u32 %v2107, 7
        %v2109 = vsub.s32 %v2106, %v2108
        %v2110 = vrot.slane %v2096, %v2109
        %v2111 = vcombine.low %v2042, %v2048
        %v2112 = vcombine.high %v2042, %v2048
        %v2114 = vunpack.c.l.s4 1983009808
        %v2115 = vunpack.c.0.s8 %v2114
        %v2116 = vlaneseq
        %v2117 = vshrl.u32 %v2116, 7
        %v2118 = vsub.s32 %v2115, %v2117
        %v2119 = vrot.slane %v2111, %v2118
        %v2121 = vunpack.c.l.s4 1983009808
        %v2122 = vunpack.c.0.s8 %v2121
        %v2123 = vlaneseq
        %v2124 = vshrl.u32 %v2123, 7
        %v2125 = vsub.s32 %v2122, %v2124
        %v2126 = vrot.slane %v2112, %v2125
        %v2127 = vcombine.low %v2051, %v2057
        %v2128 = vcombine.high %v2051, %v2057
        %v2130 = vunpack.c.l.s4 1983009808
        %v2131 = vunpack.c.0.s8 %v2130
        %v2132 = vlaneseq
        %v2133 = vshrl.u32 %v2132, 7
        %v2134 = vsub.s32 %v2131, %v2133
        %v2135 = vrot.slane %v2127, %v2134
        %v2137 = vunpack.c.l.s4 1983009808
        %v2138 = vunpack.c.0.s8 %v2137
        %v2139 = vlaneseq
        %v2140 = vshrl.u32 %v2139, 7
        %v2141 = vsub.s32 %v2138, %v2140
        %v2142 = vrot.slane %v2128, %v2141
        %v2143 = vcombine.low %v2054, %v2065
        %v2144 = vcombine.high %v2054, %v2065
        %v2146 = vunpack.c.l.s4 1983009808
        %v2147 = vunpack.c.0.s8 %v2146
        %v2148 = vlaneseq
        %v2149 = vshrl.u32 %v2148, 7
        %v2150 = vsub.s32 %v2147, %v2149
        %v2151 = vrot.slane %v2143, %v2150
        %v2153 = vunpack.c.l.s4 1983009808
        %v2154 = vunpack.c.0.s8 %v2153
        %v2155 = vlaneseq
        %v2156 = vshrl.u32 %v2155, 7
        %v2157 = vsub.s32 %v2154, %v2156
        %v2158 = vrot.slane %v2144, %v2157
        %v2159 = vcombine.low %v2103, %v2119
        %v2160 = vcombine.high %v2103, %v2119
        %v2162 = vunpack.c.l.s4 1934713408
        %v2163 = vunpack.c.0.s8 %v2162
        %v2164 = vlaneseq
        %v2165 = vshrl.u32 %v2164, 7
        %v2166 = vsub.s32 %v2163, %v2165
        %v2167 = vrot.slane %v2159, %v2166
        %v2169 = vunpack.c.l.s4 1934713408
        %v2170 = vunpack.c.0.s8 %v2169
        %v2171 = vlaneseq
        %v2172 = vshrl.u32 %v2171, 7
        %v2173 = vsub.s32 %v2170, %v2172
        %v2174 = vrot.slane %v2160, %v2173
        %v2175 = vcombine.low %v2110, %v2126
        %v2176 = vcombine.high %v2110, %v2126
        %v2178 = vunpack.c.l.s4 1934713408
        %v2179 = vunpack.c.0.s8 %v2178
        %v2180 = vlaneseq
        %v2181 = vshrl.u32 %v2180, 7
        %v2182 = vsub.s32 %v2179, %v2181
        %v2183 = vrot.slane %v2175, %v2182
        %v2185 = vunpack.c.l.s4 1934713408
        %v2186 = vunpack.c.0.s8 %v2185
        %v2187 = vlaneseq
        %v2188 = vshrl.u32 %v2187, 7
        %v2189 = vsub.s32 %v2186, %v2188
        %v2190 = vrot.slane %v2176, %v2189
        %v2191 = vcombine.low %v2135, %v2151
        %v2192 = vcombine.high %v2135, %v2151
        %v2194 = vunpack.c.l.s4 1934713408
        %v2195 = vunpack.c.0.s8 %v2194
        %v2196 = vlaneseq
        %v2197 = vshrl.u32 %v2196, 7
        %v2198 = vsub.s32 %v2195, %v2197
        %v2199 = vrot.slane %v2191, %v2198
        %v2201 = vunpack.c.l.s4 1934713408
        %v2202 = vunpack.c.0.s8 %v2201
        %v2203 = vlaneseq
        %v2204 = vshrl.u32 %v2203, 7
        %v2205 = vsub.s32 %v2202, %v2204
        %v2206 = vrot.slane %v2192, %v2205
        %v2207 = vcombine.low %v2142, %v2158
        %v2208 = vcombine.high %v2142, %v2158
        %v2210 = vunpack.c.l.s4 1934713408
        %v2211 = vunpack.c.0.s8 %v2210
        %v2212 = vlaneseq
        %v2213 = vshrl.u32 %v2212, 7
        %v2214 = vsub.s32 %v2211, %v2213
        %v2215 = vrot.slane %v2207, %v2214
        %v2217 = vunpack.c.l.s4 1934713408
        %v2218 = vunpack.c.0.s8 %v2217
        %v2219 = vlaneseq
        %v2220 = vshrl.u32 %v2219, 7
        %v2221 = vsub.s32 %v2218, %v2220
        %v2222 = vrot.slane %v2208, %v2221
        %v2223 = vcombine.low %v2167, %v2199
        %v2224 = vcombine.high %v2167, %v2199
        %v2225 = vcombine.low %v2174, %v2206
        %v2226 = vcombine.high %v2174, %v2206
        %v2227 = vcombine.low %v2183, %v2215
        %v2228 = vcombine.high %v2183, %v2215
        %v2229 = vcombine.low %v2190, %v2222
        %v2230 = vcombine.high %v2190, %v2222
        %v2231 = vcombine.low %v2068, %v2074
        %v2232 = vcombine.high %v2068, %v2074
        %v2234 = vunpack.c.l.s4 1983009808
        %v2235 = vunpack.c.0.s8 %v2234
        %v2236 = vlaneseq
        %v2237 = vshrl.u32 %v2236, 7
        %v2238 = vsub.s32 %v2235, %v2237
        %v2239 = vrot.slane %v2231, %v2238
        %v2241 = vunpack.c.l.s4 1983009808
        %v2242 = vunpack.c.0.s8 %v2241
        %v2243 = vlaneseq
        %v2244 = vshrl.u32 %v2243, 7
        %v2245 = vsub.s32 %v2242, %v2244
        %v2246 = vrot.slane %v2232, %v2245
        %v2247 = vcombine.low %v2071, %v2077
        %v2248 = vcombine.high %v2071, %v2077
        %v2250 = vunpack.c.l.s4 1983009808
        %v2251 = vunpack.c.0.s8 %v2250
        %v2252 = vlaneseq
        %v2253 = vshrl.u32 %v2252, 7
        %v2254 = vsub.s32 %v2251, %v2253
        %v2255 = vrot.slane %v2247, %v2254
        %v2257 = vunpack.c.l.s4 1983009808
        %v2258 = vunpack.c.0.s8 %v2257
        %v2259 = vlaneseq
        %v2260 = vshrl.u32 %v2259, 7
        %v2261 = vsub.s32 %v2258, %v2260
        %v2262 = vrot.slane %v2248, %v2261
        %v2263 = vcombine.low %v2080, %v2090
        %v2264 = vcombine.high %v2080, %v2090
        %v2266 = vunpack.c.l.s4 1983009808
        %v2267 = vunpack.c.0.s8 %v2266
        %v2268 = vlaneseq
        %v2269 = vshrl.u32 %v2268, 7
        %v2270 = vsub.s32 %v2267, %v2269
        %v2271 = vrot.slane %v2263, %v2270
        %v2273 = vunpack.c.l.s4 1983009808
        %v2274 = vunpack.c.0.s8 %v2273
        %v2275 = vlaneseq
        %v2276 = vshrl.u32 %v2275, 7
        %v2277 = vsub.s32 %v2274, %v2276
        %v2278 = vrot.slane %v2264, %v2277
        %v2279 = vcombine.low %v2083, %v2093
        %v2280 = vcombine.high %v2083, %v2093
        %v2282 = vunpack.c.l.s4 1983009808
        %v2283 = vunpack.c.0.s8 %v2282
        %v2284 = vlaneseq
        %v2285 = vshrl.u32 %v2284, 7
        %v2286 = vsub.s32 %v2283, %v2285
        %v2287 = vrot.slane %v2279, %v2286
        %v2289 = vunpack.c.l.s4 1983009808
        %v2290 = vunpack.c.0.s8 %v2289
        %v2291 = vlaneseq
        %v2292 = vshrl.u32 %v2291, 7
        %v2293 = vsub.s32 %v2290, %v2292
        %v2294 = vrot.slane %v2280, %v2293
        %v2295 = vcombine.low %v2239, %v2255
        %v2296 = vcombine.high %v2239, %v2255
        %v2298 = vunpack.c.l.s4 1934713408
        %v2299 = vunpack.c.0.s8 %v2298
        %v2300 = vlaneseq
        %v2301 = vshrl.u32 %v2300, 7
        %v2302 = vsub.s32 %v2299, %v2301
        %v2303 = vrot.slane %v2295, %v2302
        %v2305 = vunpack.c.l.s4 1934713408
        %v2306 = vunpack.c.0.s8 %v2305
        %v2307 = vlaneseq
        %v2308 = vshrl.u32 %v2307, 7
        %v2309 = vsub.s32 %v2306, %v2308
        %v2310 = vrot.slane %v2296, %v2309
        %v2311 = vcombine.low %v2246, %v2262
        %v2312 = vcombine.high %v2246, %v2262
        %v2314 = vunpack.c.l.s4 1934713408
        %v2315 = vunpack.c.0.s8 %v2314
        %v2316 = vlaneseq
        %v2317 = vshrl.u32 %v2316, 7
        %v2318 = vsub.s32 %v2315, %v2317
        %v2319 = vrot.slane %v2311, %v2318
        %v2321 = vunpack.c.l.s4 1934713408
        %v2322 = vunpack.c.0.s8 %v2321
        %v2323 = vlaneseq
        %v2324 = vshrl.u32 %v2323, 7
        %v2325 = vsub.s32 %v2322, %v2324
        %v2326 = vrot.slane %v2312, %v2325
        %v2327 = vcombine.low %v2271, %v2287
        %v2328 = vcombine.high %v2271, %v2287
        %v2330 = vunpack.c.l.s4 1934713408
        %v2331 = vunpack.c.0.s8 %v2330
        %v2332 = vlaneseq
        %v2333 = vshrl.u32 %v2332, 7
        %v2334 = vsub.s32 %v2331, %v2333
        %v2335 = vrot.slane %v2327, %v2334
        %v2337 = vunpack.c.l.s4 1934713408
        %v2338 = vunpack.c.0.s8 %v2337
        %v2339 = vlaneseq
        %v2340 = vshrl.u32 %v2339, 7
        %v2341 = vsub.s32 %v2338, %v2340
        %v2342 = vrot.slane %v2328, %v2341
        %v2343 = vcombine.low %v2278, %v2294
        %v2344 = vcombine.high %v2278, %v2294
        %v2346 = vunpack.c.l.s4 1934713408
        %v2347 = vunpack.c.0.s8 %v2346
        %v2348 = vlaneseq
        %v2349 = vshrl.u32 %v2348, 7
        %v2350 = vsub.s32 %v2347, %v2349
        %v2351 = vrot.slane %v2343, %v2350
        %v2353 = vunpack.c.l.s4 1934713408
        %v2354 = vunpack.c.0.s8 %v2353
        %v2355 = vlaneseq
        %v2356 = vshrl.u32 %v2355, 7
        %v2357 = vsub.s32 %v2354, %v2356
        %v2358 = vrot.slane %v2344, %v2357
        %v2359 = vcombine.low %v2303, %v2335
        %v2360 = vcombine.high %v2303, %v2335
        %v2361 = vcombine.low %v2310, %v2342
        %v2362 = vcombine.high %v2310, %v2342
        %v2363 = vcombine.low %v2319, %v2351
        %v2364 = vcombine.high %v2319, %v2351
        %v2365 = vcombine.low %v2326, %v2358
        %v2366 = vcombine.high %v2326, %v2358
        %v2367 = vcombine.low %v2223, %v2225
        %v2368 = vcombine.high %v2223, %v2225
        %v2370 = vunpack.c.l.s4 1983009808
        %v2371 = vunpack.c.0.s8 %v2370
        %v2372 = vlaneseq
        %v2373 = vshrl.u32 %v2372, 7
        %v2374 = vsub.s32 %v2371, %v2373
        %v2375 = vrot.slane %v2367, %v2374
        %v2377 = vunpack.c.l.s4 1983009808
        %v2378 = vunpack.c.0.s8 %v2377
        %v2379 = vlaneseq
        %v2380 = vshrl.u32 %v2379, 7
        %v2381 = vsub.s32 %v2378, %v2380
        %v2382 = vrot.slane %v2368, %v2381
        %v2383 = vcombine.low %v2224, %v2226
        %v2384 = vcombine.high %v2224, %v2226
        %v2386 = vunpack.c.l.s4 1983009808
        %v2387 = vunpack.c.0.s8 %v2386
        %v2388 = vlaneseq
        %v2389 = vshrl.u32 %v2388, 7
        %v2390 = vsub.s32 %v2387, %v2389
        %v2391 = vrot.slane %v2383, %v2390
        %v2393 = vunpack.c.l.s4 1983009808
        %v2394 = vunpack.c.0.s8 %v2393
        %v2395 = vlaneseq
        %v2396 = vshrl.u32 %v2395, 7
        %v2397 = vsub.s32 %v2394, %v2396
        %v2398 = vrot.slane %v2384, %v2397
        %v2399 = vcombine.low %v2227, %v2229
        %v2400 = vcombine.high %v2227, %v2229
        %v2402 = vunpack.c.l.s4 1983009808
        %v2403 = vunpack.c.0.s8 %v2402
        %v2404 = vlaneseq
        %v2405 = vshrl.u32 %v2404, 7
        %v2406 = vsub.s32 %v2403, %v2405
        %v2407 = vrot.slane %v2399, %v2406
        %v2409 = vunpack.c.l.s4 1983009808
        %v2410 = vunpack.c.0.s8 %v2409
        %v2411 = vlaneseq
        %v2412 = vshrl.u32 %v2411, 7
        %v2413 = vsub.s32 %v2410, %v2412
        %v2414 = vrot.slane %v2400, %v2413
        %v2415 = vcombine.low %v2228, %v2230
        %v2416 = vcombine.high %v2228, %v2230
        %v2418 = vunpack.c.l.s4 1983009808
        %v2419 = vunpack.c.0.s8 %v2418
        %v2420 = vlaneseq
        %v2421 = vshrl.u32 %v2420, 7
        %v2422 = vsub.s32 %v2419, %v2421
        %v2423 = vrot.slane %v2415, %v2422
        %v2425 = vunpack.c.l.s4 1983009808
        %v2426 = vunpack.c.0.s8 %v2425
        %v2427 = vlaneseq
        %v2428 = vshrl.u32 %v2427, 7
        %v2429 = vsub.s32 %v2426, %v2428
        %v2430 = vrot.slane %v2416, %v2429
        %v2431 = vcombine.low %v2375, %v2391
        %v2432 = vcombine.high %v2375, %v2391
        %v2434 = vunpack.c.l.s4 1934713408
        %v2435 = vunpack.c.0.s8 %v2434
        %v2436 = vlaneseq
        %v2437 = vshrl.u32 %v2436, 7
        %v2438 = vsub.s32 %v2435, %v2437
        %v2439 = vrot.slane %v2431, %v2438
        %v2441 = vunpack.c.l.s4 1934713408
        %v2442 = vunpack.c.0.s8 %v2441
        %v2443 = vlaneseq
        %v2444 = vshrl.u32 %v2443, 7
        %v2445 = vsub.s32 %v2442, %v2444
        %v2446 = vrot.slane %v2432, %v2445
        %v2447 = vcombine.low %v2382, %v2398
        %v2448 = vcombine.high %v2382, %v2398
        %v2450 = vunpack.c.l.s4 1934713408
        %v2451 = vunpack.c.0.s8 %v2450
        %v2452 = vlaneseq
        %v2453 = vshrl.u32 %v2452, 7
        %v2454 = vsub.s32 %v2451, %v2453
        %v2455 = vrot.slane %v2447, %v2454
        %v2457 = vunpack.c.l.s4 1934713408
        %v2458 = vunpack.c.0.s8 %v2457
        %v2459 = vlaneseq
        %v2460 = vshrl.u32 %v2459, 7
        %v2461 = vsub.s32 %v2458, %v2460
        %v2462 = vrot.slane %v2448, %v2461
        %v2463 = vcombine.low %v2407, %v2423
        %v2464 = vcombine.high %v2407, %v2423
        %v2466 = vunpack.c.l.s4 1934713408
        %v2467 = vunpack.c.0.s8 %v2466
        %v2468 = vlaneseq
        %v2469 = vshrl.u32 %v2468, 7
        %v2470 = vsub.s32 %v2467, %v2469
        %v2471 = vrot.slane %v2463, %v2470
        %v2473 = vunpack.c.l.s4 1934713408
        %v2474 = vunpack.c.0.s8 %v2473
        %v2475 = vlaneseq
        %v2476 = vshrl.u32 %v2475, 7
        %v2477 = vsub.s32 %v2474, %v2476
        %v2478 = vrot.slane %v2464, %v2477
        %v2479 = vcombine.low %v2414, %v2430
        %v2480 = vcombine.high %v2414, %v2430
        %v2482 = vunpack.c.l.s4 1934713408
        %v2483 = vunpack.c.0.s8 %v2482
        %v2484 = vlaneseq
        %v2485 = vshrl.u32 %v2484, 7
        %v2486 = vsub.s32 %v2483, %v2485
        %v2487 = vrot.slane %v2479, %v2486
        %v2489 = vunpack.c.l.s4 1934713408
        %v2490 = vunpack.c.0.s8 %v2489
        %v2491 = vlaneseq
        %v2492 = vshrl.u32 %v2491, 7
        %v2493 = vsub.s32 %v2490, %v2492
        %v2494 = vrot.slane %v2480, %v2493
        %v2495 = vcombine.low %v2439, %v2471
        %v2496 = vcombine.high %v2439, %v2471
        %v2497 = vcombine.low %v2446, %v2478
        %v2498 = vcombine.high %v2446, %v2478
        %v2499 = vcombine.low %v2455, %v2487
        %v2500 = vcombine.high %v2455, %v2487
        %v2501 = vcombine.low %v2462, %v2494
        %v2502 = vcombine.high %v2462, %v2494
        %v2503 = vcombine.low %v2359, %v2361
        %v2504 = vcombine.high %v2359, %v2361
        %v2506 = vunpack.c.l.s4 1983009808
        %v2507 = vunpack.c.0.s8 %v2506
        %v2508 = vlaneseq
        %v2509 = vshrl.u32 %v2508, 7
        %v2510 = vsub.s32 %v2507, %v2509
        %v2511 = vrot.slane %v2503, %v2510
        %v2513 = vunpack.c.l.s4 1983009808
        %v2514 = vunpack.c.0.s8 %v2513
        %v2515 = vlaneseq
        %v2516 = vshrl.u32 %v2515, 7
        %v2517 = vsub.s32 %v2514, %v2516
        %v2518 = vrot.slane %v2504, %v2517
        %v2519 = vcombine.low %v2360, %v2362
        %v2520 = vcombine.high %v2360, %v2362
        %v2522 = vunpack.c.l.s4 1983009808
        %v2523 = vunpack.c.0.s8 %v2522
        %v2524 = vlaneseq
        %v2525 = vshrl.u32 %v2524, 7
        %v2526 = vsub.s32 %v2523, %v2525
        %v2527 = vrot.slane %v2519, %v2526
        %v2529 = vunpack.c.l.s4 1983009808
        %v2530 = vunpack.c.0.s8 %v2529
        %v2531 = vlaneseq
        %v2532 = vshrl.u32 %v2531, 7
        %v2533 = vsub.s32 %v2530, %v2532
        %v2534 = vrot.slane %v2520, %v2533
        %v2535 = vcombine.low %v2363, %v2365
        %v2536 = vcombine.high %v2363, %v2365
        %v2538 = vunpack.c.l.s4 1983009808
        %v2539 = vunpack.c.0.s8 %v2538
        %v2540 = vlaneseq
        %v2541 = vshrl.u32 %v2540, 7
        %v2542 = vsub.s32 %v2539, %v2541
        %v2543 = vrot.slane %v2535, %v2542
        %v2545 = vunpack.c.l.s4 1983009808
        %v2546 = vunpack.c.0.s8 %v2545
        %v2547 = vlaneseq
        %v2548 = vshrl.u32 %v2547, 7
        %v2549 = vsub.s32 %v2546, %v2548
        %v2550 = vrot.slane %v2536, %v2549
        %v2551 = vcombine.low %v2364, %v2366
        %v2552 = vcombine.high %v2364, %v2366
        %v2554 = vunpack.c.l.s4 1983009808
        %v2555 = vunpack.c.0.s8 %v2554
        %v2556 = vlaneseq
        %v2557 = vshrl.u32 %v2556, 7
        %v2558 = vsub.s32 %v2555, %v2557
        %v2559 = vrot.slane %v2551, %v2558
        %v2561 = vunpack.c.l.s4 1983009808
        %v2562 = vunpack.c.0.s8 %v2561
        %v2563 = vlaneseq
        %v2564 = vshrl.u32 %v2563, 7
        %v2565 = vsub.s32 %v2562, %v2564
        %v2566 = vrot.slane %v2552, %v2565
        %v2567 = vcombine.low %v2511, %v2527
        %v2568 = vcombine.high %v2511, %v2527
        %v2570 = vunpack.c.l.s4 1934713408
        %v2571 = vunpack.c.0.s8 %v2570
        %v2572 = vlaneseq
        %v2573 = vshrl.u32 %v2572, 7
        %v2574 = vsub.s32 %v2571, %v2573
        %v2575 = vrot.slane %v2567, %v2574
        %v2577 = vunpack.c.l.s4 1934713408
        %v2578 = vunpack.c.0.s8 %v2577
        %v2579 = vlaneseq
        %v2580 = vshrl.u32 %v2579, 7
        %v2581 = vsub.s32 %v2578, %v2580
        %v2582 = vrot.slane %v2568, %v2581
        %v2583 = vcombine.low %v2518, %v2534
        %v2584 = vcombine.high %v2518, %v2534
        %v2586 = vunpack.c.l.s4 1934713408
        %v2587 = vunpack.c.0.s8 %v2586
        %v2588 = vlaneseq
        %v2589 = vshrl.u32 %v2588, 7
        %v2590 = vsub.s32 %v2587, %v2589
        %v2591 = vrot.slane %v2583, %v2590
        %v2593 = vunpack.c.l.s4 1934713408
        %v2594 = vunpack.c.0.s8 %v2593
        %v2595 = vlaneseq
        %v2596 = vshrl.u32 %v2595, 7
        %v2597 = vsub.s32 %v2594, %v2596
        %v2598 = vrot.slane %v2584, %v2597
        %v2599 = vcombine.low %v2543, %v2559
        %v2600 = vcombine.high %v2543, %v2559
        %v2602 = vunpack.c.l.s4 1934713408
        %v2603 = vunpack.c.0.s8 %v2602
        %v2604 = vlaneseq
        %v2605 = vshrl.u32 %v2604, 7
        %v2606 = vsub.s32 %v2603, %v2605
        %v2607 = vrot.slane %v2599, %v2606
        %v2609 = vunpack.c.l.s4 1934713408
        %v2610 = vunpack.c.0.s8 %v2609
        %v2611 = vlaneseq
        %v2612 = vshrl.u32 %v2611, 7
        %v2613 = vsub.s32 %v2610, %v2612
        %v2614 = vrot.slane %v2600, %v2613
        %v2615 = vcombine.low %v2550, %v2566
        %v2616 = vcombine.high %v2550, %v2566
        %v2618 = vunpack.c.l.s4 1934713408
        %v2619 = vunpack.c.0.s8 %v2618
        %v2620 = vlaneseq
        %v2621 = vshrl.u32 %v2620, 7
        %v2622 = vsub.s32 %v2619, %v2621
        %v2623 = vrot.slane %v2615, %v2622
        %v2625 = vunpack.c.l.s4 1934713408
        %v2626 = vunpack.c.0.s8 %v2625
        %v2627 = vlaneseq
        %v2628 = vshrl.u32 %v2627, 7
        %v2629 = vsub.s32 %v2626, %v2628
        %v2630 = vrot.slane %v2616, %v2629
        %v2631 = vcombine.low %v2575, %v2607
        %v2632 = vcombine.high %v2575, %v2607
        %v2633 = vcombine.low %v2582, %v2614
        %v2634 = vcombine.high %v2582, %v2614
        %v2635 = vcombine.low %v2591, %v2623
        %v2636 = vcombine.high %v2591, %v2623
        %v2637 = vcombine.low %v2598, %v2630
        %v2638 = vcombine.high %v2598, %v2630
        %2640 = vrot.lane.b32.xlu0 %v2496, 16
        %v2641 = vpop.permute.xlu0 %2640
        %2644 = vrot.lane.b32.xlu0 %v2497, 32
        %v2645 = vpop.permute.xlu0 %2644
        %2648 = vrot.lane.b32.xlu0 %v2498, 48
        %v2649 = vpop.permute.xlu0 %2648
        %2652 = vrot.lane.b32.xlu0 %v2499, 64
        %v2653 = vpop.permute.xlu0 %2652
        %2656 = vrot.lane.b32.xlu0 %v2500, 80
        %v2657 = vpop.permute.xlu0 %2656
        %2660 = vrot.lane.b32.xlu0 %v2501, 96
        %v2661 = vpop.permute.xlu0 %2660
        %2664 = vrot.lane.b32.xlu0 %v2502, 112
        %v2665 = vpop.permute.xlu0 %2664
        %2668 = vrot.lane.b32.xlu0 %v2632, 16
        %v2669 = vpop.permute.xlu0 %2668
        %2672 = vrot.lane.b32.xlu0 %v2633, 32
        %v2673 = vpop.permute.xlu0 %2672
        %2676 = vrot.lane.b32.xlu0 %v2634, 48
        %v2677 = vpop.permute.xlu0 %2676
        %2680 = vrot.lane.b32.xlu0 %v2635, 64
        %v2681 = vpop.permute.xlu0 %2680
        %2684 = vrot.lane.b32.xlu0 %v2636, 80
        %v2685 = vpop.permute.xlu0 %2684
        %2688 = vrot.lane.b32.xlu0 %v2637, 96
        %v2689 = vpop.permute.xlu0 %2688
        %2692 = vrot.lane.b32.xlu0 %v2638, 112
        %v2693 = vpop.permute.xlu0 %2692
        %v2695 = vsel %vm556, %v2495, %v2641
        %v2696 = vsel %vm572, %v2695, %v2645
        %vm2697 = vcmask 392192
        %v2698 = vsel %vm2697, %v2696, %v2649
        %vm2699 = vcmask 523264
        %v2700 = vsel %vm2699, %v2698, %v2653
        %vm2701 = vcmask 654336
        %v2702 = vsel %vm2701, %v2700, %v2657
        %vm2703 = vcmask 785408
        %v2704 = vsel %vm2703, %v2702, %v2661
        %vm2705 = vcmask 916480
        %v2706 = vsel %vm2705, %v2704, %v2665
        %v2707 = vsel %vm556, %v2631, %v2669
        %v2708 = vsel %vm572, %v2707, %v2673
        %v2709 = vsel %vm2697, %v2708, %v2677
        %v2710 = vsel %vm2699, %v2709, %v2681
        %v2711 = vsel %vm2701, %v2710, %v2685
        %v2712 = vsel %vm2703, %v2711, %v2689
        %v2713 = vsel %vm2705, %v2712, %v2693
        %2714 = vst [vmem:[%s197] sm:$0xff] %v2706
        %2715 = vst [vmem:[%s197 + $0x8] sm:$0xff] %v2713
        %v2716 = vadd.f32 %v2706, %v2713
        %2717 = vadd.xlane.f32.xlu0 %v2716
        %v2718 = vpop.xlane.xlu0 %2717
        %v2719 = vmul.f32 %v2718, 0.00390625
        %v2720 = vsub.f32 %v2706, %v2719
        %v2721 = vsub.f32 %v2713, %v2719
        %v2722 = vmul.f32 %v2720, %v2720
        %v2723 = vmul.f32 %v2721, %v2721
        %v2724 = vadd.f32 %v2722, %v2723
        %2725 = vadd.xlane.f32.xlu0 %v2724
        %v2726 = vpop.xlane.xlu0 %2725
        %v2727 = vsel %vm242, %v2719, %v2726
        %2728 = vst.msk [vmem:[%s201] sm:$0xff] %vm2064, %v2727
        %p2729 = scmp.lt.s32.totalorder %s18, 1
        %s2730 = scalar_select %p2729, %s18, 1
        %s2731 = smul.addr %s2730, 2
        %s2732 = smul.addr %s2731, 8
        %s2733 = scalar_lea.vmem %s2, %s2732
        %p2734 = scmp.lt.s32.totalorder %s18, 1
        %s2735 = scalar_select %p2734, %s18, 1
        %s2736 = smul.addr %s2735, 8
        %s2737 = scalar_lea.vmem %s3, %s2736
        // Predicated region
        $region33: #{conv_block.2} parent=27 // pred_check
          %p2738 = pneg %p83
        $region34: #{conv_block.2} parent=27 // pred_check_branch
          %2740 = sbr.rel (%p2738) target = $region36
        $region35: #{conv_block.2} parent=27 // pred_region
          _
        $region36: #{conv_block.2} parent=27 // pred_fallthru
          _
        // Predicated region
        $region37: #{conv_block.2} parent=27 // pred_check
          %p2741 = pneg %p109
        $region38: #{conv_block.2} parent=27 // pred_check_branch
          %2743 = sbr.rel (%p2741) target = $region40
        $region39: #{conv_block.2} parent=27 // pred_region
          _
        $region40: #{conv_block.2} parent=27 // pred_fallthru
          _
      $region28: #{conv_block.2} parent=5 // pred_fallthru
        _
      %p2744 = scmp.le.s32.totalorder 2, %s13
      // Predicated region
      $region41: #{conv_block.2} parent=5 // pred_check
        %p2745 = pneg %p2744
      $region42: #{conv_block.2} parent=5 // pred_check_branch
        %2747 = sbr.rel (%p2745) target = $region44
      $region43: #{conv_block.2} parent=5 // pred_region
        %s2748 = ssub.s32 %s13, 2
        // Predicated region
        $region45: #{conv_block.2} parent=43 // pred_check
          %p2749 = pneg %p89
        $region46: #{conv_block.2} parent=43 // pred_check_branch
          %2751 = sbr.rel (%p2749) target = $region48
        $region47: #{conv_block.2} parent=43 // pred_region
          %p2752 = scmp.lt.s32.totalorder %s19, 1
          %s2753 = scalar_select %p2752, %s19, 1
          %s2754 = smul.addr %s2753, 2
          %s2755 = smul.addr %s2754, 8
          %s2756 = scalar_lea.vmem %s2, %s2755
        $region48: #{conv_block.2} parent=43 // pred_fallthru
          _
        // Predicated region
        $region49: #{conv_block.2} parent=43 // pred_check
          %p2757 = pneg %p115
        $region50: #{conv_block.2} parent=43 // pred_check_branch
          %2759 = sbr.rel (%p2757) target = $region52
        $region51: #{conv_block.2} parent=43 // pred_region
          %p2760 = scmp.lt.s32.totalorder %s19, 1
          %s2761 = scalar_select %p2760, %s19, 1
          %s2762 = smul.addr %s2761, 8
          %s2763 = scalar_lea.vmem %s3, %s2762
        $region52: #{conv_block.2} parent=43 // pred_fallthru
          _
      $region44: #{conv_block.2} parent=5 // pred_fallthru
        _
    $region6: #{conv_block.2} parent=1 // loop_footer
      %s17 = sadd.s32 1, %s13
    $region7: #{conv_block.2} parent=1 // loop_footer_branch
      %12 = sbr.rel target = $region3
    $region8: #{conv_block.2} parent=1 // loop_exit
      _
    %2764 = vsyncpa [#allocation3], 1
    %s2765 = scalar_lea.sflag [#allocation3], 1
    %2766 = vsyncpa %s2765, 1

</llo_original>
